<compile_context>
chip_gen: v6e
topology: v6e:2x2x1
jax: 0.10.0
libtpu: 0.0.40
codegen_flags: <defaults>
</compile_context>

<pallas_src>
import jax
import jax.numpy as jnp
from jax.experimental import pallas as pl
from jax.experimental.pallas import tpu as pltpu

NEG_SLOPE = 0.2                 # LeakyReLU negative slope
BN_EPS = 1e-3                   # BatchNorm2d eps in the reference module
VMEM_BUDGET = 10 * 2**20        # per-step block budget used to pick the row tile
VMEM_LIMIT = 32 * 1024 * 1024   # explicit scoped-VMEM limit (safe on v5e/v6e/v7x)


def _leaky(a):
    return jnp.where(a >= 0.0, a, NEG_SLOPE * a)


# ------------------------------ Pallas kernel ------------------------------ #

def _make_fused_kernel(th, w, cin, cout):
    """BN affine + LeakyReLU + 3x3 conv (stride 1, pad 1) + bias + 2x upsample."""

    def kernel(xt_ref, xm_ref, xb_ref, s_ref, b_ref, wt_ref, cb_ref, o_ref,
               st_ref):
        ii = pl.program_id(1)
        s = s_ref[...]                       # (1, Cin) BN scale
        b = b_ref[...]                       # (1, Cin) BN bias

        # Post-activation tensor for rows [ii*th-1, ii*th+th] of the image, with
        # a one-pixel zero border == Conv2d's zero padding of the BN+ReLU input.
        st_ref[...] = jnp.zeros_like(st_ref)
        st_ref[1:th + 1, 1:w + 1, :] = _leaky(xm_ref[...] * s + b)

        @pl.when(ii > 0)                     # real row above this tile
        def _():
            st_ref[0:1, 1:w + 1, :] = _leaky(xt_ref[...] * s + b)

        @pl.when(ii < pl.num_programs(1) - 1)  # real row below this tile
        def _():
            st_ref[th + 1:th + 2, 1:w + 1, :] = _leaky(xb_ref[...] * s + b)

        # 3x3 conv as 9 shifted matmuls (in-VMEM im2col; nothing goes to HBM).
        acc = None
        for ku in range(3):
            for kv in range(3):
                tap = st_ref[ku:ku + th, kv:kv + w, :].reshape(th * w, cin)
                d = jnp.dot(tap, wt_ref[ku * 3 + kv],
                            preferred_element_type=jnp.float32)
                acc = d if acc is None else acc + d
        acc = acc + cb_ref[...]                                  # conv bias

        # Fused 2x nearest-neighbour upsample:
        #   rows: broadcast each conv row to two output rows (free outer copy),
        #   cols: duplicate along the lane axis; the wrapper's free reshape
        #         (..., W, 2*Cout) -> (..., 2W, Cout) interleaves the columns.
        y = acc.reshape(th, w, cout)
        y = jnp.broadcast_to(y[:, None, :, :], (th, 2, w, cout))
        y = y.reshape(2 * th, w, cout).astype(o_ref.dtype)
        o_ref[:, :, 0:cout] = y
        o_ref[:, :, cout:2 * cout] = y

    return kernel


def _pick_row_tile(h, w, cin, cout, budget=VMEM_BUDGET):
    """Largest divisor of H whose pipeline blocks fit the VMEM budget."""
    best = 1
    for th in range(1, h + 1):
        if h % th:
            continue
        vmem = 4 * (
            2 * th * w * cin                      # main input block (x2 buffers)
            + 2 * 2 * w * cin                     # two halo rows  (x2 buffers)
            + (th + 2) * (w + 2) * cin            # activation scratch
            + 2 * 2 * th * w * 2 * cout           # output block   (x2 buffers)
            + th * w * (2 * cin + 4 * cout)       # tap copies / acc / upsample tmp
            + 2 * (9 * cin * cout + cout + 2 * cin)
        )
        if vmem <= budget:
            best = th
    return best


# --------------------------------- wrapper --------------------------------- #

def ubn_relu_conv(x_nchw, bn_scale, bn_bias, conv_w, conv_b, *, row_tile=None):
    """Forward pass of _UBnReluConv (fw = fh = 3, subsample = 1); NCHW in/out."""
    n, cin, h, w = x_nchw.shape
    cout = conv_w.shape[0]
    assert conv_w.shape[1] == cin
    assert conv_w.shape[2:] == (3, 3), "only the 3x3 case used by the model"

    th = row_tile if row_tile is not None else _pick_row_tile(h, w, cin, cout)
    assert h % th == 0, "row tile must divide the image height"
    n_h = h // th

    # NHWC for channel-on-lanes compute (single input-sized pass in XLA).
    x = jnp.transpose(x_nchw, (0, 2, 3, 1)).astype(jnp.float32)

    # (Cout, Cin, 3, 3) -> (9, Cin, Cout); tap index = 3*u + v.
    w9 = jnp.transpose(conv_w.astype(jnp.float32), (2, 3, 1, 0)).reshape(9, cin, cout)
    cb = conv_b.astype(jnp.float32).reshape(1, cout)
    s2 = bn_scale.astype(jnp.float32).reshape(1, cin)
    b2 = bn_bias.astype(jnp.float32).reshape(1, cin)

    kernel = _make_fused_kernel(th, w, cin, cout)

    out = pl.pallas_call(
        kernel,
        out_shape=jax.ShapeDtypeStruct((n, 2 * h, w, 2 * cout), jnp.float32),
        grid_spec=pltpu.PrefetchScalarGridSpec(
            num_scalar_prefetch=0,
            grid=(n, n_h),
            in_specs=[
                # one-row halo just above the main window (clamped at the top;
                # the kernel ignores it for ii == 0 and keeps the zero border)
                pl.BlockSpec((None, 1, w, cin),
                             lambda bb, ii: (bb, jnp.maximum(ii * th - 1, 0), 0, 0)),
                # main TH-row window of the raw input
                pl.BlockSpec((None, th, w, cin), lambda bb, ii: (bb, ii, 0, 0)),
                # one-row halo just below the main window (clamped at the bottom)
                pl.BlockSpec((None, 1, w, cin),
                             lambda bb, ii: (bb, jnp.minimum((ii + 1) * th, h - 1), 0, 0)),
                pl.BlockSpec((1, cin), lambda bb, ii: (0, 0)),            # BN scale
                pl.BlockSpec((1, cin), lambda bb, ii: (0, 0)),            # BN bias
                pl.BlockSpec((9, cin, cout), lambda bb, ii: (0, 0, 0)),   # conv weights
                pl.BlockSpec((1, cout), lambda bb, ii: (0, 0)),           # conv bias
            ],
            out_specs=pl.BlockSpec((None, 2 * th, w, 2 * cout),
                                   lambda bb, ii: (bb, ii, 0, 0)),
            scratch_shapes=[pltpu.VMEM((th + 2, w + 2, cin), jnp.float32)],
        ),
        compiler_params=pltpu.CompilerParams(
            dimension_semantics=("parallel", "parallel"),
            vmem_limit_bytes=VMEM_LIMIT,
        ),
    )(x, x, x, s2, b2, w9, cb)

    # (N, 2H, W, 2*Cout) -> (N, 2H, W, 2, Cout) -> (N, 2H, 2W, Cout): both
    # reshapes are free row-major splits/merges (column interleave for free).
    out = out.reshape(n, 2 * h, w, 2, cout).reshape(n, 2 * h, 2 * w, cout)
    return jnp.transpose(out, (0, 3, 1, 2))   # back to NCHW


# ---------------------------- reference & params ---------------------------- #

def _reference(x_nchw, bn_scale, bn_bias, conv_w, conv_b):
    a = x_nchw * bn_scale[None, :, None, None] + bn_bias[None, :, None, None]
    a = _leaky(a)
    y = jax.lax.conv_general_dilated(
        a, conv_w, window_strides=(1, 1), padding=((1, 1), (1, 1)),
        dimension_numbers=("NCHW", "OIHW", "NCHW"),
        precision=jax.lax.Precision.HIGHEST)
    y = y + conv_b[None, :, None, None]
    return jnp.repeat(jnp.repeat(y, 2, axis=2), 2, axis=3)


def make_params(key, in_filters, nb_filters):
    k1, k2, k3, k4, k5, k6 = jax.random.split(key, 6)
    gamma = 1.0 + 0.1 * jax.random.normal(k1, (in_filters,), jnp.float32)
    beta = 0.1 * jax.random.normal(k2, (in_filters,), jnp.float32)
    mean = 0.1 * jax.random.normal(k3, (in_filters,), jnp.float32)
    var = jnp.abs(1.0 + 0.1 * jax.random.normal(k4, (in_filters,), jnp.float32))
    scale = gamma / jnp.sqrt(var + BN_EPS)       # inference-mode BN folded to affine
    bias = beta - mean * scale
    w = 0.1 * jax.random.normal(k5, (nb_filters, in_filters, 3, 3), jnp.float32)
    b = 0.1 * jax.random.normal(k6, (nb_filters,), jnp.float32)
    return scale, bias, w, b


# ----------------------------------- main ----------------------------------- #

if __name__ == "__main__":
    in_filters, nb_filters = 4, 8
    N, H, W = 2, 16, 16

    key = jax.random.PRNGKey(0)
    kx, kp = jax.random.split(key)
    x = jax.random.normal(kx, (N, in_filters, H, W), jnp.float32)   # NCHW like PyTorch
    scale, bias, w, b = make_params(kp, in_filters, nb_filters)

    ref = _reference(x, scale, bias, w, b)

    # Default tiling (whole image height fits one tile at this size).
    fwd = jax.jit(lambda xx: ubn_relu_conv(xx, scale, bias, w, b))
    out = fwd(x)
    jax.block_until_ready(out)
    assert out.shape == (N, nb_filters, 2 * H, 2 * W), out.shape
    assert out.dtype == jnp.float32
    err = float(jnp.max(jnp.abs(out - ref)))
    assert err < 5e-2, f"max abs err vs reference: {err}"

    # Forced multi-tile run: exercises the in-kernel halo rows and the
    # top/bottom zero-padding boundary path.
    fwd_tiled = jax.jit(lambda xx: ubn_relu_conv(xx, scale, bias, w, b, row_tile=4))
    out_t = fwd_tiled(x)
    jax.block_until_ready(out_t)
    err_t = float(jnp.max(jnp.abs(out_t - ref)))
    assert err_t < 5e-2, f"max abs err vs reference (tiled): {err_t}"

    print("KERNEL_OK")
</pallas_src>

<mosaic_0001>
module attributes {stable_mosaic.version = 11 : i64} {
  func.func @kernel(%arg0: i32, %arg1: i32, %arg2: memref<1x1x16x4xf32, #tpu.memory_space<vmem>>, %arg3: memref<1x16x16x4xf32, #tpu.memory_space<vmem>>, %arg4: memref<1x1x16x4xf32, #tpu.memory_space<vmem>>, %arg5: memref<1x4xf32, #tpu.memory_space<vmem>>, %arg6: memref<1x4xf32, #tpu.memory_space<vmem>>, %arg7: memref<9x4x8xf32, #tpu.memory_space<vmem>>, %arg8: memref<1x8xf32, #tpu.memory_space<vmem>>, %arg9: memref<1x32x16x16xf32, #tpu.memory_space<vmem>>, %arg10: memref<18x18x4xf32, #tpu.memory_space<vmem>>) attributes {dimension_semantics = [#tpu.dimension_semantics<parallel>, #tpu.dimension_semantics<parallel>], iteration_bounds = array<i64: 2, 1>, scalar_prefetch = 0 : i64, scratch_operands = 1 : i64, tpu.core_type = #tpu.core_type<tc>, window_params = [{transform_indices = @transform_0, window_bounds = array<i64: 1, 1, 16, 4>}, {transform_indices = @transform_1, window_bounds = array<i64: 1, 16, 16, 4>}, {transform_indices = @transform_2, window_bounds = array<i64: 1, 1, 16, 4>}, {pipeline_mode = #tpu.pipeline_mode<synchronous>, transform_indices = @transform_3, window_bounds = array<i64: 1, 4>}, {pipeline_mode = #tpu.pipeline_mode<synchronous>, transform_indices = @transform_4, window_bounds = array<i64: 1, 4>}, {pipeline_mode = #tpu.pipeline_mode<synchronous>, transform_indices = @transform_5, window_bounds = array<i64: 9, 4, 8>}, {pipeline_mode = #tpu.pipeline_mode<synchronous>, transform_indices = @transform_6, window_bounds = array<i64: 1, 8>}, {transform_indices = @transform_7, window_bounds = array<i64: 1, 32, 16, 16>}]} {
    %c0 = arith.constant 0 : index
    %c0_0 = arith.constant 0 : index
    %0 = vector.load %arg5[%c0, %c0_0] : memref<1x4xf32, #tpu.memory_space<vmem>>, vector<1x4xf32>
    %c0_1 = arith.constant 0 : index
    %c0_2 = arith.constant 0 : index
    %1 = vector.load %arg6[%c0_1, %c0_2] : memref<1x4xf32, #tpu.memory_space<vmem>>, vector<1x4xf32>
    %cst = arith.constant 0.000000e+00 : f32
    %2 = vector.broadcast %cst : f32 to vector<18x18x4xf32>
    %c0_3 = arith.constant 0 : index
    %c0_4 = arith.constant 0 : index
    %c0_5 = arith.constant 0 : index
    %3 = vector.load %arg10[%c0_3, %c0_4, %c0_5] : memref<18x18x4xf32, #tpu.memory_space<vmem>>, vector<18x18x4xf32>
    tpu.vector_store %arg10[%c0_3, %c0_4, %c0_5], %2 {strides = array<i32>} : memref<18x18x4xf32, #tpu.memory_space<vmem>>, vector<18x18x4xf32>,
    %c0_6 = arith.constant 0 : index
    %c0_7 = arith.constant 0 : index
    %c0_8 = arith.constant 0 : index
    %c0_9 = arith.constant 0 : index
    %4 = vector.load %arg3[%c0_6, %c0_7, %c0_8, %c0_9] : memref<1x16x16x4xf32, #tpu.memory_space<vmem>>, vector<1x16x16x4xf32>
    %5 = vector.shape_cast %4 : vector<1x16x16x4xf32> to vector<16x16x4xf32>
    %6 = vector.shape_cast %0 : vector<1x4xf32> to vector<1x1x4xf32>
    %7 = vector.broadcast %6 : vector<1x1x4xf32> to vector<16x16x4xf32>
    %8 = arith.mulf %5, %7 : vector<16x16x4xf32>
    %9 = vector.shape_cast %1 : vector<1x4xf32> to vector<1x1x4xf32>
    %10 = vector.broadcast %9 : vector<1x1x4xf32> to vector<16x16x4xf32>
    %11 = arith.addf %8, %10 : vector<16x16x4xf32>
    %cst_10 = arith.constant 0.000000e+00 : f32
    %12 = vector.broadcast %cst_10 : f32 to vector<16x16x4xf32>
    %13 = arith.cmpf oge, %11, %12 : vector<16x16x4xf32>
    %cst_11 = arith.constant 2.000000e-01 : f32
    %14 = vector.broadcast %cst_11 : f32 to vector<16x16x4xf32>
    %15 = arith.mulf %14, %11 : vector<16x16x4xf32>
    %16 = arith.select %13, %11, %15 : vector<16x16x4xi1>, vector<16x16x4xf32>
    %c1 = arith.constant 1 : index
    %c1_12 = arith.constant 1 : index
    %c0_13 = arith.constant 0 : index
    %17 = vector.load %arg10[%c1, %c1_12, %c0_13] : memref<18x18x4xf32, #tpu.memory_space<vmem>>, vector<16x16x4xf32>
    tpu.vector_store %arg10[%c1, %c1_12, %c0_13], %16 {strides = array<i32>} : memref<18x18x4xf32, #tpu.memory_space<vmem>>, vector<16x16x4xf32>,
    %c0_i32 = arith.constant 0 : i32
    %18 = arith.cmpi sgt, %arg1, %c0_i32 : i32
    %19 = arith.extui %18 : i1 to i32
    %c0_i32_14 = arith.constant 0 : i32
    %20 = arith.cmpi ne, %19, %c0_i32_14 : i32
    scf.if %20 {
      %c0_83 = arith.constant 0 : index
      %c0_84 = arith.constant 0 : index
      %c0_85 = arith.constant 0 : index
      %c0_86 = arith.constant 0 : index
      %91 = vector.load %arg2[%c0_83, %c0_84, %c0_85, %c0_86] : memref<1x1x16x4xf32, #tpu.memory_space<vmem>>, vector<1x1x16x4xf32>
      %92 = vector.shape_cast %91 : vector<1x1x16x4xf32> to vector<1x16x4xf32>
      %93 = vector.shape_cast %0 : vector<1x4xf32> to vector<1x1x4xf32>
      %94 = vector.broadcast %93 : vector<1x1x4xf32> to vector<1x16x4xf32>
      %95 = arith.mulf %92, %94 : vector<1x16x4xf32>
      %96 = vector.shape_cast %1 : vector<1x4xf32> to vector<1x1x4xf32>
      %97 = vector.broadcast %96 : vector<1x1x4xf32> to vector<1x16x4xf32>
      %98 = arith.addf %95, %97 : vector<1x16x4xf32>
      %cst_87 = arith.constant 0.000000e+00 : f32
      %99 = vector.broadcast %cst_87 : f32 to vector<1x16x4xf32>
      %100 = arith.cmpf oge, %98, %99 : vector<1x16x4xf32>
      %cst_88 = arith.constant 2.000000e-01 : f32
      %101 = vector.broadcast %cst_88 : f32 to vector<1x16x4xf32>
      %102 = arith.mulf %101, %98 : vector<1x16x4xf32>
      %103 = arith.select %100, %98, %102 : vector<1x16x4xi1>, vector<1x16x4xf32>
      %c0_89 = arith.constant 0 : index
      %c1_90 = arith.constant 1 : index
      %c0_91 = arith.constant 0 : index
      %104 = vector.load %arg10[%c0_89, %c1_90, %c0_91] : memref<18x18x4xf32, #tpu.memory_space<vmem>>, vector<1x16x4xf32>
      tpu.vector_store %arg10[%c0_89, %c1_90, %c0_91], %103 {strides = array<i32>} : memref<18x18x4xf32, #tpu.memory_space<vmem>>, vector<1x16x4xf32>,
    } else {
    }
    %c0_i32_15 = arith.constant 0 : i32
    %21 = arith.cmpi slt, %arg1, %c0_i32_15 : i32
    %22 = arith.extui %21 : i1 to i32
    %c0_i32_16 = arith.constant 0 : i32
    %23 = arith.cmpi ne, %22, %c0_i32_16 : i32
    scf.if %23 {
      %c0_83 = arith.constant 0 : index
      %c0_84 = arith.constant 0 : index
      %c0_85 = arith.constant 0 : index
      %c0_86 = arith.constant 0 : index
      %91 = vector.load %arg4[%c0_83, %c0_84, %c0_85, %c0_86] : memref<1x1x16x4xf32, #tpu.memory_space<vmem>>, vector<1x1x16x4xf32>
      %92 = vector.shape_cast %91 : vector<1x1x16x4xf32> to vector<1x16x4xf32>
      %93 = vector.shape_cast %0 : vector<1x4xf32> to vector<1x1x4xf32>
      %94 = vector.broadcast %93 : vector<1x1x4xf32> to vector<1x16x4xf32>
      %95 = arith.mulf %92, %94 : vector<1x16x4xf32>
      %96 = vector.shape_cast %1 : vector<1x4xf32> to vector<1x1x4xf32>
      %97 = vector.broadcast %96 : vector<1x1x4xf32> to vector<1x16x4xf32>
      %98 = arith.addf %95, %97 : vector<1x16x4xf32>
      %cst_87 = arith.constant 0.000000e+00 : f32
      %99 = vector.broadcast %cst_87 : f32 to vector<1x16x4xf32>
      %100 = arith.cmpf oge, %98, %99 : vector<1x16x4xf32>
      %cst_88 = arith.constant 2.000000e-01 : f32
      %101 = vector.broadcast %cst_88 : f32 to vector<1x16x4xf32>
      %102 = arith.mulf %101, %98 : vector<1x16x4xf32>
      %103 = arith.select %100, %98, %102 : vector<1x16x4xi1>, vector<1x16x4xf32>
      %c17 = arith.constant 17 : index
      %c1_89 = arith.constant 1 : index
      %c0_90 = arith.constant 0 : index
      %104 = vector.load %arg10[%c17, %c1_89, %c0_90] : memref<18x18x4xf32, #tpu.memory_space<vmem>>, vector<1x16x4xf32>
      tpu.vector_store %arg10[%c17, %c1_89, %c0_90], %103 {strides = array<i32>} : memref<18x18x4xf32, #tpu.memory_space<vmem>>, vector<1x16x4xf32>,
    } else {
    }
    %c0_17 = arith.constant 0 : index
    %c0_18 = arith.constant 0 : index
    %c0_19 = arith.constant 0 : index
    %24 = vector.load %arg10[%c0_17, %c0_18, %c0_19] : memref<18x18x4xf32, #tpu.memory_space<vmem>>, vector<16x16x4xf32>
    %25 = vector.shape_cast %24 : vector<16x16x4xf32> to vector<256x4xf32>
    %c0_20 = arith.constant 0 : index
    %c0_21 = arith.constant 0 : index
    %c0_22 = arith.constant 0 : index
    %26 = vector.load %arg7[%c0_20, %c0_21, %c0_22] : memref<9x4x8xf32, #tpu.memory_space<vmem>>, vector<1x4x8xf32>
    %27 = vector.shape_cast %26 : vector<1x4x8xf32> to vector<4x8xf32>
    %cst_23 = arith.constant dense<0.000000e+00> : vector<256x8xf32>
    %28 = tpu.matmul %25, %27, %cst_23 {dimension_numbers = #tpu.dot_dimension_numbers<[1], [0], [0], [1], [0, 0, 1, 1], [], []>} : vector<256x4xf32>, vector<4x8xf32>, vector<256x8xf32> -> vector<256x8xf32>
    %c0_24 = arith.constant 0 : index
    %c1_25 = arith.constant 1 : index
    %c0_26 = arith.constant 0 : index
    %29 = vector.load %arg10[%c0_24, %c1_25, %c0_26] : memref<18x18x4xf32, #tpu.memory_space<vmem>>, vector<16x16x4xf32>
    %30 = vector.shape_cast %29 : vector<16x16x4xf32> to vector<256x4xf32>
    %c1_27 = arith.constant 1 : index
    %c0_28 = arith.constant 0 : index
    %c0_29 = arith.constant 0 : index
    %31 = vector.load %arg7[%c1_27, %c0_28, %c0_29] : memref<9x4x8xf32, #tpu.memory_space<vmem>>, vector<1x4x8xf32>
    %32 = vector.shape_cast %31 : vector<1x4x8xf32> to vector<4x8xf32>
    %cst_30 = arith.constant dense<0.000000e+00> : vector<256x8xf32>
    %33 = tpu.matmul %30, %32, %cst_30 {dimension_numbers = #tpu.dot_dimension_numbers<[1], [0], [0], [1], [0, 0, 1, 1], [], []>} : vector<256x4xf32>, vector<4x8xf32>, vector<256x8xf32> -> vector<256x8xf32>
    %34 = arith.addf %28, %33 : vector<256x8xf32>
    %c0_31 = arith.constant 0 : index
    %c2 = arith.constant 2 : index
    %c0_32 = arith.constant 0 : index
    %35 = vector.load %arg10[%c0_31, %c2, %c0_32] : memref<18x18x4xf32, #tpu.memory_space<vmem>>, vector<16x16x4xf32>
    %36 = vector.shape_cast %35 : vector<16x16x4xf32> to vector<256x4xf32>
    %c2_33 = arith.constant 2 : index
    %c0_34 = arith.constant 0 : index
    %c0_35 = arith.constant 0 : index
    %37 = vector.load %arg7[%c2_33, %c0_34, %c0_35] : memref<9x4x8xf32, #tpu.memory_space<vmem>>, vector<1x4x8xf32>
    %38 = vector.shape_cast %37 : vector<1x4x8xf32> to vector<4x8xf32>
    %cst_36 = arith.constant dense<0.000000e+00> : vector<256x8xf32>
    %39 = tpu.matmul %36, %38, %cst_36 {dimension_numbers = #tpu.dot_dimension_numbers<[1], [0], [0], [1], [0, 0, 1, 1], [], []>} : vector<256x4xf32>, vector<4x8xf32>, vector<256x8xf32> -> vector<256x8xf32>
    %40 = arith.addf %34, %39 : vector<256x8xf32>
    %c1_37 = arith.constant 1 : index
    %c0_38 = arith.constant 0 : index
    %c0_39 = arith.constant 0 : index
    %41 = vector.load %arg10[%c1_37, %c0_38, %c0_39] : memref<18x18x4xf32, #tpu.memory_space<vmem>>, vector<16x16x4xf32>
    %42 = vector.shape_cast %41 : vector<16x16x4xf32> to vector<256x4xf32>
    %c3 = arith.constant 3 : index
    %c0_40 = arith.constant 0 : index
    %c0_41 = arith.constant 0 : index
    %43 = vector.load %arg7[%c3, %c0_40, %c0_41] : memref<9x4x8xf32, #tpu.memory_space<vmem>>, vector<1x4x8xf32>
    %44 = vector.shape_cast %43 : vector<1x4x8xf32> to vector<4x8xf32>
    %cst_42 = arith.constant dense<0.000000e+00> : vector<256x8xf32>
    %45 = tpu.matmul %42, %44, %cst_42 {dimension_numbers = #tpu.dot_dimension_numbers<[1], [0], [0], [1], [0, 0, 1, 1], [], []>} : vector<256x4xf32>, vector<4x8xf32>, vector<256x8xf32> -> vector<256x8xf32>
    %46 = arith.addf %40, %45 : vector<256x8xf32>
    %c1_43 = arith.constant 1 : index
    %c1_44 = arith.constant 1 : index
    %c0_45 = arith.constant 0 : index
    %47 = vector.load %arg10[%c1_43, %c1_44, %c0_45] : memref<18x18x4xf32, #tpu.memory_space<vmem>>, vector<16x16x4xf32>
    %48 = vector.shape_cast %47 : vector<16x16x4xf32> to vector<256x4xf32>
    %c4 = arith.constant 4 : index
    %c0_46 = arith.constant 0 : index
    %c0_47 = arith.constant 0 : index
    %49 = vector.load %arg7[%c4, %c0_46, %c0_47] : memref<9x4x8xf32, #tpu.memory_space<vmem>>, vector<1x4x8xf32>
    %50 = vector.shape_cast %49 : vector<1x4x8xf32> to vector<4x8xf32>
    %cst_48 = arith.constant dense<0.000000e+00> : vector<256x8xf32>
    %51 = tpu.matmul %48, %50, %cst_48 {dimension_numbers = #tpu.dot_dimension_numbers<[1], [0], [0], [1], [0, 0, 1, 1], [], []>} : vector<256x4xf32>, vector<4x8xf32>, vector<256x8xf32> -> vector<256x8xf32>
    %52 = arith.addf %46, %51 : vector<256x8xf32>
    %c1_49 = arith.constant 1 : index
    %c2_50 = arith.constant 2 : index
    %c0_51 = arith.constant 0 : index
    %53 = vector.load %arg10[%c1_49, %c2_50, %c0_51] : memref<18x18x4xf32, #tpu.memory_space<vmem>>, vector<16x16x4xf32>
    %54 = vector.shape_cast %53 : vector<16x16x4xf32> to vector<256x4xf32>
    %c5 = arith.constant 5 : index
    %c0_52 = arith.constant 0 : index
    %c0_53 = arith.constant 0 : index
    %55 = vector.load %arg7[%c5, %c0_52, %c0_53] : memref<9x4x8xf32, #tpu.memory_space<vmem>>, vector<1x4x8xf32>
    %56 = vector.shape_cast %55 : vector<1x4x8xf32> to vector<4x8xf32>
    %cst_54 = arith.constant dense<0.000000e+00> : vector<256x8xf32>
    %57 = tpu.matmul %54, %56, %cst_54 {dimension_numbers = #tpu.dot_dimension_numbers<[1], [0], [0], [1], [0, 0, 1, 1], [], []>} : vector<256x4xf32>, vector<4x8xf32>, vector<256x8xf32> -> vector<256x8xf32>
    %58 = arith.addf %52, %57 : vector<256x8xf32>
    %c2_55 = arith.constant 2 : index
    %c0_56 = arith.constant 0 : index
    %c0_57 = arith.constant 0 : index
    %59 = vector.load %arg10[%c2_55, %c0_56, %c0_57] : memref<18x18x4xf32, #tpu.memory_space<vmem>>, vector<16x16x4xf32>
    %60 = vector.shape_cast %59 : vector<16x16x4xf32> to vector<256x4xf32>
    %c6 = arith.constant 6 : index
    %c0_58 = arith.constant 0 : index
    %c0_59 = arith.constant 0 : index
    %61 = vector.load %arg7[%c6, %c0_58, %c0_59] : memref<9x4x8xf32, #tpu.memory_space<vmem>>, vector<1x4x8xf32>
    %62 = vector.shape_cast %61 : vector<1x4x8xf32> to vector<4x8xf32>
    %cst_60 = arith.constant dense<0.000000e+00> : vector<256x8xf32>
    %63 = tpu.matmul %60, %62, %cst_60 {dimension_numbers = #tpu.dot_dimension_numbers<[1], [0], [0], [1], [0, 0, 1, 1], [], []>} : vector<256x4xf32>, vector<4x8xf32>, vector<256x8xf32> -> vector<256x8xf32>
    %64 = arith.addf %58, %63 : vector<256x8xf32>
    %c2_61 = arith.constant 2 : index
    %c1_62 = arith.constant 1 : index
    %c0_63 = arith.constant 0 : index
    %65 = vector.load %arg10[%c2_61, %c1_62, %c0_63] : memref<18x18x4xf32, #tpu.memory_space<vmem>>, vector<16x16x4xf32>
    %66 = vector.shape_cast %65 : vector<16x16x4xf32> to vector<256x4xf32>
    %c7 = arith.constant 7 : index
    %c0_64 = arith.constant 0 : index
    %c0_65 = arith.constant 0 : index
    %67 = vector.load %arg7[%c7, %c0_64, %c0_65] : memref<9x4x8xf32, #tpu.memory_space<vmem>>, vector<1x4x8xf32>
    %68 = vector.shape_cast %67 : vector<1x4x8xf32> to vector<4x8xf32>
    %cst_66 = arith.constant dense<0.000000e+00> : vector<256x8xf32>
    %69 = tpu.matmul %66, %68, %cst_66 {dimension_numbers = #tpu.dot_dimension_numbers<[1], [0], [0], [1], [0, 0, 1, 1], [], []>} : vector<256x4xf32>, vector<4x8xf32>, vector<256x8xf32> -> vector<256x8xf32>
    %70 = arith.addf %64, %69 : vector<256x8xf32>
    %c2_67 = arith.constant 2 : index
    %c2_68 = arith.constant 2 : index
    %c0_69 = arith.constant 0 : index
    %71 = vector.load %arg10[%c2_67, %c2_68, %c0_69] : memref<18x18x4xf32, #tpu.memory_space<vmem>>, vector<16x16x4xf32>
    %72 = vector.shape_cast %71 : vector<16x16x4xf32> to vector<256x4xf32>
    %c8 = arith.constant 8 : index
    %c0_70 = arith.constant 0 : index
    %c0_71 = arith.constant 0 : index
    %73 = vector.load %arg7[%c8, %c0_70, %c0_71] : memref<9x4x8xf32, #tpu.memory_space<vmem>>, vector<1x4x8xf32>
    %74 = vector.shape_cast %73 : vector<1x4x8xf32> to vector<4x8xf32>
    %cst_72 = arith.constant dense<0.000000e+00> : vector<256x8xf32>
    %75 = tpu.matmul %72, %74, %cst_72 {dimension_numbers = #tpu.dot_dimension_numbers<[1], [0], [0], [1], [0, 0, 1, 1], [], []>} : vector<256x4xf32>, vector<4x8xf32>, vector<256x8xf32> -> vector<256x8xf32>
    %76 = arith.addf %70, %75 : vector<256x8xf32>
    %c0_73 = arith.constant 0 : index
    %c0_74 = arith.constant 0 : index
    %77 = vector.load %arg8[%c0_73, %c0_74] : memref<1x8xf32, #tpu.memory_space<vmem>>, vector<1x8xf32>
    %78 = vector.broadcast %77 : vector<1x8xf32> to vector<256x8xf32>
    %79 = arith.addf %76, %78 : vector<256x8xf32>
    %80 = vector.shape_cast %79 : vector<256x8xf32> to vector<16x16x8xf32>
    %81 = vector.shape_cast %80 : vector<16x16x8xf32> to vector<16x1x16x8xf32>
    %82 = vector.shape_cast %81 : vector<16x1x16x8xf32> to vector<16x1x16x8xf32>
    %83 = vector.broadcast %82 : vector<16x1x16x8xf32> to vector<16x2x16x8xf32>
    %84 = vector.shape_cast %83 : vector<16x2x16x8xf32> to vector<32x16x8xf32>
    %c0_75 = arith.constant 0 : index
    %c0_76 = arith.constant 0 : index
    %c0_77 = arith.constant 0 : index
    %c0_78 = arith.constant 0 : index
    %85 = vector.load %arg9[%c0_75, %c0_76, %c0_77, %c0_78] : memref<1x32x16x16xf32, #tpu.memory_space<vmem>>, vector<1x32x16x8xf32>
    %86 = vector.shape_cast %85 : vector<1x32x16x8xf32> to vector<32x16x8xf32>
    %87 = vector.shape_cast %84 : vector<32x16x8xf32> to vector<1x32x16x8xf32>
    tpu.vector_store %arg9[%c0_75, %c0_76, %c0_77, %c0_78], %87 {strides = array<i32>} : memref<1x32x16x16xf32, #tpu.memory_space<vmem>>, vector<1x32x16x8xf32>,
    %c0_79 = arith.constant 0 : index
    %c0_80 = arith.constant 0 : index
    %c0_81 = arith.constant 0 : index
    %c8_82 = arith.constant 8 : index
    %88 = vector.load %arg9[%c0_79, %c0_80, %c0_81, %c8_82] : memref<1x32x16x16xf32, #tpu.memory_space<vmem>>, vector<1x32x16x8xf32>
    %89 = vector.shape_cast %88 : vector<1x32x16x8xf32> to vector<32x16x8xf32>
    %90 = vector.shape_cast %84 : vector<32x16x8xf32> to vector<1x32x16x8xf32>
    tpu.vector_store %arg9[%c0_79, %c0_80, %c0_81, %c8_82], %90 {strides = array<i32>} : memref<1x32x16x16xf32, #tpu.memory_space<vmem>>, vector<1x32x16x8xf32>,
    return
  }
  func.func @transform_0(%arg0: i32, %arg1: i32) -> (i32, i32, i32, i32) {
    %c16_i32 = arith.constant 16 : i32
    %0 = arith.muli %arg1, %c16_i32 : i32
    %c1_i32 = arith.constant 1 : i32
    %1 = arith.subi %0, %c1_i32 : i32
    %c0_i32 = arith.constant 0 : i32
    %2 = arith.maxsi %1, %c0_i32 : i32
    %c0_i32_0 = arith.constant 0 : i32
    %c0_i32_1 = arith.constant 0 : i32
    %c0_i32_2 = arith.constant 0 : i32
    return %arg0, %2, %c0_i32_0, %c0_i32_1 : i32, i32, i32, i32
  }
  func.func @transform_1(%arg0: i32, %arg1: i32) -> (i32, i32, i32, i32) {
    %c0_i32 = arith.constant 0 : i32
    %c0_i32_0 = arith.constant 0 : i32
    %c0_i32_1 = arith.constant 0 : i32
    return %arg0, %arg1, %c0_i32, %c0_i32_0 : i32, i32, i32, i32
  }
  func.func @transform_2(%arg0: i32, %arg1: i32) -> (i32, i32, i32, i32) {
    %c1_i32 = arith.constant 1 : i32
    %0 = arith.addi %arg1, %c1_i32 : i32
    %c16_i32 = arith.constant 16 : i32
    %1 = arith.muli %0, %c16_i32 : i32
    %c15_i32 = arith.constant 15 : i32
    %2 = arith.minsi %1, %c15_i32 : i32
    %c0_i32 = arith.constant 0 : i32
    %c0_i32_0 = arith.constant 0 : i32
    %c0_i32_1 = arith.constant 0 : i32
    return %arg0, %2, %c0_i32, %c0_i32_0 : i32, i32, i32, i32
  }
  func.func @transform_3(%arg0: i32, %arg1: i32) -> (i32, i32) {
    %c0_i32 = arith.constant 0 : i32
    %c0_i32_0 = arith.constant 0 : i32
    %c0_i32_1 = arith.constant 0 : i32
    return %c0_i32, %c0_i32_0 : i32, i32
  }
  func.func @transform_4(%arg0: i32, %arg1: i32) -> (i32, i32) {
    %c0_i32 = arith.constant 0 : i32
    %c0_i32_0 = arith.constant 0 : i32
    %c0_i32_1 = arith.constant 0 : i32
    return %c0_i32, %c0_i32_0 : i32, i32
  }
  func.func @transform_5(%arg0: i32, %arg1: i32) -> (i32, i32, i32) {
    %c0_i32 = arith.constant 0 : i32
    %c0_i32_0 = arith.constant 0 : i32
    %c0_i32_1 = arith.constant 0 : i32
    %c0_i32_2 = arith.constant 0 : i32
    return %c0_i32, %c0_i32_0, %c0_i32_1 : i32, i32, i32
  }
  func.func @transform_6(%arg0: i32, %arg1: i32) -> (i32, i32) {
    %c0_i32 = arith.constant 0 : i32
    %c0_i32_0 = arith.constant 0 : i32
    %c0_i32_1 = arith.constant 0 : i32
    return %c0_i32, %c0_i32_0 : i32, i32
  }
  func.func @transform_7(%arg0: i32, %arg1: i32) -> (i32, i32, i32, i32) {
    %c0_i32 = arith.constant 0 : i32
    %c0_i32_0 = arith.constant 0 : i32
    %c0_i32_1 = arith.constant 0 : i32
    return %arg0, %arg1, %c0_i32, %c0_i32_0 : i32, i32, i32, i32
  }
}

</mosaic_0001>

<llo_original>
// kernel: _lambda_.1
$region0: #{_lambda_.1}
  #allocation0 [shape = 'u32[]', space=smem, size = 0x4, offset = 0x4, fixed_abs, tag = 'smem constant byte address 0x4 - core index']
  #allocation1 [shape = 'u32[144,128]{1,0:T(1,128)}', space=vmem, size = 0x12000, scoped, tag = 'internal scratch']
  #allocation2 [shape = 'f32[18,18,4]{2,1,0:T(8,128)}', space=vmem, size = 0x36000, scoped, tag = 'scratch operand']
  %s0 = inlined_call_operand.vmem [shape: f32[2,16,16,4], index: 0, kind: input, shape index: {}, may-alias: {0,1,2}]
  %s1 = inlined_call_operand.vmem [shape: f32[2,16,16,4], index: 1, kind: input, shape index: {}, may-alias: {0,1,2}]
  %s2 = inlined_call_operand.vmem [shape: f32[2,16,16,4], index: 2, kind: input, shape index: {}, may-alias: {0,1,2}]
  %s3 = inlined_call_operand.vmem [shape: f32[1,4], index: 3, kind: input, shape index: {}]
  %s4 = inlined_call_operand.vmem [shape: f32[1,4], index: 4, kind: input, shape index: {}]
  %s5 = inlined_call_operand.vmem [shape: f32[9,4,8], index: 5, kind: input, shape index: {}]
  %s6 = inlined_call_operand.vmem [shape: f32[1,8], index: 6, kind: input, shape index: {}]
  %s7 = inlined_call_operand.vmem [shape: f32[2,32,16,16], index: 7, kind: output, shape index: {}]
  %s8 = sld [smem:[#allocation0]]
  $region69: #{_lambda_.1} parent=0
    _
  %s10 = ssub.s32 1, %s8
  %s11 = scalar_select 0, %s10, %s8
  loop: start=0, step=1, limit=4
  $region2: #{_lambda_.1} parent=0 // loop_pre_header
    _
  $region3: #{_lambda_.1} parent=0 // loop_header
    %s13 = sphi 0, %s17
    %p14 = scmp.ge.s32.totalorder %s13, 4
    %s20 = sphi 0, %s32
    %s21 = sphi 0, %s28
    %s22 = sphi 0, %s20
    %s23 = sphi 0, %s21
    %s24 = sphi 0, %s22
    %s25 = sphi 0, %s23
    %s45 = sphi 0, %s47
    %s48 = sphi 0, %s45
    %s49 = sphi 0, %s48
    %s65 = sphi 0, %s49
    %s73 = sphi 0, %s75
    %s76 = sphi 0, %s73
    %s77 = sphi 0, %s76
    %s93 = sphi 0, %s77
    %s109 = sphi 0, %s111
    %s112 = sphi 0, %s109
    %s113 = sphi 0, %s112
    %s129 = sphi 0, %s113
    %s133 = sphi 0, %s133
    %s135 = sphi 0, %s133
    %s136 = sphi 0, %s135
    %s150 = sphi 0, %s136
    %s154 = sphi 0, %s154
    %s156 = sphi 0, %s154
    %s157 = sphi 0, %s156
    %s171 = sphi 0, %s157
    %s175 = sphi 0, %s175
    %s177 = sphi 0, %s175
    %s178 = sphi 0, %s177
    %s192 = sphi 0, %s178
    %s196 = sphi 0, %s196
    %s198 = sphi 0, %s196
    %s199 = sphi 0, %s198
    %s213 = sphi 0, %s199
    %s221 = sphi 0, %s223
    %s224 = sphi 0, %s221
    %s225 = sphi 0, %s224
    %s241 = sphi 0, %s225
  $region4: #{_lambda_.1} parent=0 // loop_header_branch
    %16 = sbr.rel (%p14) target = $region8
  $region5: #{_lambda_.1} parent=0 // loop_body
    %s18 = ssub.s32 %s13, 1
    %s19 = ssub.s32 %s13, 2
    %s26 = sadd.s32 1, %s21
    %p27 = scmp.ge.s32.totalorder %s26, 1
    %s28 = scalar_select %p27, 0, %s26
    %s29 = sadd.s32 1, %s20
    %s30 = scalar_select %p27, %s29, %s20
    %p31 = scmp.ge.s32.totalorder %s30, 2
    %s32 = scalar_select %p31, 0, %s30
    %s33 = smul.u32 %s21, 16
    %s34 = ssub.s32 %s33, 1
    %p35 = scmp.gt.s32.totalorder %s34, 0
    %s36 = scalar_select %p35, %s34, 0
    %s37 = smul.u32 %s28, 16
    %s38 = ssub.s32 %s37, 1
    %p39 = scmp.gt.s32.totalorder %s38, 0
    %s40 = scalar_select %p39, %s38, 0
    %s41 = ssub.s32 %s20, %s32
    %s42 = ssub.s32 %s36, %s40
    %s43 = sor.u32 %s41, %s42
    %p44 = scmp.eq.s32.totalorder %s43, 0
    %s46 = sadd.s32 %s45, 1
    %s47 = scalar_select %p44, %s45, %s46
    %p50 = pneg %p44
    %p51 = scmp.eq.s32.totalorder %s13, 1
    %p52 = por %p50, %p51
    %p53 = scmp.ne.s32.totalorder %s45, %s48
    %p54 = scmp.eq.s32.totalorder %s13, 0
    %p55 = por %p53, %p54
    %p56 = scmp.ne.s32.totalorder %s45, %s48
    %p57 = scmp.eq.s32.totalorder %s18, 1
    %p58 = por %p56, %p57
    %p59 = scmp.ne.s32.totalorder %s48, %s49
    %p60 = scmp.eq.s32.totalorder %s18, 0
    %p61 = por %p59, %p60
    %p62 = scmp.ne.s32.totalorder %s48, %s49
    %p63 = scmp.eq.s32.totalorder %s19, 1
    %p64 = por %p62, %p63
    %p66 = scmp.ne.s32.totalorder %s49, %s65
    %p67 = scmp.eq.s32.totalorder %s19, 0
    %p68 = por %p66, %p67
    %s69 = ssub.s32 %s20, %s32
    %s70 = ssub.s32 %s21, %s28
    %s71 = sor.u32 %s69, %s70
    %p72 = scmp.eq.s32.totalorder %s71, 0
    %s74 = sadd.s32 %s73, 1
    %s75 = scalar_select %p72, %s73, %s74
    %p78 = pneg %p72
    %p79 = scmp.eq.s32.totalorder %s13, 1
    %p80 = por %p78, %p79
    %p81 = scmp.ne.s32.totalorder %s73, %s76
    %p82 = scmp.eq.s32.totalorder %s13, 0
    %p83 = por %p81, %p82
    %p84 = scmp.ne.s32.totalorder %s73, %s76
    %p85 = scmp.eq.s32.totalorder %s18, 1
    %p86 = por %p84, %p85
    %p87 = scmp.ne.s32.totalorder %s76, %s77
    %p88 = scmp.eq.s32.totalorder %s18, 0
    %p89 = por %p87, %p88
    %p90 = scmp.ne.s32.totalorder %s76, %s77
    %p91 = scmp.eq.s32.totalorder %s19, 1
    %p92 = por %p90, %p91
    %p94 = scmp.ne.s32.totalorder %s77, %s93
    %p95 = scmp.eq.s32.totalorder %s19, 0
    %p96 = por %p94, %p95
    %s97 = sadd.s32 %s21, 1
    %s98 = smul.u32 %s97, 16
    %p99 = scmp.lt.s32.totalorder %s98, 15
    %s100 = scalar_select %p99, %s98, 15
    %s101 = sadd.s32 %s28, 1
    %s102 = smul.u32 %s101, 16
    %p103 = scmp.lt.s32.totalorder %s102, 15
    %s104 = scalar_select %p103, %s102, 15
    %s105 = ssub.s32 %s20, %s32
    %s106 = ssub.s32 %s100, %s104
    %s107 = sor.u32 %s105, %s106
    %p108 = scmp.eq.s32.totalorder %s107, 0
    %s110 = sadd.s32 %s109, 1
    %s111 = scalar_select %p108, %s109, %s110
    %p114 = pneg %p108
    %p115 = scmp.eq.s32.totalorder %s13, 1
    %p116 = por %p114, %p115
    %p117 = scmp.ne.s32.totalorder %s109, %s112
    %p118 = scmp.eq.s32.totalorder %s13, 0
    %p119 = por %p117, %p118
    %p120 = scmp.ne.s32.totalorder %s109, %s112
    %p121 = scmp.eq.s32.totalorder %s18, 1
    %p122 = por %p120, %p121
    %p123 = scmp.ne.s32.totalorder %s112, %s113
    %p124 = scmp.eq.s32.totalorder %s18, 0
    %p125 = por %p123, %p124
    %p126 = scmp.ne.s32.totalorder %s112, %s113
    %p127 = scmp.eq.s32.totalorder %s19, 1
    %p128 = por %p126, %p127
    %p130 = scmp.ne.s32.totalorder %s113, %s129
    %p131 = scmp.eq.s32.totalorder %s19, 0
    %p132 = por %p130, %p131
    %s134 = sadd.s32 %s133, 1
    %p137 = scmp.eq.s32.totalorder %s13, 1
    %p138 = scmp.ne.s32.totalorder %s133, %s135
    %p139 = scmp.eq.s32.totalorder %s13, 0
    %p140 = por %p138, %p139
    %p141 = scmp.ne.s32.totalorder %s133, %s135
    %p142 = scmp.eq.s32.totalorder %s18, 1
    %p143 = por %p141, %p142
    %p144 = scmp.ne.s32.totalorder %s135, %s136
    %p145 = scmp.eq.s32.totalorder %s18, 0
    %p146 = por %p144, %p145
    %p147 = scmp.ne.s32.totalorder %s135, %s136
    %p148 = scmp.eq.s32.totalorder %s19, 1
    %p149 = por %p147, %p148
    %p151 = scmp.ne.s32.totalorder %s136, %s150
    %p152 = scmp.eq.s32.totalorder %s19, 0
    %p153 = por %p151, %p152
    %s155 = sadd.s32 %s154, 1
    %p158 = scmp.eq.s32.totalorder %s13, 1
    %p159 = scmp.ne.s32.totalorder %s154, %s156
    %p160 = scmp.eq.s32.totalorder %s13, 0
    %p161 = por %p159, %p160
    %p162 = scmp.ne.s32.totalorder %s154, %s156
    %p163 = scmp.eq.s32.totalorder %s18, 1
    %p164 = por %p162, %p163
    %p165 = scmp.ne.s32.totalorder %s156, %s157
    %p166 = scmp.eq.s32.totalorder %s18, 0
    %p167 = por %p165, %p166
    %p168 = scmp.ne.s32.totalorder %s156, %s157
    %p169 = scmp.eq.s32.totalorder %s19, 1
    %p170 = por %p168, %p169
    %p172 = scmp.ne.s32.totalorder %s157, %s171
    %p173 = scmp.eq.s32.totalorder %s19, 0
    %p174 = por %p172, %p173
    %s176 = sadd.s32 %s175, 1
    %p179 = scmp.eq.s32.totalorder %s13, 1
    %p180 = scmp.ne.s32.totalorder %s175, %s177
    %p181 = scmp.eq.s32.totalorder %s13, 0
    %p182 = por %p180, %p181
    %p183 = scmp.ne.s32.totalorder %s175, %s177
    %p184 = scmp.eq.s32.totalorder %s18, 1
    %p185 = por %p183, %p184
    %p186 = scmp.ne.s32.totalorder %s177, %s178
    %p187 = scmp.eq.s32.totalorder %s18, 0
    %p188 = por %p186, %p187
    %p189 = scmp.ne.s32.totalorder %s177, %s178
    %p190 = scmp.eq.s32.totalorder %s19, 1
    %p191 = por %p189, %p190
    %p193 = scmp.ne.s32.totalorder %s178, %s192
    %p194 = scmp.eq.s32.totalorder %s19, 0
    %p195 = por %p193, %p194
    %s197 = sadd.s32 %s196, 1
    %p200 = scmp.eq.s32.totalorder %s13, 1
    %p201 = scmp.ne.s32.totalorder %s196, %s198
    %p202 = scmp.eq.s32.totalorder %s13, 0
    %p203 = por %p201, %p202
    %p204 = scmp.ne.s32.totalorder %s196, %s198
    %p205 = scmp.eq.s32.totalorder %s18, 1
    %p206 = por %p204, %p205
    %p207 = scmp.ne.s32.totalorder %s198, %s199
    %p208 = scmp.eq.s32.totalorder %s18, 0
    %p209 = por %p207, %p208
    %p210 = scmp.ne.s32.totalorder %s198, %s199
    %p211 = scmp.eq.s32.totalorder %s19, 1
    %p212 = por %p210, %p211
    %p214 = scmp.ne.s32.totalorder %s199, %s213
    %p215 = scmp.eq.s32.totalorder %s19, 0
    %p216 = por %p214, %p215
    %s217 = ssub.s32 %s20, %s32
    %s218 = ssub.s32 %s21, %s28
    %s219 = sor.u32 %s217, %s218
    %p220 = scmp.eq.s32.totalorder %s219, 0
    %s222 = sadd.s32 %s221, 1
    %s223 = scalar_select %p220, %s221, %s222
    %p226 = pneg %p220
    %p227 = scmp.eq.s32.totalorder %s13, 1
    %p228 = por %p226, %p227
    %p229 = scmp.ne.s32.totalorder %s221, %s224
    %p230 = scmp.eq.s32.totalorder %s13, 0
    %p231 = por %p229, %p230
    %p232 = scmp.ne.s32.totalorder %s221, %s224
    %p233 = scmp.eq.s32.totalorder %s18, 1
    %p234 = por %p232, %p233
    %p235 = scmp.ne.s32.totalorder %s224, %s225
    %p236 = scmp.eq.s32.totalorder %s18, 0
    %p237 = por %p235, %p236
    %p238 = scmp.ne.s32.totalorder %s224, %s225
    %p239 = scmp.eq.s32.totalorder %s19, 1
    %p240 = por %p238, %p239
    %p242 = scmp.ne.s32.totalorder %s225, %s241
    %p243 = scmp.eq.s32.totalorder %s19, 0
    %p244 = por %p242, %p243
    %p245 = scmp.le.s32.totalorder 1, %s13
    %p246 = scmp.lt.s32.totalorder %s13, 3
    %p247 = pnand %p245, %p246
    %p248 = pneg %p247
    // Predicated region
    $region9: #{_lambda_.1} parent=5 // pred_check
      _
    $region10: #{_lambda_.1} parent=5 // pred_check_branch
      %250 = sbr.rel (%p247) target = $region12
    $region11: #{_lambda_.1} parent=5 // pred_region
      %s251 = ssub.s32 %s13, 1
      // Predicated region
      $region13: #{_lambda_.1} parent=11 // pred_check
        %p252 = pneg %p146
      $region14: #{_lambda_.1} parent=11 // pred_check_branch
        %254 = sbr.rel (%p252) target = $region16
      $region15: #{_lambda_.1} parent=11 // pred_region
        _
      $region16: #{_lambda_.1} parent=11 // pred_fallthru
        _
      // Predicated region
      $region17: #{_lambda_.1} parent=11 // pred_check
        %p255 = pneg %p167
      $region18: #{_lambda_.1} parent=11 // pred_check_branch
        %257 = sbr.rel (%p255) target = $region20
      $region19: #{_lambda_.1} parent=11 // pred_region
        _
      $region20: #{_lambda_.1} parent=11 // pred_fallthru
        _
      // Predicated region
      $region21: #{_lambda_.1} parent=11 // pred_check
        %p258 = pneg %p188
      $region22: #{_lambda_.1} parent=11 // pred_check_branch
        %260 = sbr.rel (%p258) target = $region24
      $region23: #{_lambda_.1} parent=11 // pred_region
        _
      $region24: #{_lambda_.1} parent=11 // pred_fallthru
        _
      // Predicated region
      $region25: #{_lambda_.1} parent=11 // pred_check
        %p261 = pneg %p209
      $region26: #{_lambda_.1} parent=11 // pred_check_branch
        %263 = sbr.rel (%p261) target = $region28
      $region27: #{_lambda_.1} parent=11 // pred_region
        _
      $region28: #{_lambda_.1} parent=11 // pred_fallthru
        _
    $region12: #{_lambda_.1} parent=5 // pred_fallthru
      _
    %p264 = scmp.lt.s32.totalorder %s13, 2
    // Predicated region
    $region29: #{_lambda_.1} parent=5 // pred_check
      %p265 = pneg %p264
    $region30: #{_lambda_.1} parent=5 // pred_check_branch
      %267 = sbr.rel (%p265) target = $region32
    $region31: #{_lambda_.1} parent=5 // pred_region
      // Predicated region
      $region33: #{_lambda_.1} parent=31 // pred_check
        %p268 = pneg %p55
      $region34: #{_lambda_.1} parent=31 // pred_check_branch
        %270 = sbr.rel (%p268) target = $region36
      $region35: #{_lambda_.1} parent=31 // pred_region
        %s271 = smul.u32 %s21, 16
        %s272 = ssub.s32 %s271, 1
        %p273 = scmp.gt.s32.totalorder %s272, 0
        %s274 = scalar_select %p273, %s272, 0
        %p275 = scmp.lt.s32.totalorder %s20, 1
        %s276 = scalar_select %p275, %s20, 1
        %p277 = scmp.lt.s32.totalorder %s274, 15
        %s278 = scalar_select %p277, %s274, 15
        %s279 = smul.addr %s278, 2
        %s280 = smul.addr %s276, 32
        %s281 = sadd.s32 %s279, %s280
        %s282 = smul.addr %s281, 8
        %s283 = scalar_lea.vmem %s0, %s282
        %s284 = smul.u32 %s21, 16
        %s285 = ssub.s32 %s284, 1
        %p286 = scmp.gt.s32.totalorder %s285, 0
        %s287 = scalar_select %p286, %s285, 0
      $region36: #{_lambda_.1} parent=31 // pred_fallthru
        _
      // Predicated region
      $region37: #{_lambda_.1} parent=31 // pred_check
        %p288 = pneg %p83
      $region38: #{_lambda_.1} parent=31 // pred_check_branch
        %290 = sbr.rel (%p288) target = $region40
      $region39: #{_lambda_.1} parent=31 // pred_region
        %s291 = smul.u32 16, %s21
        %p292 = scmp.lt.s32.totalorder %s20, 1
        %s293 = scalar_select %p292, %s20, 1
        %p294 = scmp.lt.s32.totalorder %s291, 15
        %s295 = scalar_select %p294, %s291, 15
        %s296 = smul.addr %s295, 2
        %s297 = smul.addr %s293, 32
        %s298 = sadd.s32 %s296, %s297
        %s299 = smul.addr %s298, 8
        %s300 = scalar_lea.vmem %s1, %s299
        %s301 = smul.u32 16, %s21
      $region40: #{_lambda_.1} parent=31 // pred_fallthru
        _
      // Predicated region
      $region41: #{_lambda_.1} parent=31 // pred_check
        %p302 = pneg %p119
      $region42: #{_lambda_.1} parent=31 // pred_check_branch
        %304 = sbr.rel (%p302) target = $region44
      $region43: #{_lambda_.1} parent=31 // pred_region
        %s305 = sadd.s32 %s21, 1
        %s306 = smul.u32 %s305, 16
        %p307 = scmp.lt.s32.totalorder %s306, 15
        %s308 = scalar_select %p307, %s306, 15
        %p309 = scmp.lt.s32.totalorder %s20, 1
        %s310 = scalar_select %p309, %s20, 1
        %p311 = scmp.lt.s32.totalorder %s308, 15
        %s312 = scalar_select %p311, %s308, 15
        %s313 = smul.addr %s312, 2
        %s314 = smul.addr %s310, 32
        %s315 = sadd.s32 %s313, %s314
        %s316 = smul.addr %s315, 8
        %s317 = scalar_lea.vmem %s2, %s316
        %s318 = sadd.s32 %s21, 1
        %s319 = smul.u32 %s318, 16
        %p320 = scmp.lt.s32.totalorder %s319, 15
        %s321 = scalar_select %p320, %s319, 15
      $region44: #{_lambda_.1} parent=31 // pred_fallthru
        _
    $region32: #{_lambda_.1} parent=5 // pred_fallthru
      _
    %p322 = scmp.le.s32.totalorder 1, %s13
    %p323 = scmp.lt.s32.totalorder %s13, 3
    %p324 = pnand %p322, %p323
    %p325 = pneg %p324
    // Predicated region
    $region45: #{_lambda_.1} parent=5 // pred_check
      _
    $region46: #{_lambda_.1} parent=5 // pred_check_branch
      %327 = sbr.rel (%p324) target = $region48
    $region47: #{_lambda_.1} parent=5 // pred_region
      %s328 = ssub.s32 %s13, 1
      %s329 = smul.u32 %s23, 16
      %s330 = ssub.s32 %s329, 1
      %p331 = scmp.gt.s32.totalorder %s330, 0
      %s332 = scalar_select %p331, %s330, 0
      %p333 = scmp.lt.s32.totalorder %s22, 1
      %s334 = scalar_select %p333, %s22, 1
      %p335 = scmp.lt.s32.totalorder %s332, 15
      %s336 = scalar_select %p335, %s332, 15
      %s337 = smul.addr %s336, 2
      %s338 = smul.addr %s334, 32
      %s339 = sadd.s32 %s337, %s338
      %s340 = smul.addr %s339, 8
      %s341 = scalar_lea.vmem %s0, %s340
      %p342 = pneg %p61
      %p343 = pneg %p58
      %s344 = smul.u32 16, %s23
      %p345 = scmp.lt.s32.totalorder %s22, 1
      %s346 = scalar_select %p345, %s22, 1
      %p347 = scmp.lt.s32.totalorder %s344, 15
      %s348 = scalar_select %p347, %s344, 15
      %s349 = smul.addr %s348, 2
      %s350 = smul.addr %s346, 32
      %s351 = sadd.s32 %s349, %s350
      %s352 = smul.addr %s351, 8
      %s353 = scalar_lea.vmem %s1, %s352
      %p354 = pneg %p89
      %p355 = pneg %p86
      %s356 = sadd.s32 %s23, 1
      %s357 = smul.u32 %s356, 16
      %p358 = scmp.lt.s32.totalorder %s357, 15
      %s359 = scalar_select %p358, %s357, 15
      %p360 = scmp.lt.s32.totalorder %s22, 1
      %s361 = scalar_select %p360, %s22, 1
      %p362 = scmp.lt.s32.totalorder %s359, 15
      %s363 = scalar_select %p362, %s359, 15
      %s364 = smul.addr %s363, 2
      %s365 = smul.addr %s361, 32
      %s366 = sadd.s32 %s364, %s365
      %s367 = smul.addr %s366, 8
      %s368 = scalar_lea.vmem %s2, %s367
      %p369 = pneg %p125
      %p370 = pneg %p122
      %p371 = pneg %p146
      %p372 = pneg %p143
      %p373 = pneg %p167
      %p374 = pneg %p164
      %p375 = pneg %p188
      %p376 = pneg %p185
      %p377 = pneg %p209
      %p378 = pneg %p206
      %p379 = pneg %p237
      %p380 = pneg %p234
      %s381 = smul.u32 32, %s23
      %p382 = scmp.lt.s32.totalorder %s22, 1
      %s383 = scalar_select %p382, %s22, 1
      %p384 = scmp.lt.s32.totalorder %s381, 31
      %s385 = scalar_select %p384, %s381, 31
      %s386 = smul.addr %s385, 2
      %s387 = smul.addr %s383, 64
      %s388 = sadd.s32 %s386, %s387
      %s389 = smul.addr %s388, 8
      %s390 = scalar_lea.vmem %s7, %s389
      %s391 = smul.u32 %s23, 16
      %s392 = ssub.s32 %s391, 1
      %p393 = scmp.gt.s32.totalorder %s392, 0
      %s394 = scalar_select %p393, %s392, 0
      %p395 = scmp.lt.s32.totalorder %s22, 1
      %s396 = scalar_select %p395, %s22, 1
      %p397 = scmp.lt.s32.totalorder %s394, 15
      %s398 = scalar_select %p397, %s394, 15
      %s399 = smul.addr %s398, 2
      %s400 = smul.addr %s396, 32
      %s401 = sadd.s32 %s399, %s400
      %s402 = smul.addr %s401, 8
      %s403 = scalar_lea.vmem %s0, %s402
      %s404 = smul.u32 %s23, 16
      %s405 = ssub.s32 %s404, 1
      %p406 = scmp.gt.s32.totalorder %s405, 0
      %s407 = scalar_select %p406, %s405, 0
      %s408 = smul.u32 16, %s23
      %p409 = scmp.lt.s32.totalorder %s22, 1
      %s410 = scalar_select %p409, %s22, 1
      %p411 = scmp.lt.s32.totalorder %s408, 15
      %s412 = scalar_select %p411, %s408, 15
      %s413 = smul.addr %s412, 2
      %s414 = smul.addr %s410, 32
      %s415 = sadd.s32 %s413, %s414
      %s416 = smul.addr %s415, 8
      %s417 = scalar_lea.vmem %s1, %s416
      %s418 = smul.u32 16, %s23
      %s419 = sadd.s32 %s23, 1
      %s420 = smul.u32 %s419, 16
      %p421 = scmp.lt.s32.totalorder %s420, 15
      %s422 = scalar_select %p421, %s420, 15
      %p423 = scmp.lt.s32.totalorder %s22, 1
      %s424 = scalar_select %p423, %s22, 1
      %p425 = scmp.lt.s32.totalorder %s422, 15
      %s426 = scalar_select %p425, %s422, 15
      %s427 = smul.addr %s426, 2
      %s428 = smul.addr %s424, 32
      %s429 = sadd.s32 %s427, %s428
      %s430 = smul.addr %s429, 8
      %s431 = scalar_lea.vmem %s2, %s430
      %s432 = sadd.s32 %s23, 1
      %s433 = smul.u32 %s432, 16
      %p434 = scmp.lt.s32.totalorder %s433, 15
      %s435 = scalar_select %p434, %s433, 15
      %s436 = smul.u32 32, %s23
      %p437 = scmp.lt.s32.totalorder %s22, 1
      %s438 = scalar_select %p437, %s22, 1
      %p439 = scmp.lt.s32.totalorder %s436, 31
      %s440 = scalar_select %p439, %s436, 31
      %s441 = smul.addr %s440, 2
      %s442 = smul.addr %s438, 64
      %s443 = sadd.s32 %s441, %s442
      %s444 = smul.addr %s443, 8
      %s445 = scalar_lea.vmem %s7, %s444
      %s446 = smul.u32 32, %s23
      %v447 = vld [vmem:[%s3] sm:$0x1]
      %v448 = vld [vmem:[%s4] sm:$0x1]
      %vm449 = vcmask 31744
      %450 = vst.msk [vmem:[#allocation2] sm:$0xff] %vm449, 0.0
      %451 = vst.msk [vmem:[#allocation2 + $0x8] sm:$0xff] %vm449, 0.0
      %vm452 = vcmask 25600
      %453 = vst.msk [vmem:[#allocation2 + $0x10] sm:$0x3] %vm452, 0.0
      %454 = vst.msk [vmem:[#allocation2 + $0x18] sm:$0xff] %vm449, 0.0
      %455 = vst.msk [vmem:[#allocation2 + $0x20] sm:$0xff] %vm449, 0.0
      %456 = vst.msk [vmem:[#allocation2 + $0x28] sm:$0x3] %vm452, 0.0
      %457 = vst.msk [vmem:[#allocation2 + $0x30] sm:$0xff] %vm449, 0.0
      %458 = vst.msk [vmem:[#allocation2 + $0x38] sm:$0xff] %vm449, 0.0
      %459 = vst.msk [vmem:[#allocation2 + $0x40] sm:$0x3] %vm452, 0.0
      %460 = vst.msk [vmem:[#allocation2 + $0x48] sm:$0xff] %vm449, 0.0
      %461 = vst.msk [vmem:[#allocation2 + $0x50] sm:$0xff] %vm449, 0.0
      %462 = vst.msk [vmem:[#allocation2 + $0x58] sm:$0x3] %vm452, 0.0
      %463 = vst.msk [vmem:[#allocation2 + $0x60] sm:$0xff] %vm449, 0.0
      %464 = vst.msk [vmem:[#allocation2 + $0x68] sm:$0xff] %vm449, 0.0
      %465 = vst.msk [vmem:[#allocation2 + $0x70] sm:$0x3] %vm452, 0.0
      %466 = vst.msk [vmem:[#allocation2 + $0x78] sm:$0xff] %vm449, 0.0
      %467 = vst.msk [vmem:[#allocation2 + $0x80] sm:$0xff] %vm449, 0.0
      %468 = vst.msk [vmem:[#allocation2 + $0x88] sm:$0x3] %vm452, 0.0
      %469 = vst.msk [vmem:[#allocation2 + $0x90] sm:$0xff] %vm449, 0.0
      %470 = vst.msk [vmem:[#allocation2 + $0x98] sm:$0xff] %vm449, 0.0
      %471 = vst.msk [vmem:[#allocation2 + $0xa0] sm:$0x3] %vm452, 0.0
      %472 = vst.msk [vmem:[#allocation2 + $0xa8] sm:$0xff] %vm449, 0.0
      %473 = vst.msk [vmem:[#allocation2 + $0xb0] sm:$0xff] %vm449, 0.0
      %474 = vst.msk [vmem:[#allocation2 + $0xb8] sm:$0x3] %vm452, 0.0
      %475 = vst.msk [vmem:[#allocation2 + $0xc0] sm:$0xff] %vm449, 0.0
      %476 = vst.msk [vmem:[#allocation2 + $0xc8] sm:$0xff] %vm449, 0.0
      %477 = vst.msk [vmem:[#allocation2 + $0xd0] sm:$0x3] %vm452, 0.0
      %478 = vst.msk [vmem:[#allocation2 + $0xd8] sm:$0xff] %vm449, 0.0
      %479 = vst.msk [vmem:[#allocation2 + $0xe0] sm:$0xff] %vm449, 0.0
      %480 = vst.msk [vmem:[#allocation2 + $0xe8] sm:$0x3] %vm452, 0.0
      %481 = vst.msk [vmem:[#allocation2 + $0xf0] sm:$0xff] %vm449, 0.0
      %482 = vst.msk [vmem:[#allocation2 + $0xf8] sm:$0xff] %vm449, 0.0
      %483 = vst.msk [vmem:[#allocation2 + $0x100] sm:$0x3] %vm452, 0.0
      %484 = vst.msk [vmem:[#allocation2 + $0x108] sm:$0xff] %vm449, 0.0
      %485 = vst.msk [vmem:[#allocation2 + $0x110] sm:$0xff] %vm449, 0.0
      %486 = vst.msk [vmem:[#allocation2 + $0x118] sm:$0x3] %vm452, 0.0
      %487 = vst.msk [vmem:[#allocation2 + $0x120] sm:$0xff] %vm449, 0.0
      %488 = vst.msk [vmem:[#allocation2 + $0x128] sm:$0xff] %vm449, 0.0
      %489 = vst.msk [vmem:[#allocation2 + $0x130] sm:$0x3] %vm452, 0.0
      %490 = vst.msk [vmem:[#allocation2 + $0x138] sm:$0xff] %vm449, 0.0
      %491 = vst.msk [vmem:[#allocation2 + $0x140] sm:$0xff] %vm449, 0.0
      %492 = vst.msk [vmem:[#allocation2 + $0x148] sm:$0x3] %vm452, 0.0
      %493 = vst.msk [vmem:[#allocation2 + $0x150] sm:$0xff] %vm449, 0.0
      %494 = vst.msk [vmem:[#allocation2 + $0x158] sm:$0xff] %vm449, 0.0
      %495 = vst.msk [vmem:[#allocation2 + $0x160] sm:$0x3] %vm452, 0.0
      %496 = vst.msk [vmem:[#allocation2 + $0x168] sm:$0xff] %vm449, 0.0
      %497 = vst.msk [vmem:[#allocation2 + $0x170] sm:$0xff] %vm449, 0.0
      %498 = vst.msk [vmem:[#allocation2 + $0x178] sm:$0x3] %vm452, 0.0
      %499 = vst.msk [vmem:[#allocation2 + $0x180] sm:$0xff] %vm449, 0.0
      %500 = vst.msk [vmem:[#allocation2 + $0x188] sm:$0xff] %vm449, 0.0
      %501 = vst.msk [vmem:[#allocation2 + $0x190] sm:$0x3] %vm452, 0.0
      %502 = vst.msk [vmem:[#allocation2 + $0x198] sm:$0xff] %vm449, 0.0
      %503 = vst.msk [vmem:[#allocation2 + $0x1a0] sm:$0xff] %vm449, 0.0
      %504 = vst.msk [vmem:[#allocation2 + $0x1a8] sm:$0x3] %vm452, 0.0
      %v505 = vld [vmem:[%s417] sm:$0xff]
      %v506 = vld [vmem:[%s417 + $0x8] sm:$0xff]
      %v507 = vld [vmem:[%s417 + $0x10] sm:$0xff]
      %v508 = vld [vmem:[%s417 + $0x18] sm:$0xff]
      %v509 = vld [vmem:[%s417 + $0x20] sm:$0xff]
      %v510 = vld [vmem:[%s417 + $0x28] sm:$0xff]
      %v511 = vld [vmem:[%s417 + $0x30] sm:$0xff]
      %v512 = vld [vmem:[%s417 + $0x38] sm:$0xff]
      %v513 = vld [vmem:[%s417 + $0x40] sm:$0xff]
      %v514 = vld [vmem:[%s417 + $0x48] sm:$0xff]
      %v515 = vld [vmem:[%s417 + $0x50] sm:$0xff]
      %v516 = vld [vmem:[%s417 + $0x58] sm:$0xff]
      %v517 = vld [vmem:[%s417 + $0x60] sm:$0xff]
      %v518 = vld [vmem:[%s417 + $0x68] sm:$0xff]
      %v519 = vld [vmem:[%s417 + $0x70] sm:$0xff]
      %v520 = vld [vmem:[%s417 + $0x78] sm:$0xff]
      %v521 = vld [vmem:[%s417 + $0x80] sm:$0xff]
      %v522 = vld [vmem:[%s417 + $0x88] sm:$0xff]
      %v523 = vld [vmem:[%s417 + $0x90] sm:$0xff]
      %v524 = vld [vmem:[%s417 + $0x98] sm:$0xff]
      %v525 = vld [vmem:[%s417 + $0xa0] sm:$0xff]
      %v526 = vld [vmem:[%s417 + $0xa8] sm:$0xff]
      %v527 = vld [vmem:[%s417 + $0xb0] sm:$0xff]
      %v528 = vld [vmem:[%s417 + $0xb8] sm:$0xff]
      %v529 = vld [vmem:[%s417 + $0xc0] sm:$0xff]
      %v530 = vld [vmem:[%s417 + $0xc8] sm:$0xff]
      %v531 = vld [vmem:[%s417 + $0xd0] sm:$0xff]
      %v532 = vld [vmem:[%s417 + $0xd8] sm:$0xff]
      %v533 = vld [vmem:[%s417 + $0xe0] sm:$0xff]
      %v534 = vld [vmem:[%s417 + $0xe8] sm:$0xff]
      %v535 = vld [vmem:[%s417 + $0xf0] sm:$0xff]
      %v536 = vld [vmem:[%s417 + $0xf8] sm:$0xff]
      %v538 = vlaneseq
      %v539 = vshrl.u32 %v538, 7
      %v540 = vsub.s32 0, %v539
      %v541 = vrot.slane %v447, %v540
      %v543 = vmul.f32 %v505, %v541
      %v544 = vmul.f32 %v506, %v541
      %v545 = vmul.f32 %v507, %v541
      %v546 = vmul.f32 %v508, %v541
      %v547 = vmul.f32 %v509, %v541
      %v548 = vmul.f32 %v510, %v541
      %v549 = vmul.f32 %v511, %v541
      %v550 = vmul.f32 %v512, %v541
      %v551 = vmul.f32 %v513, %v541
      %v552 = vmul.f32 %v514, %v541
      %v553 = vmul.f32 %v515, %v541
      %v554 = vmul.f32 %v516, %v541
      %v555 = vmul.f32 %v517, %v541
      %v556 = vmul.f32 %v518, %v541
      %v557 = vmul.f32 %v519, %v541
      %v558 = vmul.f32 %v520, %v541
      %v559 = vmul.f32 %v521, %v541
      %v560 = vmul.f32 %v522, %v541
      %v561 = vmul.f32 %v523, %v541
      %v562 = vmul.f32 %v524, %v541
      %v563 = vmul.f32 %v525, %v541
      %v564 = vmul.f32 %v526, %v541
      %v565 = vmul.f32 %v527, %v541
      %v566 = vmul.f32 %v528, %v541
      %v567 = vmul.f32 %v529, %v541
      %v568 = vmul.f32 %v530, %v541
      %v569 = vmul.f32 %v531, %v541
      %v570 = vmul.f32 %v532, %v541
      %v571 = vmul.f32 %v533, %v541
      %v572 = vmul.f32 %v534, %v541
      %v573 = vmul.f32 %v535, %v541
      %v574 = vmul.f32 %v536, %v541
      %v576 = vlaneseq
      %v577 = vshrl.u32 %v576, 7
      %v578 = vsub.s32 0, %v577
      %v579 = vrot.slane %v448, %v578
      %v581 = vadd.f32 %v543, %v579
      %v582 = vadd.f32 %v544, %v579
      %v583 = vadd.f32 %v545, %v579
      %v584 = vadd.f32 %v546, %v579
      %v585 = vadd.f32 %v547, %v579
      %v586 = vadd.f32 %v548, %v579
      %v587 = vadd.f32 %v549, %v579
      %v588 = vadd.f32 %v550, %v579
      %v589 = vadd.f32 %v551, %v579
      %v590 = vadd.f32 %v552, %v579
      %v591 = vadd.f32 %v553, %v579
      %v592 = vadd.f32 %v554, %v579
      %v593 = vadd.f32 %v555, %v579
      %v594 = vadd.f32 %v556, %v579
      %v595 = vadd.f32 %v557, %v579
      %v596 = vadd.f32 %v558, %v579
      %v597 = vadd.f32 %v559, %v579
      %v598 = vadd.f32 %v560, %v579
      %v599 = vadd.f32 %v561, %v579
      %v600 = vadd.f32 %v562, %v579
      %v601 = vadd.f32 %v563, %v579
      %v602 = vadd.f32 %v564, %v579
      %v603 = vadd.f32 %v565, %v579
      %v604 = vadd.f32 %v566, %v579
      %v605 = vadd.f32 %v567, %v579
      %v606 = vadd.f32 %v568, %v579
      %v607 = vadd.f32 %v569, %v579
      %v608 = vadd.f32 %v570, %v579
      %v609 = vadd.f32 %v571, %v579
      %v610 = vadd.f32 %v572, %v579
      %v611 = vadd.f32 %v573, %v579
      %v612 = vadd.f32 %v574, %v579
      %vm613 = vcmp.ge.f32.partialorder %v581, 0.0
      %vm614 = vcmp.ge.f32.partialorder %v582, 0.0
      %vm615 = vcmp.ge.f32.partialorder %v583, 0.0
      %vm616 = vcmp.ge.f32.partialorder %v584, 0.0
      %vm617 = vcmp.ge.f32.partialorder %v585, 0.0
      %vm618 = vcmp.ge.f32.partialorder %v586, 0.0
      %vm619 = vcmp.ge.f32.partialorder %v587, 0.0
      %vm620 = vcmp.ge.f32.partialorder %v588, 0.0
      %vm621 = vcmp.ge.f32.partialorder %v589, 0.0
      %vm622 = vcmp.ge.f32.partialorder %v590, 0.0
      %vm623 = vcmp.ge.f32.partialorder %v591, 0.0
      %vm624 = vcmp.ge.f32.partialorder %v592, 0.0
      %vm625 = vcmp.ge.f32.partialorder %v593, 0.0
      %vm626 = vcmp.ge.f32.partialorder %v594, 0.0
      %vm627 = vcmp.ge.f32.partialorder %v595, 0.0
      %vm628 = vcmp.ge.f32.partialorder %v596, 0.0
      %vm629 = vcmp.ge.f32.partialorder %v597, 0.0
      %vm630 = vcmp.ge.f32.partialorder %v598, 0.0
      %vm631 = vcmp.ge.f32.partialorder %v599, 0.0
      %vm632 = vcmp.ge.f32.partialorder %v600, 0.0
      %vm633 = vcmp.ge.f32.partialorder %v601, 0.0
      %vm634 = vcmp.ge.f32.partialorder %v602, 0.0
      %vm635 = vcmp.ge.f32.partialorder %v603, 0.0
      %vm636 = vcmp.ge.f32.partialorder %v604, 0.0
      %vm637 = vcmp.ge.f32.partialorder %v605, 0.0
      %vm638 = vcmp.ge.f32.partialorder %v606, 0.0
      %vm639 = vcmp.ge.f32.partialorder %v607, 0.0
      %vm640 = vcmp.ge.f32.partialorder %v608, 0.0
      %vm641 = vcmp.ge.f32.partialorder %v609, 0.0
      %vm642 = vcmp.ge.f32.partialorder %v610, 0.0
      %vm643 = vcmp.ge.f32.partialorder %v611, 0.0
      %vm644 = vcmp.ge.f32.partialorder %v612, 0.0
      %v645 = vmul.f32 %v581, 0.2
      %v646 = vmul.f32 %v582, 0.2
      %v647 = vmul.f32 %v583, 0.2
      %v648 = vmul.f32 %v584, 0.2
      %v649 = vmul.f32 %v585, 0.2
      %v650 = vmul.f32 %v586, 0.2
      %v651 = vmul.f32 %v587, 0.2
      %v652 = vmul.f32 %v588, 0.2
      %v653 = vmul.f32 %v589, 0.2
      %v654 = vmul.f32 %v590, 0.2
      %v655 = vmul.f32 %v591, 0.2
      %v656 = vmul.f32 %v592, 0.2
      %v657 = vmul.f32 %v593, 0.2
      %v658 = vmul.f32 %v594, 0.2
      %v659 = vmul.f32 %v595, 0.2
      %v660 = vmul.f32 %v596, 0.2
      %v661 = vmul.f32 %v597, 0.2
      %v662 = vmul.f32 %v598, 0.2
      %v663 = vmul.f32 %v599, 0.2
      %v664 = vmul.f32 %v600, 0.2
      %v665 = vmul.f32 %v601, 0.2
      %v666 = vmul.f32 %v602, 0.2
      %v667 = vmul.f32 %v603, 0.2
      %v668 = vmul.f32 %v604, 0.2
      %v669 = vmul.f32 %v605, 0.2
      %v670 = vmul.f32 %v606, 0.2
      %v671 = vmul.f32 %v607, 0.2
      %v672 = vmul.f32 %v608, 0.2
      %v673 = vmul.f32 %v609, 0.2
      %v674 = vmul.f32 %v610, 0.2
      %v675 = vmul.f32 %v611, 0.2
      %v676 = vmul.f32 %v612, 0.2
      %v677 = vsel %vm613, %v581, %v645
      %v678 = vsel %vm614, %v582, %v646
      %v679 = vsel %vm615, %v583, %v647
      %v680 = vsel %vm616, %v584, %v648
      %v681 = vsel %vm617, %v585, %v649
      %v682 = vsel %vm618, %v586, %v650
      %v683 = vsel %vm619, %v587, %v651
      %v684 = vsel %vm620, %v588, %v652
      %v685 = vsel %vm621, %v589, %v653
      %v686 = vsel %vm622, %v590, %v654
      %v687 = vsel %vm623, %v591, %v655
      %v688 = vsel %vm624, %v592, %v656
      %v689 = vsel %vm625, %v593, %v657
      %v690 = vsel %vm626, %v594, %v658
      %v691 = vsel %vm627, %v595, %v659
      %v692 = vsel %vm628, %v596, %v660
      %v693 = vsel %vm629, %v597, %v661
      %v694 = vsel %vm630, %v598, %v662
      %v695 = vsel %vm631, %v599, %v663
      %v696 = vsel %vm632, %v600, %v664
      %v697 = vsel %vm633, %v601, %v665
      %v698 = vsel %vm634, %v602, %v666
      %v699 = vsel %vm635, %v603, %v667
      %v700 = vsel %vm636, %v604, %v668
      %v701 = vsel %vm637, %v605, %v669
      %v702 = vsel %vm638, %v606, %v670
      %v703 = vsel %vm639, %v607, %v671
      %v704 = vsel %vm640, %v608, %v672
      %v705 = vsel %vm641, %v609, %v673
      %v706 = vsel %vm642, %v610, %v674
      %v707 = vsel %vm643, %v611, %v675
      %v708 = vsel %vm644, %v612, %v676
      %s709 = scalar_lea.vmem [#allocation2], 24
      %710 = vst.msk [vmem:[%s709 + $0x1] sm:$0xff] %vm449, %v677
      %711 = vst.msk [vmem:[%s709 + $0x9] sm:$0xff] %vm449, %v678
      %712 = vst.msk [vmem:[%s709 + $0x19] sm:$0xff] %vm449, %v679
      %713 = vst.msk [vmem:[%s709 + $0x21] sm:$0xff] %vm449, %v680
      %714 = vst.msk [vmem:[%s709 + $0x31] sm:$0xff] %vm449, %v681
      %715 = vst.msk [vmem:[%s709 + $0x39] sm:$0xff] %vm449, %v682
      %716 = vst.msk [vmem:[%s709 + $0x49] sm:$0xff] %vm449, %v683
      %717 = vst.msk [vmem:[%s709 + $0x51] sm:$0xff] %vm449, %v684
      %718 = vst.msk [vmem:[%s709 + $0x61] sm:$0xff] %vm449, %v685
      %719 = vst.msk [vmem:[%s709 + $0x69] sm:$0xff] %vm449, %v686
      %720 = vst.msk [vmem:[%s709 + $0x79] sm:$0xff] %vm449, %v687
      %721 = vst.msk [vmem:[%s709 + $0x81] sm:$0xff] %vm449, %v688
      %722 = vst.msk [vmem:[%s709 + $0x91] sm:$0xff] %vm449, %v689
      %723 = vst.msk [vmem:[%s709 + $0x99] sm:$0xff] %vm449, %v690
      %724 = vst.msk [vmem:[%s709 + $0xa9] sm:$0xff] %vm449, %v691
      %725 = vst.msk [vmem:[%s709 + $0xb1] sm:$0xff] %vm449, %v692
      %726 = vst.msk [vmem:[%s709 + $0xc1] sm:$0xff] %vm449, %v693
      %727 = vst.msk [vmem:[%s709 + $0xc9] sm:$0xff] %vm449, %v694
      %728 = vst.msk [vmem:[%s709 + $0xd9] sm:$0xff] %vm449, %v695
      %729 = vst.msk [vmem:[%s709 + $0xe1] sm:$0xff] %vm449, %v696
      %730 = vst.msk [vmem:[%s709 + $0xf1] sm:$0xff] %vm449, %v697
      %731 = vst.msk [vmem:[%s709 + $0xf9] sm:$0xff] %vm449, %v698
      %732 = vst.msk [vmem:[%s709 + $0x109] sm:$0xff] %vm449, %v699
      %733 = vst.msk [vmem:[%s709 + $0x111] sm:$0xff] %vm449, %v700
      %734 = vst.msk [vmem:[%s709 + $0x121] sm:$0xff] %vm449, %v701
      %735 = vst.msk [vmem:[%s709 + $0x129] sm:$0xff] %vm449, %v702
      %736 = vst.msk [vmem:[%s709 + $0x139] sm:$0xff] %vm449, %v703
      %737 = vst.msk [vmem:[%s709 + $0x141] sm:$0xff] %vm449, %v704
      %738 = vst.msk [vmem:[%s709 + $0x151] sm:$0xff] %vm449, %v705
      %739 = vst.msk [vmem:[%s709 + $0x159] sm:$0xff] %vm449, %v706
      %740 = vst.msk [vmem:[%s709 + $0x169] sm:$0xff] %vm449, %v707
      %741 = vst.msk [vmem:[%s709 + $0x171] sm:$0xff] %vm449, %v708
      %p742 = scmp.gt.s32.totalorder %s23, 0
      // Predicated region
      $region49: #{_lambda_.1} parent=47 // pred_check
        %p743 = pneg %p742
      $region50: #{_lambda_.1} parent=47 // pred_check_branch
        %745 = sbr.rel (%p743) target = $region52
      $region51: #{_lambda_.1} parent=47 // pred_region
        %v746 = vld [vmem:[%s403] sm:$0xff]
        %v747 = vld [vmem:[%s403 + $0x8] sm:$0xff]
        %v748 = vmul.f32 %v746, %v541
        %v749 = vmul.f32 %v747, %v541
        %v750 = vadd.f32 %v748, %v579
        %v751 = vadd.f32 %v749, %v579
        %vm752 = vcmp.ge.f32.partialorder %v750, 0.0
        %vm753 = vcmp.ge.f32.partialorder %v751, 0.0
        %v754 = vmul.f32 %v750, 0.2
        %v755 = vmul.f32 %v751, 0.2
        %v756 = vsel %vm752, %v750, %v754
        %v757 = vsel %vm753, %v751, %v755
        %758 = vst.msk [vmem:[#allocation2 + $0x1] sm:$0xff] %vm449, %v756
        %759 = vst.msk [vmem:[#allocation2 + $0x9] sm:$0xff] %vm449, %v757
      $region52: #{_lambda_.1} parent=47 // pred_fallthru
        _
      %p760 = scmp.lt.s32.totalorder %s23, 0
      // Predicated region
      $region53: #{_lambda_.1} parent=47 // pred_check
        %p761 = pneg %p760
      $region54: #{_lambda_.1} parent=47 // pred_check_branch
        %763 = sbr.rel (%p761) target = $region56
      $region55: #{_lambda_.1} parent=47 // pred_region
        %v764 = vld [vmem:[%s431] sm:$0xff]
        %v765 = vld [vmem:[%s431 + $0x8] sm:$0xff]
        %v766 = vmul.f32 %v764, %v541
        %v767 = vmul.f32 %v765, %v541
        %v768 = vadd.f32 %v766, %v579
        %v769 = vadd.f32 %v767, %v579
        %vm770 = vcmp.ge.f32.partialorder %v768, 0.0
        %vm771 = vcmp.ge.f32.partialorder %v769, 0.0
        %v772 = vmul.f32 %v768, 0.2
        %v773 = vmul.f32 %v769, 0.2
        %v774 = vsel %vm770, %v768, %v772
        %v775 = vsel %vm771, %v769, %v773
        %s776 = scalar_lea.vmem [#allocation2], 408
        %777 = vst.msk [vmem:[%s776 + $0x1] sm:$0xff] %vm449, %v774
        %778 = vst.msk [vmem:[%s776 + $0x9] sm:$0xff] %vm449, %v775
      $region56: #{_lambda_.1} parent=47 // pred_fallthru
        _
      %v779 = vld [vmem:[#allocation2] sm:$0xff]
      %v780 = vld [vmem:[#allocation2 + $0x8] sm:$0xff]
      %v781 = vld [vmem:[#allocation2 + $0x18] sm:$0xff]
      %v782 = vld [vmem:[#allocation2 + $0x20] sm:$0xff]
      %v783 = vld [vmem:[#allocation2 + $0x30] sm:$0xff]
      %v784 = vld [vmem:[#allocation2 + $0x38] sm:$0xff]
      %v785 = vld [vmem:[#allocation2 + $0x48] sm:$0xff]
      %v786 = vld [vmem:[#allocation2 + $0x50] sm:$0xff]
      %v787 = vld [vmem:[#allocation2 + $0x60] sm:$0xff]
      %v788 = vld [vmem:[#allocation2 + $0x68] sm:$0xff]
      %v789 = vld [vmem:[#allocation2 + $0x78] sm:$0xff]
      %v790 = vld [vmem:[#allocation2 + $0x80] sm:$0xff]
      %v791 = vld [vmem:[#allocation2 + $0x90] sm:$0xff]
      %v792 = vld [vmem:[#allocation2 + $0x98] sm:$0xff]
      %v793 = vld [vmem:[#allocation2 + $0xa8] sm:$0xff]
      %v794 = vld [vmem:[#allocation2 + $0xb0] sm:$0xff]
      %v795 = vld [vmem:[#allocation2 + $0xc0] sm:$0xff]
      %v796 = vld [vmem:[#allocation2 + $0xc8] sm:$0xff]
      %v797 = vld [vmem:[#allocation2 + $0xd8] sm:$0xff]
      %v798 = vld [vmem:[#allocation2 + $0xe0] sm:$0xff]
      %v799 = vld [vmem:[#allocation2 + $0xf0] sm:$0xff]
      %v800 = vld [vmem:[#allocation2 + $0xf8] sm:$0xff]
      %v801 = vld [vmem:[#allocation2 + $0x108] sm:$0xff]
      %v802 = vld [vmem:[#allocation2 + $0x110] sm:$0xff]
      %v803 = vld [vmem:[#allocation2 + $0x120] sm:$0xff]
      %v804 = vld [vmem:[#allocation2 + $0x128] sm:$0xff]
      %v805 = vld [vmem:[#allocation2 + $0x138] sm:$0xff]
      %v806 = vld [vmem:[#allocation2 + $0x140] sm:$0xff]
      %v807 = vld [vmem:[#allocation2 + $0x150] sm:$0xff]
      %v808 = vld [vmem:[#allocation2 + $0x158] sm:$0xff]
      %v809 = vld [vmem:[#allocation2 + $0x168] sm:$0xff]
      %v810 = vld [vmem:[#allocation2 + $0x170] sm:$0xff]
      %v811 = vld [vmem:[%s5] sm:$0xf]
      %v812 = vld [vmem:[#allocation2 + $0x1] sm:$0xff]
      %v813 = vld [vmem:[#allocation2 + $0x9] sm:$0xff]
      %v814 = vld [vmem:[#allocation2 + $0x19] sm:$0xff]
      %v815 = vld [vmem:[#allocation2 + $0x21] sm:$0xff]
      %v816 = vld [vmem:[#allocation2 + $0x31] sm:$0xff]
      %v817 = vld [vmem:[#allocation2 + $0x39] sm:$0xff]
      %v818 = vld [vmem:[#allocation2 + $0x49] sm:$0xff]
      %v819 = vld [vmem:[#allocation2 + $0x51] sm:$0xff]
      %v820 = vld [vmem:[#allocation2 + $0x61] sm:$0xff]
      %v821 = vld [vmem:[#allocation2 + $0x69] sm:$0xff]
      %v822 = vld [vmem:[#allocation2 + $0x79] sm:$0xff]
      %v823 = vld [vmem:[#allocation2 + $0x81] sm:$0xff]
      %v824 = vld [vmem:[#allocation2 + $0x91] sm:$0xff]
      %v825 = vld [vmem:[#allocation2 + $0x99] sm:$0xff]
      %v826 = vld [vmem:[#allocation2 + $0xa9] sm:$0xff]
      %v827 = vld [vmem:[#allocation2 + $0xb1] sm:$0xff]
      %v828 = vld [vmem:[#allocation2 + $0xc1] sm:$0xff]
      %v829 = vld [vmem:[#allocation2 + $0xc9] sm:$0xff]
      %v830 = vld [vmem:[#allocation2 + $0xd9] sm:$0xff]
      %v831 = vld [vmem:[#allocation2 + $0xe1] sm:$0xff]
      %v832 = vld [vmem:[#allocation2 + $0xf1] sm:$0xff]
      %v833 = vld [vmem:[#allocation2 + $0xf9] sm:$0xff]
      %v834 = vld [vmem:[#allocation2 + $0x109] sm:$0xff]
      %v835 = vld [vmem:[#allocation2 + $0x111] sm:$0xff]
      %v836 = vld [vmem:[#allocation2 + $0x121] sm:$0xff]
      %v837 = vld [vmem:[#allocation2 + $0x129] sm:$0xff]
      %v838 = vld [vmem:[#allocation2 + $0x139] sm:$0xff]
      %v839 = vld [vmem:[#allocation2 + $0x141] sm:$0xff]
      %v840 = vld [vmem:[#allocation2 + $0x151] sm:$0xff]
      %v841 = vld [vmem:[#allocation2 + $0x159] sm:$0xff]
      %v842 = vld [vmem:[#allocation2 + $0x169] sm:$0xff]
      %v843 = vld [vmem:[#allocation2 + $0x171] sm:$0xff]
      %s844 = scalar_lea.vmem %s5, 4
      %v845 = vld [vmem:[%s844] sm:$0xf]
      %v847 = vsel %vm449, %v812, 0
      %v850 = vsel %vm449, %v813, 0
      %v853 = vsel %vm449, %v814, 0
      %v856 = vsel %vm449, %v815, 0
      %v859 = vsel %vm449, %v816, 0
      %v862 = vsel %vm449, %v817, 0
      %v865 = vsel %vm449, %v818, 0
      %v868 = vsel %vm449, %v819, 0
      %v871 = vsel %vm449, %v820, 0
      %v874 = vsel %vm449, %v821, 0
      %v877 = vsel %vm449, %v822, 0
      %v880 = vsel %vm449, %v823, 0
      %v883 = vsel %vm449, %v824, 0
      %v886 = vsel %vm449, %v825, 0
      %v889 = vsel %vm449, %v826, 0
      %v892 = vsel %vm449, %v827, 0
      %v895 = vsel %vm449, %v828, 0
      %v898 = vsel %vm449, %v829, 0
      %v901 = vsel %vm449, %v830, 0
      %v904 = vsel %vm449, %v831, 0
      %v907 = vsel %vm449, %v832, 0
      %v910 = vsel %vm449, %v833, 0
      %v913 = vsel %vm449, %v834, 0
      %v916 = vsel %vm449, %v835, 0
      %v919 = vsel %vm449, %v836, 0
      %v922 = vsel %vm449, %v837, 0
      %v925 = vsel %vm449, %v838, 0
      %v928 = vsel %vm449, %v839, 0
      %v931 = vsel %vm449, %v840, 0
      %v934 = vsel %vm449, %v841, 0
      %v937 = vsel %vm449, %v842, 0
      %v940 = vsel %vm449, %v843, 0
      %vm942 = vcmask 1043456
      %v944 = vsel %vm942, %v845, 0
      %946 = vmatprep.subr.mxu0 0.0
      %947 = vmatpush1.msra.mxu0 0.0
      %948 = vmatprep.subr.mxu0 0.0
      %949 = vmatpush1.msra.mxu0 0.0
      %950 = vmatprep.subr.mxu0 0.0
      %951 = vmatpush1.msra.mxu0 0.0
      %952 = vmatprep.subr.mxu0 0.0
      %953 = vmatpush1.msra.mxu0 0.0
      %954 = vmatprep.subr.mxu0 0.0
      %955 = vmatpush1.msra.mxu0 0.0
      %956 = vmatprep.subr.mxu0 0.0
      %957 = vmatpush1.msra.mxu0 0.0
      %958 = vmatprep.subr.mxu0 0.0
      %959 = vmatpush1.msra.mxu0 0.0
      %960 = vmatprep.subr.mxu0 0.0
      %961 = vmatpush1.msra.mxu0 0.0
      %962 = vmatprep.subr.mxu0 0.0
      %963 = vmatpush1.msra.mxu0 0.0
      %964 = vmatprep.subr.mxu0 0.0
      %965 = vmatpush1.msra.mxu0 0.0
      %966 = vmatprep.subr.mxu0 0.0
      %967 = vmatpush1.msra.mxu0 0.0
      %968 = vmatprep.subr.mxu0 0.0
      %969 = vmatpush1.msra.mxu0 0.0
      %970 = vmatprep.subr.mxu0 0.0
      %971 = vmatpush1.msra.mxu0 0.0
      %972 = vmatprep.subr.mxu0 0.0
      %973 = vmatpush1.msra.mxu0 0.0
      %974 = vmatprep.subr.mxu0 0.0
      %975 = vmatpush1.msra.mxu0 0.0
      %976 = vmatprep.subr.mxu0 0.0
      %977 = vmatpush1.msra.mxu0 %v944
      %978 = vmatprep.subr.mxu0 0.0
      %979 = vmatpush2.msra.mxu0 0.0
      %980 = vmatprep.subr.mxu0 0.0
      %981 = vmatpush2.msra.mxu0 0.0
      %982 = vmatprep.subr.mxu0 0.0
      %983 = vmatpush2.msra.mxu0 0.0
      %984 = vmatprep.subr.mxu0 0.0
      %985 = vmatpush2.msra.mxu0 0.0
      %986 = vmatprep.subr.mxu0 0.0
      %987 = vmatpush2.msra.mxu0 0.0
      %988 = vmatprep.subr.mxu0 0.0
      %989 = vmatpush2.msra.mxu0 0.0
      %990 = vmatprep.subr.mxu0 0.0
      %991 = vmatpush2.msra.mxu0 0.0
      %992 = vmatprep.subr.mxu0 0.0
      %993 = vmatpush2.msra.mxu0 0.0
      %994 = vmatprep.subr.mxu0 0.0
      %995 = vmatpush2.msra.mxu0 0.0
      %996 = vmatprep.subr.mxu0 0.0
      %997 = vmatpush2.msra.mxu0 0.0
      %998 = vmatprep.subr.mxu0 0.0
      %999 = vmatpush2.msra.mxu0 0.0
      %1000 = vmatprep.subr.mxu0 0.0
      %1001 = vmatpush2.msra.mxu0 0.0
      %1002 = vmatprep.subr.mxu0 0.0
      %1003 = vmatpush2.msra.mxu0 0.0
      %1004 = vmatprep.subr.mxu0 0.0
      %1005 = vmatpush2.msra.mxu0 0.0
      %1006 = vmatprep.subr.mxu0 0.0
      %1007 = vmatpush2.msra.mxu0 0.0
      %1008 = vmatprep.subr.mxu0 0.0
      %1009 = vmatpush2.msra.mxu0 0.0
      %1010 = vmatprep.mubr.f32.mxu0 0.0
      %1011 = vmatmul.mubr.f32.gmra.mxu0 %v847
      %v1012 = vpop.f32.mrf.mxu0
      %v1013 = vadd.f32 0.0, %v1012
      %v1014 = vpop.f32.mrf.mxu0
      %1015 = vmatprep.mubr.f32.mxu0 0.0
      %1016 = vmatmul.mubr.f32.gmra.mxu0 %v850
      %v1017 = vpop.f32.mrf.mxu0
      %v1018 = vadd.f32 0.0, %v1017
      %v1019 = vpop.f32.mrf.mxu0
      %1020 = vmatprep.mubr.f32.mxu0 0.0
      %1021 = vmatmul.mubr.f32.gmra.mxu0 %v853
      %v1022 = vpop.f32.mrf.mxu0
      %v1023 = vadd.f32 0.0, %v1022
      %v1024 = vpop.f32.mrf.mxu0
      %1025 = vmatprep.mubr.f32.mxu0 0.0
      %1026 = vmatmul.mubr.f32.gmra.mxu0 %v856
      %v1027 = vpop.f32.mrf.mxu0
      %v1028 = vadd.f32 0.0, %v1027
      %v1029 = vpop.f32.mrf.mxu0
      %1030 = vmatprep.mubr.f32.mxu0 0.0
      %1031 = vmatmul.mubr.f32.gmra.mxu0 %v859
      %v1032 = vpop.f32.mrf.mxu0
      %v1033 = vadd.f32 0.0, %v1032
      %v1034 = vpop.f32.mrf.mxu0
      %1035 = vmatprep.mubr.f32.mxu0 0.0
      %1036 = vmatmul.mubr.f32.gmra.mxu0 %v862
      %v1037 = vpop.f32.mrf.mxu0
      %v1038 = vadd.f32 0.0, %v1037
      %v1039 = vpop.f32.mrf.mxu0
      %1040 = vmatprep.mubr.f32.mxu0 0.0
      %1041 = vmatmul.mubr.f32.gmra.mxu0 %v865
      %v1042 = vpop.f32.mrf.mxu0
      %v1043 = vadd.f32 0.0, %v1042
      %v1044 = vpop.f32.mrf.mxu0
      %1045 = vmatprep.mubr.f32.mxu0 0.0
      %1046 = vmatmul.mubr.f32.gmra.mxu0 %v868
      %v1047 = vpop.f32.mrf.mxu0
      %v1048 = vadd.f32 0.0, %v1047
      %v1049 = vpop.f32.mrf.mxu0
      %1050 = vmatprep.mubr.f32.mxu0 0.0
      %1051 = vmatmul.mubr.f32.gmra.mxu0 %v871
      %v1052 = vpop.f32.mrf.mxu0
      %v1053 = vadd.f32 0.0, %v1052
      %v1054 = vpop.f32.mrf.mxu0
      %1055 = vmatprep.mubr.f32.mxu0 0.0
      %1056 = vmatmul.mubr.f32.gmra.mxu0 %v874
      %v1057 = vpop.f32.mrf.mxu0
      %v1058 = vadd.f32 0.0, %v1057
      %v1059 = vpop.f32.mrf.mxu0
      %1060 = vmatprep.mubr.f32.mxu0 0.0
      %1061 = vmatmul.mubr.f32.gmra.mxu0 %v877
      %v1062 = vpop.f32.mrf.mxu0
      %v1063 = vadd.f32 0.0, %v1062
      %v1064 = vpop.f32.mrf.mxu0
      %1065 = vmatprep.mubr.f32.mxu0 0.0
      %1066 = vmatmul.mubr.f32.gmra.mxu0 %v880
      %v1067 = vpop.f32.mrf.mxu0
      %v1068 = vadd.f32 0.0, %v1067
      %v1069 = vpop.f32.mrf.mxu0
      %1070 = vmatprep.mubr.f32.mxu0 0.0
      %1071 = vmatmul.mubr.f32.gmra.mxu0 %v883
      %v1072 = vpop.f32.mrf.mxu0
      %v1073 = vadd.f32 0.0, %v1072
      %v1074 = vpop.f32.mrf.mxu0
      %1075 = vmatprep.mubr.f32.mxu0 0.0
      %1076 = vmatmul.mubr.f32.gmra.mxu0 %v886
      %v1077 = vpop.f32.mrf.mxu0
      %v1078 = vadd.f32 0.0, %v1077
      %v1079 = vpop.f32.mrf.mxu0
      %1080 = vmatprep.mubr.f32.mxu0 0.0
      %1081 = vmatmul.mubr.f32.gmra.mxu0 %v889
      %v1082 = vpop.f32.mrf.mxu0
      %v1083 = vadd.f32 0.0, %v1082
      %v1084 = vpop.f32.mrf.mxu0
      %1085 = vmatprep.mubr.f32.mxu0 0.0
      %1086 = vmatmul.mubr.f32.gmra.mxu0 %v892
      %v1087 = vpop.f32.mrf.mxu0
      %v1088 = vadd.f32 0.0, %v1087
      %v1089 = vpop.f32.mrf.mxu0
      %1090 = vmatprep.mubr.f32.mxu0 0.0
      %1091 = vmatmul.mubr.f32.gmra.mxu0 %v895
      %v1092 = vpop.f32.mrf.mxu0
      %v1093 = vadd.f32 0.0, %v1092
      %v1094 = vpop.f32.mrf.mxu0
      %1095 = vmatprep.mubr.f32.mxu0 0.0
      %1096 = vmatmul.mubr.f32.gmra.mxu0 %v898
      %v1097 = vpop.f32.mrf.mxu0
      %v1098 = vadd.f32 0.0, %v1097
      %v1099 = vpop.f32.mrf.mxu0
      %1100 = vmatprep.mubr.f32.mxu0 0.0
      %1101 = vmatmul.mubr.f32.gmra.mxu0 %v901
      %v1102 = vpop.f32.mrf.mxu0
      %v1103 = vadd.f32 0.0, %v1102
      %v1104 = vpop.f32.mrf.mxu0
      %1105 = vmatprep.mubr.f32.mxu0 0.0
      %1106 = vmatmul.mubr.f32.gmra.mxu0 %v904
      %v1107 = vpop.f32.mrf.mxu0
      %v1108 = vadd.f32 0.0, %v1107
      %v1109 = vpop.f32.mrf.mxu0
      %1110 = vmatprep.mubr.f32.mxu0 0.0
      %1111 = vmatmul.mubr.f32.gmra.mxu0 %v907
      %v1112 = vpop.f32.mrf.mxu0
      %v1113 = vadd.f32 0.0, %v1112
      %v1114 = vpop.f32.mrf.mxu0
      %1115 = vmatprep.mubr.f32.mxu0 0.0
      %1116 = vmatmul.mubr.f32.gmra.mxu0 %v910
      %v1117 = vpop.f32.mrf.mxu0
      %v1118 = vadd.f32 0.0, %v1117
      %v1119 = vpop.f32.mrf.mxu0
      %1120 = vmatprep.mubr.f32.mxu0 0.0
      %1121 = vmatmul.mubr.f32.gmra.mxu0 %v913
      %v1122 = vpop.f32.mrf.mxu0
      %v1123 = vadd.f32 0.0, %v1122
      %v1124 = vpop.f32.mrf.mxu0
      %1125 = vmatprep.mubr.f32.mxu0 0.0
      %1126 = vmatmul.mubr.f32.gmra.mxu0 %v916
      %v1127 = vpop.f32.mrf.mxu0
      %v1128 = vadd.f32 0.0, %v1127
      %v1129 = vpop.f32.mrf.mxu0
      %1130 = vmatprep.mubr.f32.mxu0 0.0
      %1131 = vmatmul.mubr.f32.gmra.mxu0 %v919
      %v1132 = vpop.f32.mrf.mxu0
      %v1133 = vadd.f32 0.0, %v1132
      %v1134 = vpop.f32.mrf.mxu0
      %1135 = vmatprep.mubr.f32.mxu0 0.0
      %1136 = vmatmul.mubr.f32.gmra.mxu0 %v922
      %v1137 = vpop.f32.mrf.mxu0
      %v1138 = vadd.f32 0.0, %v1137
      %v1139 = vpop.f32.mrf.mxu0
      %1140 = vmatprep.mubr.f32.mxu0 0.0
      %1141 = vmatmul.mubr.f32.gmra.mxu0 %v925
      %v1142 = vpop.f32.mrf.mxu0
      %v1143 = vadd.f32 0.0, %v1142
      %v1144 = vpop.f32.mrf.mxu0
      %1145 = vmatprep.mubr.f32.mxu0 0.0
      %1146 = vmatmul.mubr.f32.gmra.mxu0 %v928
      %v1147 = vpop.f32.mrf.mxu0
      %v1148 = vadd.f32 0.0, %v1147
      %v1149 = vpop.f32.mrf.mxu0
      %1150 = vmatprep.mubr.f32.mxu0 0.0
      %1151 = vmatmul.mubr.f32.gmra.mxu0 %v931
      %v1152 = vpop.f32.mrf.mxu0
      %v1153 = vadd.f32 0.0, %v1152
      %v1154 = vpop.f32.mrf.mxu0
      %1155 = vmatprep.mubr.f32.mxu0 0.0
      %1156 = vmatmul.mubr.f32.gmra.mxu0 %v934
      %v1157 = vpop.f32.mrf.mxu0
      %v1158 = vadd.f32 0.0, %v1157
      %v1159 = vpop.f32.mrf.mxu0
      %1160 = vmatprep.mubr.f32.mxu0 0.0
      %1161 = vmatmul.mubr.f32.gmra.mxu0 %v937
      %v1162 = vpop.f32.mrf.mxu0
      %v1163 = vadd.f32 0.0, %v1162
      %v1164 = vpop.f32.mrf.mxu0
      %1165 = vmatprep.mubr.f32.mxu0 0.0
      %1166 = vmatmul.mubr.f32.gmra.mxu0 %v940
      %v1167 = vpop.f32.mrf.mxu0
      %v1168 = vadd.f32 0.0, %v1167
      %v1169 = vpop.f32.mrf.mxu0
      %1170 = vdwg.mxu0
      %v1172 = vsel %vm449, %v779, 0
      %v1175 = vsel %vm449, %v780, 0
      %v1178 = vsel %vm449, %v781, 0
      %v1181 = vsel %vm449, %v782, 0
      %v1184 = vsel %vm449, %v783, 0
      %v1187 = vsel %vm449, %v784, 0
      %v1190 = vsel %vm449, %v785, 0
      %v1193 = vsel %vm449, %v786, 0
      %v1196 = vsel %vm449, %v787, 0
      %v1199 = vsel %vm449, %v788, 0
      %v1202 = vsel %vm449, %v789, 0
      %v1205 = vsel %vm449, %v790, 0
      %v1208 = vsel %vm449, %v791, 0
      %v1211 = vsel %vm449, %v792, 0
      %v1214 = vsel %vm449, %v793, 0
      %v1217 = vsel %vm449, %v794, 0
      %v1220 = vsel %vm449, %v795, 0
      %v1223 = vsel %vm449, %v796, 0
      %v1226 = vsel %vm449, %v797, 0
      %v1229 = vsel %vm449, %v798, 0
      %v1232 = vsel %vm449, %v799, 0
      %v1235 = vsel %vm449, %v800, 0
      %v1238 = vsel %vm449, %v801, 0
      %v1241 = vsel %vm449, %v802, 0
      %v1244 = vsel %vm449, %v803, 0
      %v1247 = vsel %vm449, %v804, 0
      %v1250 = vsel %vm449, %v805, 0
      %v1253 = vsel %vm449, %v806, 0
      %v1256 = vsel %vm449, %v807, 0
      %v1259 = vsel %vm449, %v808, 0
      %v1262 = vsel %vm449, %v809, 0
      %v1265 = vsel %vm449, %v810, 0
      %v1268 = vsel %vm942, %v811, 0
      %1270 = vmatprep.subr.mxu0 0.0
      %1271 = vmatpush1.msra.mxu0 0.0
      %1272 = vmatprep.subr.mxu0 0.0
      %1273 = vmatpush1.msra.mxu0 0.0
      %1274 = vmatprep.subr.mxu0 0.0
      %1275 = vmatpush1.msra.mxu0 0.0
      %1276 = vmatprep.subr.mxu0 0.0
      %1277 = vmatpush1.msra.mxu0 0.0
      %1278 = vmatprep.subr.mxu0 0.0
      %1279 = vmatpush1.msra.mxu0 0.0
      %1280 = vmatprep.subr.mxu0 0.0
      %1281 = vmatpush1.msra.mxu0 0.0
      %1282 = vmatprep.subr.mxu0 0.0
      %1283 = vmatpush1.msra.mxu0 0.0
      %1284 = vmatprep.subr.mxu0 0.0
      %1285 = vmatpush1.msra.mxu0 0.0
      %1286 = vmatprep.subr.mxu0 0.0
      %1287 = vmatpush1.msra.mxu0 0.0
      %1288 = vmatprep.subr.mxu0 0.0
      %1289 = vmatpush1.msra.mxu0 0.0
      %1290 = vmatprep.subr.mxu0 0.0
      %1291 = vmatpush1.msra.mxu0 0.0
      %1292 = vmatprep.subr.mxu0 0.0
      %1293 = vmatpush1.msra.mxu0 0.0
      %1294 = vmatprep.subr.mxu0 0.0
      %1295 = vmatpush1.msra.mxu0 0.0
      %1296 = vmatprep.subr.mxu0 0.0
      %1297 = vmatpush1.msra.mxu0 0.0
      %1298 = vmatprep.subr.mxu0 0.0
      %1299 = vmatpush1.msra.mxu0 0.0
      %1300 = vmatprep.subr.mxu0 0.0
      %1301 = vmatpush1.msra.mxu0 %v1268
      %1302 = vmatprep.subr.mxu0 0.0
      %1303 = vmatpush2.msra.mxu0 0.0
      %1304 = vmatprep.subr.mxu0 0.0
      %1305 = vmatpush2.msra.mxu0 0.0
      %1306 = vmatprep.subr.mxu0 0.0
      %1307 = vmatpush2.msra.mxu0 0.0
      %1308 = vmatprep.subr.mxu0 0.0
      %1309 = vmatpush2.msra.mxu0 0.0
      %1310 = vmatprep.subr.mxu0 0.0
      %1311 = vmatpush2.msra.mxu0 0.0
      %1312 = vmatprep.subr.mxu0 0.0
      %1313 = vmatpush2.msra.mxu0 0.0
      %1314 = vmatprep.subr.mxu0 0.0
      %1315 = vmatpush2.msra.mxu0 0.0
      %1316 = vmatprep.subr.mxu0 0.0
      %1317 = vmatpush2.msra.mxu0 0.0
      %1318 = vmatprep.subr.mxu0 0.0
      %1319 = vmatpush2.msra.mxu0 0.0
      %1320 = vmatprep.subr.mxu0 0.0
      %1321 = vmatpush2.msra.mxu0 0.0
      %1322 = vmatprep.subr.mxu0 0.0
      %1323 = vmatpush2.msra.mxu0 0.0
      %1324 = vmatprep.subr.mxu0 0.0
      %1325 = vmatpush2.msra.mxu0 0.0
      %1326 = vmatprep.subr.mxu0 0.0
      %1327 = vmatpush2.msra.mxu0 0.0
      %1328 = vmatprep.subr.mxu0 0.0
      %1329 = vmatpush2.msra.mxu0 0.0
      %1330 = vmatprep.subr.mxu0 0.0
      %1331 = vmatpush2.msra.mxu0 0.0
      %1332 = vmatprep.subr.mxu0 0.0
      %1333 = vmatpush2.msra.mxu0 0.0
      %1334 = vmatprep.mubr.f32.mxu0 0.0
      %1335 = vmatmul.mubr.f32.gmra.mxu0 %v1172
      %v1336 = vpop.f32.mrf.mxu0
      %v1337 = vadd.f32 %v1013, %v1336
      %v1338 = vpop.f32.mrf.mxu0
      %1339 = vmatprep.mubr.f32.mxu0 0.0
      %1340 = vmatmul.mubr.f32.gmra.mxu0 %v1175
      %v1341 = vpop.f32.mrf.mxu0
      %v1342 = vadd.f32 %v1018, %v1341
      %v1343 = vpop.f32.mrf.mxu0
      %1344 = vmatprep.mubr.f32.mxu0 0.0
      %1345 = vmatmul.mubr.f32.gmra.mxu0 %v1178
      %v1346 = vpop.f32.mrf.mxu0
      %v1347 = vadd.f32 %v1023, %v1346
      %v1348 = vpop.f32.mrf.mxu0
      %1349 = vmatprep.mubr.f32.mxu0 0.0
      %1350 = vmatmul.mubr.f32.gmra.mxu0 %v1181
      %v1351 = vpop.f32.mrf.mxu0
      %v1352 = vadd.f32 %v1028, %v1351
      %v1353 = vpop.f32.mrf.mxu0
      %1354 = vmatprep.mubr.f32.mxu0 0.0
      %1355 = vmatmul.mubr.f32.gmra.mxu0 %v1184
      %v1356 = vpop.f32.mrf.mxu0
      %v1357 = vadd.f32 %v1033, %v1356
      %v1358 = vpop.f32.mrf.mxu0
      %1359 = vmatprep.mubr.f32.mxu0 0.0
      %1360 = vmatmul.mubr.f32.gmra.mxu0 %v1187
      %v1361 = vpop.f32.mrf.mxu0
      %v1362 = vadd.f32 %v1038, %v1361
      %v1363 = vpop.f32.mrf.mxu0
      %1364 = vmatprep.mubr.f32.mxu0 0.0
      %1365 = vmatmul.mubr.f32.gmra.mxu0 %v1190
      %v1366 = vpop.f32.mrf.mxu0
      %v1367 = vadd.f32 %v1043, %v1366
      %v1368 = vpop.f32.mrf.mxu0
      %1369 = vmatprep.mubr.f32.mxu0 0.0
      %1370 = vmatmul.mubr.f32.gmra.mxu0 %v1193
      %v1371 = vpop.f32.mrf.mxu0
      %v1372 = vadd.f32 %v1048, %v1371
      %v1373 = vpop.f32.mrf.mxu0
      %1374 = vmatprep.mubr.f32.mxu0 0.0
      %1375 = vmatmul.mubr.f32.gmra.mxu0 %v1196
      %v1376 = vpop.f32.mrf.mxu0
      %v1377 = vadd.f32 %v1053, %v1376
      %v1378 = vpop.f32.mrf.mxu0
      %1379 = vmatprep.mubr.f32.mxu0 0.0
      %1380 = vmatmul.mubr.f32.gmra.mxu0 %v1199
      %v1381 = vpop.f32.mrf.mxu0
      %v1382 = vadd.f32 %v1058, %v1381
      %v1383 = vpop.f32.mrf.mxu0
      %1384 = vmatprep.mubr.f32.mxu0 0.0
      %1385 = vmatmul.mubr.f32.gmra.mxu0 %v1202
      %v1386 = vpop.f32.mrf.mxu0
      %v1387 = vadd.f32 %v1063, %v1386
      %v1388 = vpop.f32.mrf.mxu0
      %1389 = vmatprep.mubr.f32.mxu0 0.0
      %1390 = vmatmul.mubr.f32.gmra.mxu0 %v1205
      %v1391 = vpop.f32.mrf.mxu0
      %v1392 = vadd.f32 %v1068, %v1391
      %v1393 = vpop.f32.mrf.mxu0
      %1394 = vmatprep.mubr.f32.mxu0 0.0
      %1395 = vmatmul.mubr.f32.gmra.mxu0 %v1208
      %v1396 = vpop.f32.mrf.mxu0
      %v1397 = vadd.f32 %v1073, %v1396
      %v1398 = vpop.f32.mrf.mxu0
      %1399 = vmatprep.mubr.f32.mxu0 0.0
      %1400 = vmatmul.mubr.f32.gmra.mxu0 %v1211
      %v1401 = vpop.f32.mrf.mxu0
      %v1402 = vadd.f32 %v1078, %v1401
      %v1403 = vpop.f32.mrf.mxu0
      %1404 = vmatprep.mubr.f32.mxu0 0.0
      %1405 = vmatmul.mubr.f32.gmra.mxu0 %v1214
      %v1406 = vpop.f32.mrf.mxu0
      %v1407 = vadd.f32 %v1083, %v1406
      %v1408 = vpop.f32.mrf.mxu0
      %1409 = vmatprep.mubr.f32.mxu0 0.0
      %1410 = vmatmul.mubr.f32.gmra.mxu0 %v1217
      %v1411 = vpop.f32.mrf.mxu0
      %v1412 = vadd.f32 %v1088, %v1411
      %v1413 = vpop.f32.mrf.mxu0
      %1414 = vmatprep.mubr.f32.mxu0 0.0
      %1415 = vmatmul.mubr.f32.gmra.mxu0 %v1220
      %v1416 = vpop.f32.mrf.mxu0
      %v1417 = vadd.f32 %v1093, %v1416
      %v1418 = vpop.f32.mrf.mxu0
      %1419 = vmatprep.mubr.f32.mxu0 0.0
      %1420 = vmatmul.mubr.f32.gmra.mxu0 %v1223
      %v1421 = vpop.f32.mrf.mxu0
      %v1422 = vadd.f32 %v1098, %v1421
      %v1423 = vpop.f32.mrf.mxu0
      %1424 = vmatprep.mubr.f32.mxu0 0.0
      %1425 = vmatmul.mubr.f32.gmra.mxu0 %v1226
      %v1426 = vpop.f32.mrf.mxu0
      %v1427 = vadd.f32 %v1103, %v1426
      %v1428 = vpop.f32.mrf.mxu0
      %1429 = vmatprep.mubr.f32.mxu0 0.0
      %1430 = vmatmul.mubr.f32.gmra.mxu0 %v1229
      %v1431 = vpop.f32.mrf.mxu0
      %v1432 = vadd.f32 %v1108, %v1431
      %v1433 = vpop.f32.mrf.mxu0
      %1434 = vmatprep.mubr.f32.mxu0 0.0
      %1435 = vmatmul.mubr.f32.gmra.mxu0 %v1232
      %v1436 = vpop.f32.mrf.mxu0
      %v1437 = vadd.f32 %v1113, %v1436
      %v1438 = vpop.f32.mrf.mxu0
      %1439 = vmatprep.mubr.f32.mxu0 0.0
      %1440 = vmatmul.mubr.f32.gmra.mxu0 %v1235
      %v1441 = vpop.f32.mrf.mxu0
      %v1442 = vadd.f32 %v1118, %v1441
      %v1443 = vpop.f32.mrf.mxu0
      %1444 = vmatprep.mubr.f32.mxu0 0.0
      %1445 = vmatmul.mubr.f32.gmra.mxu0 %v1238
      %v1446 = vpop.f32.mrf.mxu0
      %v1447 = vadd.f32 %v1123, %v1446
      %v1448 = vpop.f32.mrf.mxu0
      %1449 = vmatprep.mubr.f32.mxu0 0.0
      %1450 = vmatmul.mubr.f32.gmra.mxu0 %v1241
      %v1451 = vpop.f32.mrf.mxu0
      %v1452 = vadd.f32 %v1128, %v1451
      %v1453 = vpop.f32.mrf.mxu0
      %1454 = vmatprep.mubr.f32.mxu0 0.0
      %1455 = vmatmul.mubr.f32.gmra.mxu0 %v1244
      %v1456 = vpop.f32.mrf.mxu0
      %v1457 = vadd.f32 %v1133, %v1456
      %v1458 = vpop.f32.mrf.mxu0
      %1459 = vmatprep.mubr.f32.mxu0 0.0
      %1460 = vmatmul.mubr.f32.gmra.mxu0 %v1247
      %v1461 = vpop.f32.mrf.mxu0
      %v1462 = vadd.f32 %v1138, %v1461
      %v1463 = vpop.f32.mrf.mxu0
      %1464 = vmatprep.mubr.f32.mxu0 0.0
      %1465 = vmatmul.mubr.f32.gmra.mxu0 %v1250
      %v1466 = vpop.f32.mrf.mxu0
      %v1467 = vadd.f32 %v1143, %v1466
      %v1468 = vpop.f32.mrf.mxu0
      %1469 = vmatprep.mubr.f32.mxu0 0.0
      %1470 = vmatmul.mubr.f32.gmra.mxu0 %v1253
      %v1471 = vpop.f32.mrf.mxu0
      %v1472 = vadd.f32 %v1148, %v1471
      %v1473 = vpop.f32.mrf.mxu0
      %1474 = vmatprep.mubr.f32.mxu0 0.0
      %1475 = vmatmul.mubr.f32.gmra.mxu0 %v1256
      %v1476 = vpop.f32.mrf.mxu0
      %v1477 = vadd.f32 %v1153, %v1476
      %v1478 = vpop.f32.mrf.mxu0
      %1479 = vmatprep.mubr.f32.mxu0 0.0
      %1480 = vmatmul.mubr.f32.gmra.mxu0 %v1259
      %v1481 = vpop.f32.mrf.mxu0
      %v1482 = vadd.f32 %v1158, %v1481
      %v1483 = vpop.f32.mrf.mxu0
      %1484 = vmatprep.mubr.f32.mxu0 0.0
      %1485 = vmatmul.mubr.f32.gmra.mxu0 %v1262
      %v1486 = vpop.f32.mrf.mxu0
      %v1487 = vadd.f32 %v1163, %v1486
      %v1488 = vpop.f32.mrf.mxu0
      %1489 = vmatprep.mubr.f32.mxu0 0.0
      %1490 = vmatmul.mubr.f32.gmra.mxu0 %v1265
      %v1491 = vpop.f32.mrf.mxu0
      %v1492 = vadd.f32 %v1168, %v1491
      %v1493 = vpop.f32.mrf.mxu0
      %1494 = vdwg.mxu0
      %v1495 = vld [vmem:[#allocation2 + $0x2] sm:$0xff]
      %v1496 = vld [vmem:[#allocation2 + $0xa] sm:$0xff]
      %v1497 = vld [vmem:[#allocation2 + $0x1a] sm:$0xff]
      %v1498 = vld [vmem:[#allocation2 + $0x22] sm:$0xff]
      %v1499 = vld [vmem:[#allocation2 + $0x32] sm:$0xff]
      %v1500 = vld [vmem:[#allocation2 + $0x3a] sm:$0xff]
      %v1501 = vld [vmem:[#allocation2 + $0x4a] sm:$0xff]
      %v1502 = vld [vmem:[#allocation2 + $0x52] sm:$0xff]
      %v1503 = vld [vmem:[#allocation2 + $0x62] sm:$0xff]
      %v1504 = vld [vmem:[#allocation2 + $0x6a] sm:$0xff]
      %v1505 = vld [vmem:[#allocation2 + $0x7a] sm:$0xff]
      %v1506 = vld [vmem:[#allocation2 + $0x82] sm:$0xff]
      %v1507 = vld [vmem:[#allocation2 + $0x92] sm:$0xff]
      %v1508 = vld [vmem:[#allocation2 + $0x9a] sm:$0xff]
      %v1509 = vld [vmem:[#allocation2 + $0xaa] sm:$0xff]
      %v1510 = vld [vmem:[#allocation2 + $0xb2] sm:$0xff]
      %v1511 = vld [vmem:[#allocation2 + $0xc2] sm:$0xff]
      %v1512 = vld [vmem:[#allocation2 + $0xca] sm:$0xff]
      %v1513 = vld [vmem:[#allocation2 + $0xda] sm:$0xff]
      %v1514 = vld [vmem:[#allocation2 + $0xe2] sm:$0xff]
      %v1515 = vld [vmem:[#allocation2 + $0xf2] sm:$0xff]
      %v1516 = vld [vmem:[#allocation2 + $0xfa] sm:$0xff]
      %v1517 = vld [vmem:[#allocation2 + $0x10a] sm:$0xff]
      %v1518 = vld [vmem:[#allocation2 + $0x112] sm:$0xff]
      %v1519 = vld [vmem:[#allocation2 + $0x122] sm:$0xff]
      %v1520 = vld [vmem:[#allocation2 + $0x12a] sm:$0xff]
      %v1521 = vld [vmem:[#allocation2 + $0x13a] sm:$0xff]
      %v1522 = vld [vmem:[#allocation2 + $0x142] sm:$0xff]
      %v1523 = vld [vmem:[#allocation2 + $0x152] sm:$0xff]
      %v1524 = vld [vmem:[#allocation2 + $0x15a] sm:$0xff]
      %v1525 = vld [vmem:[#allocation2 + $0x16a] sm:$0xff]
      %v1526 = vld [vmem:[#allocation2 + $0x172] sm:$0xff]
      %s1527 = scalar_lea.vmem %s5, 8
      %v1528 = vld [vmem:[%s1527] sm:$0xf]
      %v1530 = vsel %vm449, %v1495, 0
      %v1533 = vsel %vm449, %v1496, 0
      %v1536 = vsel %vm449, %v1497, 0
      %v1539 = vsel %vm449, %v1498, 0
      %v1542 = vsel %vm449, %v1499, 0
      %v1545 = vsel %vm449, %v1500, 0
      %v1548 = vsel %vm449, %v1501, 0
      %v1551 = vsel %vm449, %v1502, 0
      %v1554 = vsel %vm449, %v1503, 0
      %v1557 = vsel %vm449, %v1504, 0
      %v1560 = vsel %vm449, %v1505, 0
      %v1563 = vsel %vm449, %v1506, 0
      %v1566 = vsel %vm449, %v1507, 0
      %v1569 = vsel %vm449, %v1508, 0
      %v1572 = vsel %vm449, %v1509, 0
      %v1575 = vsel %vm449, %v1510, 0
      %v1578 = vsel %vm449, %v1511, 0
      %v1581 = vsel %vm449, %v1512, 0
      %v1584 = vsel %vm449, %v1513, 0
      %v1587 = vsel %vm449, %v1514, 0
      %v1590 = vsel %vm449, %v1515, 0
      %v1593 = vsel %vm449, %v1516, 0
      %v1596 = vsel %vm449, %v1517, 0
      %v1599 = vsel %vm449, %v1518, 0
      %v1602 = vsel %vm449, %v1519, 0
      %v1605 = vsel %vm449, %v1520, 0
      %v1608 = vsel %vm449, %v1521, 0
      %v1611 = vsel %vm449, %v1522, 0
      %v1614 = vsel %vm449, %v1523, 0
      %v1617 = vsel %vm449, %v1524, 0
      %v1620 = vsel %vm449, %v1525, 0
      %v1623 = vsel %vm449, %v1526, 0
      %v1626 = vsel %vm942, %v1528, 0
      %1628 = vmatprep.subr.mxu0 0.0
      %1629 = vmatpush1.msra.mxu0 0.0
      %1630 = vmatprep.subr.mxu0 0.0
      %1631 = vmatpush1.msra.mxu0 0.0
      %1632 = vmatprep.subr.mxu0 0.0
      %1633 = vmatpush1.msra.mxu0 0.0
      %1634 = vmatprep.subr.mxu0 0.0
      %1635 = vmatpush1.msra.mxu0 0.0
      %1636 = vmatprep.subr.mxu0 0.0
      %1637 = vmatpush1.msra.mxu0 0.0
      %1638 = vmatprep.subr.mxu0 0.0
      %1639 = vmatpush1.msra.mxu0 0.0
      %1640 = vmatprep.subr.mxu0 0.0
      %1641 = vmatpush1.msra.mxu0 0.0
      %1642 = vmatprep.subr.mxu0 0.0
      %1643 = vmatpush1.msra.mxu0 0.0
      %1644 = vmatprep.subr.mxu0 0.0
      %1645 = vmatpush1.msra.mxu0 0.0
      %1646 = vmatprep.subr.mxu0 0.0
      %1647 = vmatpush1.msra.mxu0 0.0
      %1648 = vmatprep.subr.mxu0 0.0
      %1649 = vmatpush1.msra.mxu0 0.0
      %1650 = vmatprep.subr.mxu0 0.0
      %1651 = vmatpush1.msra.mxu0 0.0
      %1652 = vmatprep.subr.mxu0 0.0
      %1653 = vmatpush1.msra.mxu0 0.0
      %1654 = vmatprep.subr.mxu0 0.0
      %1655 = vmatpush1.msra.mxu0 0.0
      %1656 = vmatprep.subr.mxu0 0.0
      %1657 = vmatpush1.msra.mxu0 0.0
      %1658 = vmatprep.subr.mxu0 0.0
      %1659 = vmatpush1.msra.mxu0 %v1626
      %1660 = vmatprep.subr.mxu0 0.0
      %1661 = vmatpush2.msra.mxu0 0.0
      %1662 = vmatprep.subr.mxu0 0.0
      %1663 = vmatpush2.msra.mxu0 0.0
      %1664 = vmatprep.subr.mxu0 0.0
      %1665 = vmatpush2.msra.mxu0 0.0
      %1666 = vmatprep.subr.mxu0 0.0
      %1667 = vmatpush2.msra.mxu0 0.0
      %1668 = vmatprep.subr.mxu0 0.0
      %1669 = vmatpush2.msra.mxu0 0.0
      %1670 = vmatprep.subr.mxu0 0.0
      %1671 = vmatpush2.msra.mxu0 0.0
      %1672 = vmatprep.subr.mxu0 0.0
      %1673 = vmatpush2.msra.mxu0 0.0
      %1674 = vmatprep.subr.mxu0 0.0
      %1675 = vmatpush2.msra.mxu0 0.0
      %1676 = vmatprep.subr.mxu0 0.0
      %1677 = vmatpush2.msra.mxu0 0.0
      %1678 = vmatprep.subr.mxu0 0.0
      %1679 = vmatpush2.msra.mxu0 0.0
      %1680 = vmatprep.subr.mxu0 0.0
      %1681 = vmatpush2.msra.mxu0 0.0
      %1682 = vmatprep.subr.mxu0 0.0
      %1683 = vmatpush2.msra.mxu0 0.0
      %1684 = vmatprep.subr.mxu0 0.0
      %1685 = vmatpush2.msra.mxu0 0.0
      %1686 = vmatprep.subr.mxu0 0.0
      %1687 = vmatpush2.msra.mxu0 0.0
      %1688 = vmatprep.subr.mxu0 0.0
      %1689 = vmatpush2.msra.mxu0 0.0
      %1690 = vmatprep.subr.mxu0 0.0
      %1691 = vmatpush2.msra.mxu0 0.0
      %1692 = vmatprep.mubr.f32.mxu0 0.0
      %1693 = vmatmul.mubr.f32.gmra.mxu0 %v1530
      %v1694 = vpop.f32.mrf.mxu0
      %v1695 = vadd.f32 0.0, %v1694
      %v1696 = vpop.f32.mrf.mxu0
      %1697 = vmatprep.mubr.f32.mxu0 0.0
      %1698 = vmatmul.mubr.f32.gmra.mxu0 %v1533
      %v1699 = vpop.f32.mrf.mxu0
      %v1700 = vadd.f32 0.0, %v1699
      %v1701 = vpop.f32.mrf.mxu0
      %1702 = vmatprep.mubr.f32.mxu0 0.0
      %1703 = vmatmul.mubr.f32.gmra.mxu0 %v1536
      %v1704 = vpop.f32.mrf.mxu0
      %v1705 = vadd.f32 0.0, %v1704
      %v1706 = vpop.f32.mrf.mxu0
      %1707 = vmatprep.mubr.f32.mxu0 0.0
      %1708 = vmatmul.mubr.f32.gmra.mxu0 %v1539
      %v1709 = vpop.f32.mrf.mxu0
      %v1710 = vadd.f32 0.0, %v1709
      %v1711 = vpop.f32.mrf.mxu0
      %1712 = vmatprep.mubr.f32.mxu0 0.0
      %1713 = vmatmul.mubr.f32.gmra.mxu0 %v1542
      %v1714 = vpop.f32.mrf.mxu0
      %v1715 = vadd.f32 0.0, %v1714
      %v1716 = vpop.f32.mrf.mxu0
      %1717 = vmatprep.mubr.f32.mxu0 0.0
      %1718 = vmatmul.mubr.f32.gmra.mxu0 %v1545
      %v1719 = vpop.f32.mrf.mxu0
      %v1720 = vadd.f32 0.0, %v1719
      %v1721 = vpop.f32.mrf.mxu0
      %1722 = vmatprep.mubr.f32.mxu0 0.0
      %1723 = vmatmul.mubr.f32.gmra.mxu0 %v1548
      %v1724 = vpop.f32.mrf.mxu0
      %v1725 = vadd.f32 0.0, %v1724
      %v1726 = vpop.f32.mrf.mxu0
      %1727 = vmatprep.mubr.f32.mxu0 0.0
      %1728 = vmatmul.mubr.f32.gmra.mxu0 %v1551
      %v1729 = vpop.f32.mrf.mxu0
      %v1730 = vadd.f32 0.0, %v1729
      %v1731 = vpop.f32.mrf.mxu0
      %1732 = vmatprep.mubr.f32.mxu0 0.0
      %1733 = vmatmul.mubr.f32.gmra.mxu0 %v1554
      %v1734 = vpop.f32.mrf.mxu0
      %v1735 = vadd.f32 0.0, %v1734
      %v1736 = vpop.f32.mrf.mxu0
      %1737 = vmatprep.mubr.f32.mxu0 0.0
      %1738 = vmatmul.mubr.f32.gmra.mxu0 %v1557
      %v1739 = vpop.f32.mrf.mxu0
      %v1740 = vadd.f32 0.0, %v1739
      %v1741 = vpop.f32.mrf.mxu0
      %1742 = vmatprep.mubr.f32.mxu0 0.0
      %1743 = vmatmul.mubr.f32.gmra.mxu0 %v1560
      %v1744 = vpop.f32.mrf.mxu0
      %v1745 = vadd.f32 0.0, %v1744
      %v1746 = vpop.f32.mrf.mxu0
      %1747 = vmatprep.mubr.f32.mxu0 0.0
      %1748 = vmatmul.mubr.f32.gmra.mxu0 %v1563
      %v1749 = vpop.f32.mrf.mxu0
      %v1750 = vadd.f32 0.0, %v1749
      %v1751 = vpop.f32.mrf.mxu0
      %1752 = vmatprep.mubr.f32.mxu0 0.0
      %1753 = vmatmul.mubr.f32.gmra.mxu0 %v1566
      %v1754 = vpop.f32.mrf.mxu0
      %v1755 = vadd.f32 0.0, %v1754
      %v1756 = vpop.f32.mrf.mxu0
      %1757 = vmatprep.mubr.f32.mxu0 0.0
      %1758 = vmatmul.mubr.f32.gmra.mxu0 %v1569
      %v1759 = vpop.f32.mrf.mxu0
      %v1760 = vadd.f32 0.0, %v1759
      %v1761 = vpop.f32.mrf.mxu0
      %1762 = vmatprep.mubr.f32.mxu0 0.0
      %1763 = vmatmul.mubr.f32.gmra.mxu0 %v1572
      %v1764 = vpop.f32.mrf.mxu0
      %v1765 = vadd.f32 0.0, %v1764
      %v1766 = vpop.f32.mrf.mxu0
      %1767 = vmatprep.mubr.f32.mxu0 0.0
      %1768 = vmatmul.mubr.f32.gmra.mxu0 %v1575
      %v1769 = vpop.f32.mrf.mxu0
      %v1770 = vadd.f32 0.0, %v1769
      %v1771 = vpop.f32.mrf.mxu0
      %1772 = vmatprep.mubr.f32.mxu0 0.0
      %1773 = vmatmul.mubr.f32.gmra.mxu0 %v1578
      %v1774 = vpop.f32.mrf.mxu0
      %v1775 = vadd.f32 0.0, %v1774
      %v1776 = vpop.f32.mrf.mxu0
      %1777 = vmatprep.mubr.f32.mxu0 0.0
      %1778 = vmatmul.mubr.f32.gmra.mxu0 %v1581
      %v1779 = vpop.f32.mrf.mxu0
      %v1780 = vadd.f32 0.0, %v1779
      %v1781 = vpop.f32.mrf.mxu0
      %1782 = vmatprep.mubr.f32.mxu0 0.0
      %1783 = vmatmul.mubr.f32.gmra.mxu0 %v1584
      %v1784 = vpop.f32.mrf.mxu0
      %v1785 = vadd.f32 0.0, %v1784
      %v1786 = vpop.f32.mrf.mxu0
      %1787 = vmatprep.mubr.f32.mxu0 0.0
      %1788 = vmatmul.mubr.f32.gmra.mxu0 %v1587
      %v1789 = vpop.f32.mrf.mxu0
      %v1790 = vadd.f32 0.0, %v1789
      %v1791 = vpop.f32.mrf.mxu0
      %1792 = vmatprep.mubr.f32.mxu0 0.0
      %1793 = vmatmul.mubr.f32.gmra.mxu0 %v1590
      %v1794 = vpop.f32.mrf.mxu0
      %v1795 = vadd.f32 0.0, %v1794
      %v1796 = vpop.f32.mrf.mxu0
      %1797 = vmatprep.mubr.f32.mxu0 0.0
      %1798 = vmatmul.mubr.f32.gmra.mxu0 %v1593
      %v1799 = vpop.f32.mrf.mxu0
      %v1800 = vadd.f32 0.0, %v1799
      %v1801 = vpop.f32.mrf.mxu0
      %1802 = vmatprep.mubr.f32.mxu0 0.0
      %1803 = vmatmul.mubr.f32.gmra.mxu0 %v1596
      %v1804 = vpop.f32.mrf.mxu0
      %v1805 = vadd.f32 0.0, %v1804
      %v1806 = vpop.f32.mrf.mxu0
      %1807 = vmatprep.mubr.f32.mxu0 0.0
      %1808 = vmatmul.mubr.f32.gmra.mxu0 %v1599
      %v1809 = vpop.f32.mrf.mxu0
      %v1810 = vadd.f32 0.0, %v1809
      %v1811 = vpop.f32.mrf.mxu0
      %1812 = vmatprep.mubr.f32.mxu0 0.0
      %1813 = vmatmul.mubr.f32.gmra.mxu0 %v1602
      %v1814 = vpop.f32.mrf.mxu0
      %v1815 = vadd.f32 0.0, %v1814
      %v1816 = vpop.f32.mrf.mxu0
      %1817 = vmatprep.mubr.f32.mxu0 0.0
      %1818 = vmatmul.mubr.f32.gmra.mxu0 %v1605
      %v1819 = vpop.f32.mrf.mxu0
      %v1820 = vadd.f32 0.0, %v1819
      %v1821 = vpop.f32.mrf.mxu0
      %1822 = vmatprep.mubr.f32.mxu0 0.0
      %1823 = vmatmul.mubr.f32.gmra.mxu0 %v1608
      %v1824 = vpop.f32.mrf.mxu0
      %v1825 = vadd.f32 0.0, %v1824
      %v1826 = vpop.f32.mrf.mxu0
      %1827 = vmatprep.mubr.f32.mxu0 0.0
      %1828 = vmatmul.mubr.f32.gmra.mxu0 %v1611
      %v1829 = vpop.f32.mrf.mxu0
      %v1830 = vadd.f32 0.0, %v1829
      %v1831 = vpop.f32.mrf.mxu0
      %1832 = vmatprep.mubr.f32.mxu0 0.0
      %1833 = vmatmul.mubr.f32.gmra.mxu0 %v1614
      %v1834 = vpop.f32.mrf.mxu0
      %v1835 = vadd.f32 0.0, %v1834
      %v1836 = vpop.f32.mrf.mxu0
      %1837 = vmatprep.mubr.f32.mxu0 0.0
      %1838 = vmatmul.mubr.f32.gmra.mxu0 %v1617
      %v1839 = vpop.f32.mrf.mxu0
      %v1840 = vadd.f32 0.0, %v1839
      %v1841 = vpop.f32.mrf.mxu0
      %1842 = vmatprep.mubr.f32.mxu0 0.0
      %1843 = vmatmul.mubr.f32.gmra.mxu0 %v1620
      %v1844 = vpop.f32.mrf.mxu0
      %v1845 = vadd.f32 0.0, %v1844
      %v1846 = vpop.f32.mrf.mxu0
      %1847 = vmatprep.mubr.f32.mxu0 0.0
      %1848 = vmatmul.mubr.f32.gmra.mxu0 %v1623
      %v1849 = vpop.f32.mrf.mxu0
      %v1850 = vadd.f32 0.0, %v1849
      %v1851 = vpop.f32.mrf.mxu0
      %1852 = vdwg.mxu0
      %v1853 = vadd.f32 %v1337, %v1695
      %v1854 = vadd.f32 %v1342, %v1700
      %v1855 = vadd.f32 %v1347, %v1705
      %v1856 = vadd.f32 %v1352, %v1710
      %v1857 = vadd.f32 %v1357, %v1715
      %v1858 = vadd.f32 %v1362, %v1720
      %v1859 = vadd.f32 %v1367, %v1725
      %v1860 = vadd.f32 %v1372, %v1730
      %v1861 = vadd.f32 %v1377, %v1735
      %v1862 = vadd.f32 %v1382, %v1740
      %v1863 = vadd.f32 %v1387, %v1745
      %v1864 = vadd.f32 %v1392, %v1750
      %v1865 = vadd.f32 %v1397, %v1755
      %v1866 = vadd.f32 %v1402, %v1760
      %v1867 = vadd.f32 %v1407, %v1765
      %v1868 = vadd.f32 %v1412, %v1770
      %v1869 = vadd.f32 %v1417, %v1775
      %v1870 = vadd.f32 %v1422, %v1780
      %v1871 = vadd.f32 %v1427, %v1785
      %v1872 = vadd.f32 %v1432, %v1790
      %v1873 = vadd.f32 %v1437, %v1795
      %v1874 = vadd.f32 %v1442, %v1800
      %v1875 = vadd.f32 %v1447, %v1805
      %v1876 = vadd.f32 %v1452, %v1810
      %v1877 = vadd.f32 %v1457, %v1815
      %v1878 = vadd.f32 %v1462, %v1820
      %v1879 = vadd.f32 %v1467, %v1825
      %v1880 = vadd.f32 %v1472, %v1830
      %v1881 = vadd.f32 %v1477, %v1835
      %v1882 = vadd.f32 %v1482, %v1840
      %v1883 = vadd.f32 %v1487, %v1845
      %v1884 = vadd.f32 %v1492, %v1850
      %v1885 = vld [vmem:[%s709] sm:$0xff]
      %v1886 = vld [vmem:[%s709 + $0x8] sm:$0xff]
      %v1887 = vld [vmem:[%s709 + $0x18] sm:$0xff]
      %v1888 = vld [vmem:[%s709 + $0x20] sm:$0xff]
      %v1889 = vld [vmem:[%s709 + $0x30] sm:$0xff]
      %v1890 = vld [vmem:[%s709 + $0x38] sm:$0xff]
      %v1891 = vld [vmem:[%s709 + $0x48] sm:$0xff]
      %v1892 = vld [vmem:[%s709 + $0x50] sm:$0xff]
      %v1893 = vld [vmem:[%s709 + $0x60] sm:$0xff]
      %v1894 = vld [vmem:[%s709 + $0x68] sm:$0xff]
      %v1895 = vld [vmem:[%s709 + $0x78] sm:$0xff]
      %v1896 = vld [vmem:[%s709 + $0x80] sm:$0xff]
      %v1897 = vld [vmem:[%s709 + $0x90] sm:$0xff]
      %v1898 = vld [vmem:[%s709 + $0x98] sm:$0xff]
      %v1899 = vld [vmem:[%s709 + $0xa8] sm:$0xff]
      %v1900 = vld [vmem:[%s709 + $0xb0] sm:$0xff]
      %v1901 = vld [vmem:[%s709 + $0xc0] sm:$0xff]
      %v1902 = vld [vmem:[%s709 + $0xc8] sm:$0xff]
      %v1903 = vld [vmem:[%s709 + $0xd8] sm:$0xff]
      %v1904 = vld [vmem:[%s709 + $0xe0] sm:$0xff]
      %v1905 = vld [vmem:[%s709 + $0xf0] sm:$0xff]
      %v1906 = vld [vmem:[%s709 + $0xf8] sm:$0xff]
      %v1907 = vld [vmem:[%s709 + $0x108] sm:$0xff]
      %v1908 = vld [vmem:[%s709 + $0x110] sm:$0xff]
      %v1909 = vld [vmem:[%s709 + $0x120] sm:$0xff]
      %v1910 = vld [vmem:[%s709 + $0x128] sm:$0xff]
      %v1911 = vld [vmem:[%s709 + $0x138] sm:$0xff]
      %v1912 = vld [vmem:[%s709 + $0x140] sm:$0xff]
      %v1913 = vld [vmem:[%s709 + $0x150] sm:$0xff]
      %v1914 = vld [vmem:[%s709 + $0x158] sm:$0xff]
      %v1915 = vld [vmem:[%s709 + $0x168] sm:$0xff]
      %v1916 = vld [vmem:[%s709 + $0x170] sm:$0xff]
      %s1917 = scalar_lea.vmem %s5, 12
      %v1918 = vld [vmem:[%s1917] sm:$0xf]
      %v1920 = vsel %vm449, %v1885, 0
      %v1923 = vsel %vm449, %v1886, 0
      %v1926 = vsel %vm449, %v1887, 0
      %v1929 = vsel %vm449, %v1888, 0
      %v1932 = vsel %vm449, %v1889, 0
      %v1935 = vsel %vm449, %v1890, 0
      %v1938 = vsel %vm449, %v1891, 0
      %v1941 = vsel %vm449, %v1892, 0
      %v1944 = vsel %vm449, %v1893, 0
      %v1947 = vsel %vm449, %v1894, 0
      %v1950 = vsel %vm449, %v1895, 0
      %v1953 = vsel %vm449, %v1896, 0
      %v1956 = vsel %vm449, %v1897, 0
      %v1959 = vsel %vm449, %v1898, 0
      %v1962 = vsel %vm449, %v1899, 0
      %v1965 = vsel %vm449, %v1900, 0
      %v1968 = vsel %vm449, %v1901, 0
      %v1971 = vsel %vm449, %v1902, 0
      %v1974 = vsel %vm449, %v1903, 0
      %v1977 = vsel %vm449, %v1904, 0
      %v1980 = vsel %vm449, %v1905, 0
      %v1983 = vsel %vm449, %v1906, 0
      %v1986 = vsel %vm449, %v1907, 0
      %v1989 = vsel %vm449, %v1908, 0
      %v1992 = vsel %vm449, %v1909, 0
      %v1995 = vsel %vm449, %v1910, 0
      %v1998 = vsel %vm449, %v1911, 0
      %v2001 = vsel %vm449, %v1912, 0
      %v2004 = vsel %vm449, %v1913, 0
      %v2007 = vsel %vm449, %v1914, 0
      %v2010 = vsel %vm449, %v1915, 0
      %v2013 = vsel %vm449, %v1916, 0
      %v2016 = vsel %vm942, %v1918, 0
      %2018 = vmatprep.subr.mxu0 0.0
      %2019 = vmatpush1.msra.mxu0 0.0
      %2020 = vmatprep.subr.mxu0 0.0
      %2021 = vmatpush1.msra.mxu0 0.0
      %2022 = vmatprep.subr.mxu0 0.0
      %2023 = vmatpush1.msra.mxu0 0.0
      %2024 = vmatprep.subr.mxu0 0.0
      %2025 = vmatpush1.msra.mxu0 0.0
      %2026 = vmatprep.subr.mxu0 0.0
      %2027 = vmatpush1.msra.mxu0 0.0
      %2028 = vmatprep.subr.mxu0 0.0
      %2029 = vmatpush1.msra.mxu0 0.0
      %2030 = vmatprep.subr.mxu0 0.0
      %2031 = vmatpush1.msra.mxu0 0.0
      %2032 = vmatprep.subr.mxu0 0.0
      %2033 = vmatpush1.msra.mxu0 0.0
      %2034 = vmatprep.subr.mxu0 0.0
      %2035 = vmatpush1.msra.mxu0 0.0
      %2036 = vmatprep.subr.mxu0 0.0
      %2037 = vmatpush1.msra.mxu0 0.0
      %2038 = vmatprep.subr.mxu0 0.0
      %2039 = vmatpush1.msra.mxu0 0.0
      %2040 = vmatprep.subr.mxu0 0.0
      %2041 = vmatpush1.msra.mxu0 0.0
      %2042 = vmatprep.subr.mxu0 0.0
      %2043 = vmatpush1.msra.mxu0 0.0
      %2044 = vmatprep.subr.mxu0 0.0
      %2045 = vmatpush1.msra.mxu0 0.0
      %2046 = vmatprep.subr.mxu0 0.0
      %2047 = vmatpush1.msra.mxu0 0.0
      %2048 = vmatprep.subr.mxu0 0.0
      %2049 = vmatpush1.msra.mxu0 %v2016
      %2050 = vmatprep.subr.mxu0 0.0
      %2051 = vmatpush2.msra.mxu0 0.0
      %2052 = vmatprep.subr.mxu0 0.0
      %2053 = vmatpush2.msra.mxu0 0.0
      %2054 = vmatprep.subr.mxu0 0.0
      %2055 = vmatpush2.msra.mxu0 0.0
      %2056 = vmatprep.subr.mxu0 0.0
      %2057 = vmatpush2.msra.mxu0 0.0
      %2058 = vmatprep.subr.mxu0 0.0
      %2059 = vmatpush2.msra.mxu0 0.0
      %2060 = vmatprep.subr.mxu0 0.0
      %2061 = vmatpush2.msra.mxu0 0.0
      %2062 = vmatprep.subr.mxu0 0.0
      %2063 = vmatpush2.msra.mxu0 0.0
      %2064 = vmatprep.subr.mxu0 0.0
      %2065 = vmatpush2.msra.mxu0 0.0
      %2066 = vmatprep.subr.mxu0 0.0
      %2067 = vmatpush2.msra.mxu0 0.0
      %2068 = vmatprep.subr.mxu0 0.0
      %2069 = vmatpush2.msra.mxu0 0.0
      %2070 = vmatprep.subr.mxu0 0.0
      %2071 = vmatpush2.msra.mxu0 0.0
      %2072 = vmatprep.subr.mxu0 0.0
      %2073 = vmatpush2.msra.mxu0 0.0
      %2074 = vmatprep.subr.mxu0 0.0
      %2075 = vmatpush2.msra.mxu0 0.0
      %2076 = vmatprep.subr.mxu0 0.0
      %2077 = vmatpush2.msra.mxu0 0.0
      %2078 = vmatprep.subr.mxu0 0.0
      %2079 = vmatpush2.msra.mxu0 0.0
      %2080 = vmatprep.subr.mxu0 0.0
      %2081 = vmatpush2.msra.mxu0 0.0
      %2082 = vmatprep.mubr.f32.mxu0 0.0
      %2083 = vmatmul.mubr.f32.gmra.mxu0 %v1920
      %v2084 = vpop.f32.mrf.mxu0
      %v2085 = vadd.f32 0.0, %v2084
      %v2086 = vpop.f32.mrf.mxu0
      %2087 = vmatprep.mubr.f32.mxu0 0.0
      %2088 = vmatmul.mubr.f32.gmra.mxu0 %v1923
      %v2089 = vpop.f32.mrf.mxu0
      %v2090 = vadd.f32 0.0, %v2089
      %v2091 = vpop.f32.mrf.mxu0
      %2092 = vmatprep.mubr.f32.mxu0 0.0
      %2093 = vmatmul.mubr.f32.gmra.mxu0 %v1926
      %v2094 = vpop.f32.mrf.mxu0
      %v2095 = vadd.f32 0.0, %v2094
      %v2096 = vpop.f32.mrf.mxu0
      %2097 = vmatprep.mubr.f32.mxu0 0.0
      %2098 = vmatmul.mubr.f32.gmra.mxu0 %v1929
      %v2099 = vpop.f32.mrf.mxu0
      %v2100 = vadd.f32 0.0, %v2099
      %v2101 = vpop.f32.mrf.mxu0
      %2102 = vmatprep.mubr.f32.mxu0 0.0
      %2103 = vmatmul.mubr.f32.gmra.mxu0 %v1932
      %v2104 = vpop.f32.mrf.mxu0
      %v2105 = vadd.f32 0.0, %v2104
      %v2106 = vpop.f32.mrf.mxu0
      %2107 = vmatprep.mubr.f32.mxu0 0.0
      %2108 = vmatmul.mubr.f32.gmra.mxu0 %v1935
      %v2109 = vpop.f32.mrf.mxu0
      %v2110 = vadd.f32 0.0, %v2109
      %v2111 = vpop.f32.mrf.mxu0
      %2112 = vmatprep.mubr.f32.mxu0 0.0
      %2113 = vmatmul.mubr.f32.gmra.mxu0 %v1938
      %v2114 = vpop.f32.mrf.mxu0
      %v2115 = vadd.f32 0.0, %v2114
      %v2116 = vpop.f32.mrf.mxu0
      %2117 = vmatprep.mubr.f32.mxu0 0.0
      %2118 = vmatmul.mubr.f32.gmra.mxu0 %v1941
      %v2119 = vpop.f32.mrf.mxu0
      %v2120 = vadd.f32 0.0, %v2119
      %v2121 = vpop.f32.mrf.mxu0
      %2122 = vmatprep.mubr.f32.mxu0 0.0
      %2123 = vmatmul.mubr.f32.gmra.mxu0 %v1944
      %v2124 = vpop.f32.mrf.mxu0
      %v2125 = vadd.f32 0.0, %v2124
      %v2126 = vpop.f32.mrf.mxu0
      %2127 = vmatprep.mubr.f32.mxu0 0.0
      %2128 = vmatmul.mubr.f32.gmra.mxu0 %v1947
      %v2129 = vpop.f32.mrf.mxu0
      %v2130 = vadd.f32 0.0, %v2129
      %v2131 = vpop.f32.mrf.mxu0
      %2132 = vmatprep.mubr.f32.mxu0 0.0
      %2133 = vmatmul.mubr.f32.gmra.mxu0 %v1950
      %v2134 = vpop.f32.mrf.mxu0
      %v2135 = vadd.f32 0.0, %v2134
      %v2136 = vpop.f32.mrf.mxu0
      %2137 = vmatprep.mubr.f32.mxu0 0.0
      %2138 = vmatmul.mubr.f32.gmra.mxu0 %v1953
      %v2139 = vpop.f32.mrf.mxu0
      %v2140 = vadd.f32 0.0, %v2139
      %v2141 = vpop.f32.mrf.mxu0
      %2142 = vmatprep.mubr.f32.mxu0 0.0
      %2143 = vmatmul.mubr.f32.gmra.mxu0 %v1956
      %v2144 = vpop.f32.mrf.mxu0
      %v2145 = vadd.f32 0.0, %v2144
      %v2146 = vpop.f32.mrf.mxu0
      %2147 = vmatprep.mubr.f32.mxu0 0.0
      %2148 = vmatmul.mubr.f32.gmra.mxu0 %v1959
      %v2149 = vpop.f32.mrf.mxu0
      %v2150 = vadd.f32 0.0, %v2149
      %v2151 = vpop.f32.mrf.mxu0
      %2152 = vmatprep.mubr.f32.mxu0 0.0
      %2153 = vmatmul.mubr.f32.gmra.mxu0 %v1962
      %v2154 = vpop.f32.mrf.mxu0
      %v2155 = vadd.f32 0.0, %v2154
      %v2156 = vpop.f32.mrf.mxu0
      %2157 = vmatprep.mubr.f32.mxu0 0.0
      %2158 = vmatmul.mubr.f32.gmra.mxu0 %v1965
      %v2159 = vpop.f32.mrf.mxu0
      %v2160 = vadd.f32 0.0, %v2159
      %v2161 = vpop.f32.mrf.mxu0
      %2162 = vmatprep.mubr.f32.mxu0 0.0
      %2163 = vmatmul.mubr.f32.gmra.mxu0 %v1968
      %v2164 = vpop.f32.mrf.mxu0
      %v2165 = vadd.f32 0.0, %v2164
      %v2166 = vpop.f32.mrf.mxu0
      %2167 = vmatprep.mubr.f32.mxu0 0.0
      %2168 = vmatmul.mubr.f32.gmra.mxu0 %v1971
      %v2169 = vpop.f32.mrf.mxu0
      %v2170 = vadd.f32 0.0, %v2169
      %v2171 = vpop.f32.mrf.mxu0
      %2172 = vmatprep.mubr.f32.mxu0 0.0
      %2173 = vmatmul.mubr.f32.gmra.mxu0 %v1974
      %v2174 = vpop.f32.mrf.mxu0
      %v2175 = vadd.f32 0.0, %v2174
      %v2176 = vpop.f32.mrf.mxu0
      %2177 = vmatprep.mubr.f32.mxu0 0.0
      %2178 = vmatmul.mubr.f32.gmra.mxu0 %v1977
      %v2179 = vpop.f32.mrf.mxu0
      %v2180 = vadd.f32 0.0, %v2179
      %v2181 = vpop.f32.mrf.mxu0
      %2182 = vmatprep.mubr.f32.mxu0 0.0
      %2183 = vmatmul.mubr.f32.gmra.mxu0 %v1980
      %v2184 = vpop.f32.mrf.mxu0
      %v2185 = vadd.f32 0.0, %v2184
      %v2186 = vpop.f32.mrf.mxu0
      %2187 = vmatprep.mubr.f32.mxu0 0.0
      %2188 = vmatmul.mubr.f32.gmra.mxu0 %v1983
      %v2189 = vpop.f32.mrf.mxu0
      %v2190 = vadd.f32 0.0, %v2189
      %v2191 = vpop.f32.mrf.mxu0
      %2192 = vmatprep.mubr.f32.mxu0 0.0
      %2193 = vmatmul.mubr.f32.gmra.mxu0 %v1986
      %v2194 = vpop.f32.mrf.mxu0
      %v2195 = vadd.f32 0.0, %v2194
      %v2196 = vpop.f32.mrf.mxu0
      %2197 = vmatprep.mubr.f32.mxu0 0.0
      %2198 = vmatmul.mubr.f32.gmra.mxu0 %v1989
      %v2199 = vpop.f32.mrf.mxu0
      %v2200 = vadd.f32 0.0, %v2199
      %v2201 = vpop.f32.mrf.mxu0
      %2202 = vmatprep.mubr.f32.mxu0 0.0
      %2203 = vmatmul.mubr.f32.gmra.mxu0 %v1992
      %v2204 = vpop.f32.mrf.mxu0
      %v2205 = vadd.f32 0.0, %v2204
      %v2206 = vpop.f32.mrf.mxu0
      %2207 = vmatprep.mubr.f32.mxu0 0.0
      %2208 = vmatmul.mubr.f32.gmra.mxu0 %v1995
      %v2209 = vpop.f32.mrf.mxu0
      %v2210 = vadd.f32 0.0, %v2209
      %v2211 = vpop.f32.mrf.mxu0
      %2212 = vmatprep.mubr.f32.mxu0 0.0
      %2213 = vmatmul.mubr.f32.gmra.mxu0 %v1998
      %v2214 = vpop.f32.mrf.mxu0
      %v2215 = vadd.f32 0.0, %v2214
      %v2216 = vpop.f32.mrf.mxu0
      %2217 = vmatprep.mubr.f32.mxu0 0.0
      %2218 = vmatmul.mubr.f32.gmra.mxu0 %v2001
      %v2219 = vpop.f32.mrf.mxu0
      %v2220 = vadd.f32 0.0, %v2219
      %v2221 = vpop.f32.mrf.mxu0
      %2222 = vmatprep.mubr.f32.mxu0 0.0
      %2223 = vmatmul.mubr.f32.gmra.mxu0 %v2004
      %v2224 = vpop.f32.mrf.mxu0
      %v2225 = vadd.f32 0.0, %v2224
      %v2226 = vpop.f32.mrf.mxu0
      %2227 = vmatprep.mubr.f32.mxu0 0.0
      %2228 = vmatmul.mubr.f32.gmra.mxu0 %v2007
      %v2229 = vpop.f32.mrf.mxu0
      %v2230 = vadd.f32 0.0, %v2229
      %v2231 = vpop.f32.mrf.mxu0
      %2232 = vmatprep.mubr.f32.mxu0 0.0
      %2233 = vmatmul.mubr.f32.gmra.mxu0 %v2010
      %v2234 = vpop.f32.mrf.mxu0
      %v2235 = vadd.f32 0.0, %v2234
      %v2236 = vpop.f32.mrf.mxu0
      %2237 = vmatprep.mubr.f32.mxu0 0.0
      %2238 = vmatmul.mubr.f32.gmra.mxu0 %v2013
      %v2239 = vpop.f32.mrf.mxu0
      %v2240 = vadd.f32 0.0, %v2239
      %v2241 = vpop.f32.mrf.mxu0
      %2242 = vdwg.mxu0
      %v2243 = vadd.f32 %v1853, %v2085
      %v2244 = vadd.f32 %v1854, %v2090
      %v2245 = vadd.f32 %v1855, %v2095
      %v2246 = vadd.f32 %v1856, %v2100
      %v2247 = vadd.f32 %v1857, %v2105
      %v2248 = vadd.f32 %v1858, %v2110
      %v2249 = vadd.f32 %v1859, %v2115
      %v2250 = vadd.f32 %v1860, %v2120
      %v2251 = vadd.f32 %v1861, %v2125
      %v2252 = vadd.f32 %v1862, %v2130
      %v2253 = vadd.f32 %v1863, %v2135
      %v2254 = vadd.f32 %v1864, %v2140
      %v2255 = vadd.f32 %v1865, %v2145
      %v2256 = vadd.f32 %v1866, %v2150
      %v2257 = vadd.f32 %v1867, %v2155
      %v2258 = vadd.f32 %v1868, %v2160
      %v2259 = vadd.f32 %v1869, %v2165
      %v2260 = vadd.f32 %v1870, %v2170
      %v2261 = vadd.f32 %v1871, %v2175
      %v2262 = vadd.f32 %v1872, %v2180
      %v2263 = vadd.f32 %v1873, %v2185
      %v2264 = vadd.f32 %v1874, %v2190
      %v2265 = vadd.f32 %v1875, %v2195
      %v2266 = vadd.f32 %v1876, %v2200
      %v2267 = vadd.f32 %v1877, %v2205
      %v2268 = vadd.f32 %v1878, %v2210
      %v2269 = vadd.f32 %v1879, %v2215
      %v2270 = vadd.f32 %v1880, %v2220
      %v2271 = vadd.f32 %v1881, %v2225
      %v2272 = vadd.f32 %v1882, %v2230
      %v2273 = vadd.f32 %v1883, %v2235
      %v2274 = vadd.f32 %v1884, %v2240
      %v2275 = vld [vmem:[%s709 + $0x1] sm:$0xff]
      %v2276 = vld [vmem:[%s709 + $0x9] sm:$0xff]
      %v2277 = vld [vmem:[%s709 + $0x19] sm:$0xff]
      %v2278 = vld [vmem:[%s709 + $0x21] sm:$0xff]
      %v2279 = vld [vmem:[%s709 + $0x31] sm:$0xff]
      %v2280 = vld [vmem:[%s709 + $0x39] sm:$0xff]
      %v2281 = vld [vmem:[%s709 + $0x49] sm:$0xff]
      %v2282 = vld [vmem:[%s709 + $0x51] sm:$0xff]
      %v2283 = vld [vmem:[%s709 + $0x61] sm:$0xff]
      %v2284 = vld [vmem:[%s709 + $0x69] sm:$0xff]
      %v2285 = vld [vmem:[%s709 + $0x79] sm:$0xff]
      %v2286 = vld [vmem:[%s709 + $0x81] sm:$0xff]
      %v2287 = vld [vmem:[%s709 + $0x91] sm:$0xff]
      %v2288 = vld [vmem:[%s709 + $0x99] sm:$0xff]
      %v2289 = vld [vmem:[%s709 + $0xa9] sm:$0xff]
      %v2290 = vld [vmem:[%s709 + $0xb1] sm:$0xff]
      %v2291 = vld [vmem:[%s709 + $0xc1] sm:$0xff]
      %v2292 = vld [vmem:[%s709 + $0xc9] sm:$0xff]
      %v2293 = vld [vmem:[%s709 + $0xd9] sm:$0xff]
      %v2294 = vld [vmem:[%s709 + $0xe1] sm:$0xff]
      %v2295 = vld [vmem:[%s709 + $0xf1] sm:$0xff]
      %v2296 = vld [vmem:[%s709 + $0xf9] sm:$0xff]
      %v2297 = vld [vmem:[%s709 + $0x109] sm:$0xff]
      %v2298 = vld [vmem:[%s709 + $0x111] sm:$0xff]
      %v2299 = vld [vmem:[%s709 + $0x121] sm:$0xff]
      %v2300 = vld [vmem:[%s709 + $0x129] sm:$0xff]
      %v2301 = vld [vmem:[%s709 + $0x139] sm:$0xff]
      %v2302 = vld [vmem:[%s709 + $0x141] sm:$0xff]
      %v2303 = vld [vmem:[%s709 + $0x151] sm:$0xff]
      %v2304 = vld [vmem:[%s709 + $0x159] sm:$0xff]
      %v2305 = vld [vmem:[%s709 + $0x169] sm:$0xff]
      %v2306 = vld [vmem:[%s709 + $0x171] sm:$0xff]
      %s2307 = scalar_lea.vmem %s5, 16
      %v2308 = vld [vmem:[%s2307] sm:$0xf]
      %v2310 = vsel %vm449, %v2275, 0
      %v2313 = vsel %vm449, %v2276, 0
      %v2316 = vsel %vm449, %v2277, 0
      %v2319 = vsel %vm449, %v2278, 0
      %v2322 = vsel %vm449, %v2279, 0
      %v2325 = vsel %vm449, %v2280, 0
      %v2328 = vsel %vm449, %v2281, 0
      %v2331 = vsel %vm449, %v2282, 0
      %v2334 = vsel %vm449, %v2283, 0
      %v2337 = vsel %vm449, %v2284, 0
      %v2340 = vsel %vm449, %v2285, 0
      %v2343 = vsel %vm449, %v2286, 0
      %v2346 = vsel %vm449, %v2287, 0
      %v2349 = vsel %vm449, %v2288, 0
      %v2352 = vsel %vm449, %v2289, 0
      %v2355 = vsel %vm449, %v2290, 0
      %v2358 = vsel %vm449, %v2291, 0
      %v2361 = vsel %vm449, %v2292, 0
      %v2364 = vsel %vm449, %v2293, 0
      %v2367 = vsel %vm449, %v2294, 0
      %v2370 = vsel %vm449, %v2295, 0
      %v2373 = vsel %vm449, %v2296, 0
      %v2376 = vsel %vm449, %v2297, 0
      %v2379 = vsel %vm449, %v2298, 0
      %v2382 = vsel %vm449, %v2299, 0
      %v2385 = vsel %vm449, %v2300, 0
      %v2388 = vsel %vm449, %v2301, 0
      %v2391 = vsel %vm449, %v2302, 0
      %v2394 = vsel %vm449, %v2303, 0
      %v2397 = vsel %vm449, %v2304, 0
      %v2400 = vsel %vm449, %v2305, 0
      %v2403 = vsel %vm449, %v2306, 0
      %v2406 = vsel %vm942, %v2308, 0
      %2408 = vmatprep.subr.mxu0 0.0
      %2409 = vmatpush1.msra.mxu0 0.0
      %2410 = vmatprep.subr.mxu0 0.0
      %2411 = vmatpush1.msra.mxu0 0.0
      %2412 = vmatprep.subr.mxu0 0.0
      %2413 = vmatpush1.msra.mxu0 0.0
      %2414 = vmatprep.subr.mxu0 0.0
      %2415 = vmatpush1.msra.mxu0 0.0
      %2416 = vmatprep.subr.mxu0 0.0
      %2417 = vmatpush1.msra.mxu0 0.0
      %2418 = vmatprep.subr.mxu0 0.0
      %2419 = vmatpush1.msra.mxu0 0.0
      %2420 = vmatprep.subr.mxu0 0.0
      %2421 = vmatpush1.msra.mxu0 0.0
      %2422 = vmatprep.subr.mxu0 0.0
      %2423 = vmatpush1.msra.mxu0 0.0
      %2424 = vmatprep.subr.mxu0 0.0
      %2425 = vmatpush1.msra.mxu0 0.0
      %2426 = vmatprep.subr.mxu0 0.0
      %2427 = vmatpush1.msra.mxu0 0.0
      %2428 = vmatprep.subr.mxu0 0.0
      %2429 = vmatpush1.msra.mxu0 0.0
      %2430 = vmatprep.subr.mxu0 0.0
      %2431 = vmatpush1.msra.mxu0 0.0
      %2432 = vmatprep.subr.mxu0 0.0
      %2433 = vmatpush1.msra.mxu0 0.0
      %2434 = vmatprep.subr.mxu0 0.0
      %2435 = vmatpush1.msra.mxu0 0.0
      %2436 = vmatprep.subr.mxu0 0.0
      %2437 = vmatpush1.msra.mxu0 0.0
      %2438 = vmatprep.subr.mxu0 0.0
      %2439 = vmatpush1.msra.mxu0 %v2406
      %2440 = vmatprep.subr.mxu0 0.0
      %2441 = vmatpush2.msra.mxu0 0.0
      %2442 = vmatprep.subr.mxu0 0.0
      %2443 = vmatpush2.msra.mxu0 0.0
      %2444 = vmatprep.subr.mxu0 0.0
      %2445 = vmatpush2.msra.mxu0 0.0
      %2446 = vmatprep.subr.mxu0 0.0
      %2447 = vmatpush2.msra.mxu0 0.0
      %2448 = vmatprep.subr.mxu0 0.0
      %2449 = vmatpush2.msra.mxu0 0.0
      %2450 = vmatprep.subr.mxu0 0.0
      %2451 = vmatpush2.msra.mxu0 0.0
      %2452 = vmatprep.subr.mxu0 0.0
      %2453 = vmatpush2.msra.mxu0 0.0
      %2454 = vmatprep.subr.mxu0 0.0
      %2455 = vmatpush2.msra.mxu0 0.0
      %2456 = vmatprep.subr.mxu0 0.0
      %2457 = vmatpush2.msra.mxu0 0.0
      %2458 = vmatprep.subr.mxu0 0.0
      %2459 = vmatpush2.msra.mxu0 0.0
      %2460 = vmatprep.subr.mxu0 0.0
      %2461 = vmatpush2.msra.mxu0 0.0
      %2462 = vmatprep.subr.mxu0 0.0
      %2463 = vmatpush2.msra.mxu0 0.0
      %2464 = vmatprep.subr.mxu0 0.0
      %2465 = vmatpush2.msra.mxu0 0.0
      %2466 = vmatprep.subr.mxu0 0.0
      %2467 = vmatpush2.msra.mxu0 0.0
      %2468 = vmatprep.subr.mxu0 0.0
      %2469 = vmatpush2.msra.mxu0 0.0
      %2470 = vmatprep.subr.mxu0 0.0
      %2471 = vmatpush2.msra.mxu0 0.0
      %2472 = vmatprep.mubr.f32.mxu0 0.0
      %2473 = vmatmul.mubr.f32.gmra.mxu0 %v2310
      %v2474 = vpop.f32.mrf.mxu0
      %v2475 = vadd.f32 0.0, %v2474
      %v2476 = vpop.f32.mrf.mxu0
      %2477 = vmatprep.mubr.f32.mxu0 0.0
      %2478 = vmatmul.mubr.f32.gmra.mxu0 %v2313
      %v2479 = vpop.f32.mrf.mxu0
      %v2480 = vadd.f32 0.0, %v2479
      %v2481 = vpop.f32.mrf.mxu0
      %2482 = vmatprep.mubr.f32.mxu0 0.0
      %2483 = vmatmul.mubr.f32.gmra.mxu0 %v2316
      %v2484 = vpop.f32.mrf.mxu0
      %v2485 = vadd.f32 0.0, %v2484
      %v2486 = vpop.f32.mrf.mxu0
      %2487 = vmatprep.mubr.f32.mxu0 0.0
      %2488 = vmatmul.mubr.f32.gmra.mxu0 %v2319
      %v2489 = vpop.f32.mrf.mxu0
      %v2490 = vadd.f32 0.0, %v2489
      %v2491 = vpop.f32.mrf.mxu0
      %2492 = vmatprep.mubr.f32.mxu0 0.0
      %2493 = vmatmul.mubr.f32.gmra.mxu0 %v2322
      %v2494 = vpop.f32.mrf.mxu0
      %v2495 = vadd.f32 0.0, %v2494
      %v2496 = vpop.f32.mrf.mxu0
      %2497 = vmatprep.mubr.f32.mxu0 0.0
      %2498 = vmatmul.mubr.f32.gmra.mxu0 %v2325
      %v2499 = vpop.f32.mrf.mxu0
      %v2500 = vadd.f32 0.0, %v2499
      %v2501 = vpop.f32.mrf.mxu0
      %2502 = vmatprep.mubr.f32.mxu0 0.0
      %2503 = vmatmul.mubr.f32.gmra.mxu0 %v2328
      %v2504 = vpop.f32.mrf.mxu0
      %v2505 = vadd.f32 0.0, %v2504
      %v2506 = vpop.f32.mrf.mxu0
      %2507 = vmatprep.mubr.f32.mxu0 0.0
      %2508 = vmatmul.mubr.f32.gmra.mxu0 %v2331
      %v2509 = vpop.f32.mrf.mxu0
      %v2510 = vadd.f32 0.0, %v2509
      %v2511 = vpop.f32.mrf.mxu0
      %2512 = vmatprep.mubr.f32.mxu0 0.0
      %2513 = vmatmul.mubr.f32.gmra.mxu0 %v2334
      %v2514 = vpop.f32.mrf.mxu0
      %v2515 = vadd.f32 0.0, %v2514
      %v2516 = vpop.f32.mrf.mxu0
      %2517 = vmatprep.mubr.f32.mxu0 0.0
      %2518 = vmatmul.mubr.f32.gmra.mxu0 %v2337
      %v2519 = vpop.f32.mrf.mxu0
      %v2520 = vadd.f32 0.0, %v2519
      %v2521 = vpop.f32.mrf.mxu0
      %2522 = vmatprep.mubr.f32.mxu0 0.0
      %2523 = vmatmul.mubr.f32.gmra.mxu0 %v2340
      %v2524 = vpop.f32.mrf.mxu0
      %v2525 = vadd.f32 0.0, %v2524
      %v2526 = vpop.f32.mrf.mxu0
      %2527 = vmatprep.mubr.f32.mxu0 0.0
      %2528 = vmatmul.mubr.f32.gmra.mxu0 %v2343
      %v2529 = vpop.f32.mrf.mxu0
      %v2530 = vadd.f32 0.0, %v2529
      %v2531 = vpop.f32.mrf.mxu0
      %2532 = vmatprep.mubr.f32.mxu0 0.0
      %2533 = vmatmul.mubr.f32.gmra.mxu0 %v2346
      %v2534 = vpop.f32.mrf.mxu0
      %v2535 = vadd.f32 0.0, %v2534
      %v2536 = vpop.f32.mrf.mxu0
      %2537 = vmatprep.mubr.f32.mxu0 0.0
      %2538 = vmatmul.mubr.f32.gmra.mxu0 %v2349
      %v2539 = vpop.f32.mrf.mxu0
      %v2540 = vadd.f32 0.0, %v2539
      %v2541 = vpop.f32.mrf.mxu0
      %2542 = vmatprep.mubr.f32.mxu0 0.0
      %2543 = vmatmul.mubr.f32.gmra.mxu0 %v2352
      %v2544 = vpop.f32.mrf.mxu0
      %v2545 = vadd.f32 0.0, %v2544
      %v2546 = vpop.f32.mrf.mxu0
      %2547 = vmatprep.mubr.f32.mxu0 0.0
      %2548 = vmatmul.mubr.f32.gmra.mxu0 %v2355
      %v2549 = vpop.f32.mrf.mxu0
      %v2550 = vadd.f32 0.0, %v2549
      %v2551 = vpop.f32.mrf.mxu0
      %2552 = vmatprep.mubr.f32.mxu0 0.0
      %2553 = vmatmul.mubr.f32.gmra.mxu0 %v2358
      %v2554 = vpop.f32.mrf.mxu0
      %v2555 = vadd.f32 0.0, %v2554
      %v2556 = vpop.f32.mrf.mxu0
      %2557 = vmatprep.mubr.f32.mxu0 0.0
      %2558 = vmatmul.mubr.f32.gmra.mxu0 %v2361
      %v2559 = vpop.f32.mrf.mxu0
      %v2560 = vadd.f32 0.0, %v2559
      %v2561 = vpop.f32.mrf.mxu0
      %2562 = vmatprep.mubr.f32.mxu0 0.0
      %2563 = vmatmul.mubr.f32.gmra.mxu0 %v2364
      %v2564 = vpop.f32.mrf.mxu0
      %v2565 = vadd.f32 0.0, %v2564
      %v2566 = vpop.f32.mrf.mxu0
      %2567 = vmatprep.mubr.f32.mxu0 0.0
      %2568 = vmatmul.mubr.f32.gmra.mxu0 %v2367
      %v2569 = vpop.f32.mrf.mxu0
      %v2570 = vadd.f32 0.0, %v2569
      %v2571 = vpop.f32.mrf.mxu0
      %2572 = vmatprep.mubr.f32.mxu0 0.0
      %2573 = vmatmul.mubr.f32.gmra.mxu0 %v2370
      %v2574 = vpop.f32.mrf.mxu0
      %v2575 = vadd.f32 0.0, %v2574
      %v2576 = vpop.f32.mrf.mxu0
      %2577 = vmatprep.mubr.f32.mxu0 0.0
      %2578 = vmatmul.mubr.f32.gmra.mxu0 %v2373
      %v2579 = vpop.f32.mrf.mxu0
      %v2580 = vadd.f32 0.0, %v2579
      %v2581 = vpop.f32.mrf.mxu0
      %2582 = vmatprep.mubr.f32.mxu0 0.0
      %2583 = vmatmul.mubr.f32.gmra.mxu0 %v2376
      %v2584 = vpop.f32.mrf.mxu0
      %v2585 = vadd.f32 0.0, %v2584
      %v2586 = vpop.f32.mrf.mxu0
      %2587 = vmatprep.mubr.f32.mxu0 0.0
      %2588 = vmatmul.mubr.f32.gmra.mxu0 %v2379
      %v2589 = vpop.f32.mrf.mxu0
      %v2590 = vadd.f32 0.0, %v2589
      %v2591 = vpop.f32.mrf.mxu0
      %2592 = vmatprep.mubr.f32.mxu0 0.0
      %2593 = vmatmul.mubr.f32.gmra.mxu0 %v2382
      %v2594 = vpop.f32.mrf.mxu0
      %v2595 = vadd.f32 0.0, %v2594
      %v2596 = vpop.f32.mrf.mxu0
      %2597 = vmatprep.mubr.f32.mxu0 0.0
      %2598 = vmatmul.mubr.f32.gmra.mxu0 %v2385
      %v2599 = vpop.f32.mrf.mxu0
      %v2600 = vadd.f32 0.0, %v2599
      %v2601 = vpop.f32.mrf.mxu0
      %2602 = vmatprep.mubr.f32.mxu0 0.0
      %2603 = vmatmul.mubr.f32.gmra.mxu0 %v2388
      %v2604 = vpop.f32.mrf.mxu0
      %v2605 = vadd.f32 0.0, %v2604
      %v2606 = vpop.f32.mrf.mxu0
      %2607 = vmatprep.mubr.f32.mxu0 0.0
      %2608 = vmatmul.mubr.f32.gmra.mxu0 %v2391
      %v2609 = vpop.f32.mrf.mxu0
      %v2610 = vadd.f32 0.0, %v2609
      %v2611 = vpop.f32.mrf.mxu0
      %2612 = vmatprep.mubr.f32.mxu0 0.0
      %2613 = vmatmul.mubr.f32.gmra.mxu0 %v2394
      %v2614 = vpop.f32.mrf.mxu0
      %v2615 = vadd.f32 0.0, %v2614
      %v2616 = vpop.f32.mrf.mxu0
      %2617 = vmatprep.mubr.f32.mxu0 0.0
      %2618 = vmatmul.mubr.f32.gmra.mxu0 %v2397
      %v2619 = vpop.f32.mrf.mxu0
      %v2620 = vadd.f32 0.0, %v2619
      %v2621 = vpop.f32.mrf.mxu0
      %2622 = vmatprep.mubr.f32.mxu0 0.0
      %2623 = vmatmul.mubr.f32.gmra.mxu0 %v2400
      %v2624 = vpop.f32.mrf.mxu0
      %v2625 = vadd.f32 0.0, %v2624
      %v2626 = vpop.f32.mrf.mxu0
      %2627 = vmatprep.mubr.f32.mxu0 0.0
      %2628 = vmatmul.mubr.f32.gmra.mxu0 %v2403
      %v2629 = vpop.f32.mrf.mxu0
      %v2630 = vadd.f32 0.0, %v2629
      %v2631 = vpop.f32.mrf.mxu0
      %2632 = vdwg.mxu0
      %v2633 = vadd.f32 %v2243, %v2475
      %v2634 = vadd.f32 %v2244, %v2480
      %v2635 = vadd.f32 %v2245, %v2485
      %v2636 = vadd.f32 %v2246, %v2490
      %v2637 = vadd.f32 %v2247, %v2495
      %v2638 = vadd.f32 %v2248, %v2500
      %v2639 = vadd.f32 %v2249, %v2505
      %v2640 = vadd.f32 %v2250, %v2510
      %v2641 = vadd.f32 %v2251, %v2515
      %v2642 = vadd.f32 %v2252, %v2520
      %v2643 = vadd.f32 %v2253, %v2525
      %v2644 = vadd.f32 %v2254, %v2530
      %v2645 = vadd.f32 %v2255, %v2535
      %v2646 = vadd.f32 %v2256, %v2540
      %v2647 = vadd.f32 %v2257, %v2545
      %v2648 = vadd.f32 %v2258, %v2550
      %v2649 = vadd.f32 %v2259, %v2555
      %v2650 = vadd.f32 %v2260, %v2560
      %v2651 = vadd.f32 %v2261, %v2565
      %v2652 = vadd.f32 %v2262, %v2570
      %v2653 = vadd.f32 %v2263, %v2575
      %v2654 = vadd.f32 %v2264, %v2580
      %v2655 = vadd.f32 %v2265, %v2585
      %v2656 = vadd.f32 %v2266, %v2590
      %v2657 = vadd.f32 %v2267, %v2595
      %v2658 = vadd.f32 %v2268, %v2600
      %v2659 = vadd.f32 %v2269, %v2605
      %v2660 = vadd.f32 %v2270, %v2610
      %v2661 = vadd.f32 %v2271, %v2615
      %v2662 = vadd.f32 %v2272, %v2620
      %v2663 = vadd.f32 %v2273, %v2625
      %v2664 = vadd.f32 %v2274, %v2630
      %v2665 = vld [vmem:[%s709 + $0x2] sm:$0xff]
      %v2666 = vld [vmem:[%s709 + $0xa] sm:$0xff]
      %v2667 = vld [vmem:[%s709 + $0x1a] sm:$0xff]
      %v2668 = vld [vmem:[%s709 + $0x22] sm:$0xff]
      %v2669 = vld [vmem:[%s709 + $0x32] sm:$0xff]
      %v2670 = vld [vmem:[%s709 + $0x3a] sm:$0xff]
      %v2671 = vld [vmem:[%s709 + $0x4a] sm:$0xff]
      %v2672 = vld [vmem:[%s709 + $0x52] sm:$0xff]
      %v2673 = vld [vmem:[%s709 + $0x62] sm:$0xff]
      %v2674 = vld [vmem:[%s709 + $0x6a] sm:$0xff]
      %v2675 = vld [vmem:[%s709 + $0x7a] sm:$0xff]
      %v2676 = vld [vmem:[%s709 + $0x82] sm:$0xff]
      %v2677 = vld [vmem:[%s709 + $0x92] sm:$0xff]
      %v2678 = vld [vmem:[%s709 + $0x9a] sm:$0xff]
      %v2679 = vld [vmem:[%s709 + $0xaa] sm:$0xff]
      %v2680 = vld [vmem:[%s709 + $0xb2] sm:$0xff]
      %v2681 = vld [vmem:[%s709 + $0xc2] sm:$0xff]
      %v2682 = vld [vmem:[%s709 + $0xca] sm:$0xff]
      %v2683 = vld [vmem:[%s709 + $0xda] sm:$0xff]
      %v2684 = vld [vmem:[%s709 + $0xe2] sm:$0xff]
      %v2685 = vld [vmem:[%s709 + $0xf2] sm:$0xff]
      %v2686 = vld [vmem:[%s709 + $0xfa] sm:$0xff]
      %v2687 = vld [vmem:[%s709 + $0x10a] sm:$0xff]
      %v2688 = vld [vmem:[%s709 + $0x112] sm:$0xff]
      %v2689 = vld [vmem:[%s709 + $0x122] sm:$0xff]
      %v2690 = vld [vmem:[%s709 + $0x12a] sm:$0xff]
      %v2691 = vld [vmem:[%s709 + $0x13a] sm:$0xff]
      %v2692 = vld [vmem:[%s709 + $0x142] sm:$0xff]
      %v2693 = vld [vmem:[%s709 + $0x152] sm:$0xff]
      %v2694 = vld [vmem:[%s709 + $0x15a] sm:$0xff]
      %v2695 = vld [vmem:[%s709 + $0x16a] sm:$0xff]
      %v2696 = vld [vmem:[%s709 + $0x172] sm:$0xff]
      %s2697 = scalar_lea.vmem %s5, 20
      %v2698 = vld [vmem:[%s2697] sm:$0xf]
      %v2700 = vsel %vm449, %v2665, 0
      %v2703 = vsel %vm449, %v2666, 0
      %v2706 = vsel %vm449, %v2667, 0
      %v2709 = vsel %vm449, %v2668, 0
      %v2712 = vsel %vm449, %v2669, 0
      %v2715 = vsel %vm449, %v2670, 0
      %v2718 = vsel %vm449, %v2671, 0
      %v2721 = vsel %vm449, %v2672, 0
      %v2724 = vsel %vm449, %v2673, 0
      %v2727 = vsel %vm449, %v2674, 0
      %v2730 = vsel %vm449, %v2675, 0
      %v2733 = vsel %vm449, %v2676, 0
      %v2736 = vsel %vm449, %v2677, 0
      %v2739 = vsel %vm449, %v2678, 0
      %v2742 = vsel %vm449, %v2679, 0
      %v2745 = vsel %vm449, %v2680, 0
      %v2748 = vsel %vm449, %v2681, 0
      %v2751 = vsel %vm449, %v2682, 0
      %v2754 = vsel %vm449, %v2683, 0
      %v2757 = vsel %vm449, %v2684, 0
      %v2760 = vsel %vm449, %v2685, 0
      %v2763 = vsel %vm449, %v2686, 0
      %v2766 = vsel %vm449, %v2687, 0
      %v2769 = vsel %vm449, %v2688, 0
      %v2772 = vsel %vm449, %v2689, 0
      %v2775 = vsel %vm449, %v2690, 0
      %v2778 = vsel %vm449, %v2691, 0
      %v2781 = vsel %vm449, %v2692, 0
      %v2784 = vsel %vm449, %v2693, 0
      %v2787 = vsel %vm449, %v2694, 0
      %v2790 = vsel %vm449, %v2695, 0
      %v2793 = vsel %vm449, %v2696, 0
      %v2796 = vsel %vm942, %v2698, 0
      %2798 = vmatprep.subr.mxu0 0.0
      %2799 = vmatpush1.msra.mxu0 0.0
      %2800 = vmatprep.subr.mxu0 0.0
      %2801 = vmatpush1.msra.mxu0 0.0
      %2802 = vmatprep.subr.mxu0 0.0
      %2803 = vmatpush1.msra.mxu0 0.0
      %2804 = vmatprep.subr.mxu0 0.0
      %2805 = vmatpush1.msra.mxu0 0.0
      %2806 = vmatprep.subr.mxu0 0.0
      %2807 = vmatpush1.msra.mxu0 0.0
      %2808 = vmatprep.subr.mxu0 0.0
      %2809 = vmatpush1.msra.mxu0 0.0
      %2810 = vmatprep.subr.mxu0 0.0
      %2811 = vmatpush1.msra.mxu0 0.0
      %2812 = vmatprep.subr.mxu0 0.0
      %2813 = vmatpush1.msra.mxu0 0.0
      %2814 = vmatprep.subr.mxu0 0.0
      %2815 = vmatpush1.msra.mxu0 0.0
      %2816 = vmatprep.subr.mxu0 0.0
      %2817 = vmatpush1.msra.mxu0 0.0
      %2818 = vmatprep.subr.mxu0 0.0
      %2819 = vmatpush1.msra.mxu0 0.0
      %2820 = vmatprep.subr.mxu0 0.0
      %2821 = vmatpush1.msra.mxu0 0.0
      %2822 = vmatprep.subr.mxu0 0.0
      %2823 = vmatpush1.msra.mxu0 0.0
      %2824 = vmatprep.subr.mxu0 0.0
      %2825 = vmatpush1.msra.mxu0 0.0
      %2826 = vmatprep.subr.mxu0 0.0
      %2827 = vmatpush1.msra.mxu0 0.0
      %2828 = vmatprep.subr.mxu0 0.0
      %2829 = vmatpush1.msra.mxu0 %v2796
      %2830 = vmatprep.subr.mxu0 0.0
      %2831 = vmatpush2.msra.mxu0 0.0
      %2832 = vmatprep.subr.mxu0 0.0
      %2833 = vmatpush2.msra.mxu0 0.0
      %2834 = vmatprep.subr.mxu0 0.0
      %2835 = vmatpush2.msra.mxu0 0.0
      %2836 = vmatprep.subr.mxu0 0.0
      %2837 = vmatpush2.msra.mxu0 0.0
      %2838 = vmatprep.subr.mxu0 0.0
      %2839 = vmatpush2.msra.mxu0 0.0
      %2840 = vmatprep.subr.mxu0 0.0
      %2841 = vmatpush2.msra.mxu0 0.0
      %2842 = vmatprep.subr.mxu0 0.0
      %2843 = vmatpush2.msra.mxu0 0.0
      %2844 = vmatprep.subr.mxu0 0.0
      %2845 = vmatpush2.msra.mxu0 0.0
      %2846 = vmatprep.subr.mxu0 0.0
      %2847 = vmatpush2.msra.mxu0 0.0
      %2848 = vmatprep.subr.mxu0 0.0
      %2849 = vmatpush2.msra.mxu0 0.0
      %2850 = vmatprep.subr.mxu0 0.0
      %2851 = vmatpush2.msra.mxu0 0.0
      %2852 = vmatprep.subr.mxu0 0.0
      %2853 = vmatpush2.msra.mxu0 0.0
      %2854 = vmatprep.subr.mxu0 0.0
      %2855 = vmatpush2.msra.mxu0 0.0
      %2856 = vmatprep.subr.mxu0 0.0
      %2857 = vmatpush2.msra.mxu0 0.0
      %2858 = vmatprep.subr.mxu0 0.0
      %2859 = vmatpush2.msra.mxu0 0.0
      %2860 = vmatprep.subr.mxu0 0.0
      %2861 = vmatpush2.msra.mxu0 0.0
      %2862 = vmatprep.mubr.f32.mxu0 0.0
      %2863 = vmatmul.mubr.f32.gmra.mxu0 %v2700
      %v2864 = vpop.f32.mrf.mxu0
      %v2865 = vadd.f32 0.0, %v2864
      %v2866 = vpop.f32.mrf.mxu0
      %2867 = vmatprep.mubr.f32.mxu0 0.0
      %2868 = vmatmul.mubr.f32.gmra.mxu0 %v2703
      %v2869 = vpop.f32.mrf.mxu0
      %v2870 = vadd.f32 0.0, %v2869
      %v2871 = vpop.f32.mrf.mxu0
      %2872 = vmatprep.mubr.f32.mxu0 0.0
      %2873 = vmatmul.mubr.f32.gmra.mxu0 %v2706
      %v2874 = vpop.f32.mrf.mxu0
      %v2875 = vadd.f32 0.0, %v2874
      %v2876 = vpop.f32.mrf.mxu0
      %2877 = vmatprep.mubr.f32.mxu0 0.0
      %2878 = vmatmul.mubr.f32.gmra.mxu0 %v2709
      %v2879 = vpop.f32.mrf.mxu0
      %v2880 = vadd.f32 0.0, %v2879
      %v2881 = vpop.f32.mrf.mxu0
      %2882 = vmatprep.mubr.f32.mxu0 0.0
      %2883 = vmatmul.mubr.f32.gmra.mxu0 %v2712
      %v2884 = vpop.f32.mrf.mxu0
      %v2885 = vadd.f32 0.0, %v2884
      %v2886 = vpop.f32.mrf.mxu0
      %2887 = vmatprep.mubr.f32.mxu0 0.0
      %2888 = vmatmul.mubr.f32.gmra.mxu0 %v2715
      %v2889 = vpop.f32.mrf.mxu0
      %v2890 = vadd.f32 0.0, %v2889
      %v2891 = vpop.f32.mrf.mxu0
      %2892 = vmatprep.mubr.f32.mxu0 0.0
      %2893 = vmatmul.mubr.f32.gmra.mxu0 %v2718
      %v2894 = vpop.f32.mrf.mxu0
      %v2895 = vadd.f32 0.0, %v2894
      %v2896 = vpop.f32.mrf.mxu0
      %2897 = vmatprep.mubr.f32.mxu0 0.0
      %2898 = vmatmul.mubr.f32.gmra.mxu0 %v2721
      %v2899 = vpop.f32.mrf.mxu0
      %v2900 = vadd.f32 0.0, %v2899
      %v2901 = vpop.f32.mrf.mxu0
      %2902 = vmatprep.mubr.f32.mxu0 0.0
      %2903 = vmatmul.mubr.f32.gmra.mxu0 %v2724
      %v2904 = vpop.f32.mrf.mxu0
      %v2905 = vadd.f32 0.0, %v2904
      %v2906 = vpop.f32.mrf.mxu0
      %2907 = vmatprep.mubr.f32.mxu0 0.0
      %2908 = vmatmul.mubr.f32.gmra.mxu0 %v2727
      %v2909 = vpop.f32.mrf.mxu0
      %v2910 = vadd.f32 0.0, %v2909
      %v2911 = vpop.f32.mrf.mxu0
      %2912 = vmatprep.mubr.f32.mxu0 0.0
      %2913 = vmatmul.mubr.f32.gmra.mxu0 %v2730
      %v2914 = vpop.f32.mrf.mxu0
      %v2915 = vadd.f32 0.0, %v2914
      %v2916 = vpop.f32.mrf.mxu0
      %2917 = vmatprep.mubr.f32.mxu0 0.0
      %2918 = vmatmul.mubr.f32.gmra.mxu0 %v2733
      %v2919 = vpop.f32.mrf.mxu0
      %v2920 = vadd.f32 0.0, %v2919
      %v2921 = vpop.f32.mrf.mxu0
      %2922 = vmatprep.mubr.f32.mxu0 0.0
      %2923 = vmatmul.mubr.f32.gmra.mxu0 %v2736
      %v2924 = vpop.f32.mrf.mxu0
      %v2925 = vadd.f32 0.0, %v2924
      %v2926 = vpop.f32.mrf.mxu0
      %2927 = vmatprep.mubr.f32.mxu0 0.0
      %2928 = vmatmul.mubr.f32.gmra.mxu0 %v2739
      %v2929 = vpop.f32.mrf.mxu0
      %v2930 = vadd.f32 0.0, %v2929
      %v2931 = vpop.f32.mrf.mxu0
      %2932 = vmatprep.mubr.f32.mxu0 0.0
      %2933 = vmatmul.mubr.f32.gmra.mxu0 %v2742
      %v2934 = vpop.f32.mrf.mxu0
      %v2935 = vadd.f32 0.0, %v2934
      %v2936 = vpop.f32.mrf.mxu0
      %2937 = vmatprep.mubr.f32.mxu0 0.0
      %2938 = vmatmul.mubr.f32.gmra.mxu0 %v2745
      %v2939 = vpop.f32.mrf.mxu0
      %v2940 = vadd.f32 0.0, %v2939
      %v2941 = vpop.f32.mrf.mxu0
      %2942 = vmatprep.mubr.f32.mxu0 0.0
      %2943 = vmatmul.mubr.f32.gmra.mxu0 %v2748
      %v2944 = vpop.f32.mrf.mxu0
      %v2945 = vadd.f32 0.0, %v2944
      %v2946 = vpop.f32.mrf.mxu0
      %2947 = vmatprep.mubr.f32.mxu0 0.0
      %2948 = vmatmul.mubr.f32.gmra.mxu0 %v2751
      %v2949 = vpop.f32.mrf.mxu0
      %v2950 = vadd.f32 0.0, %v2949
      %v2951 = vpop.f32.mrf.mxu0
      %2952 = vmatprep.mubr.f32.mxu0 0.0
      %2953 = vmatmul.mubr.f32.gmra.mxu0 %v2754
      %v2954 = vpop.f32.mrf.mxu0
      %v2955 = vadd.f32 0.0, %v2954
      %v2956 = vpop.f32.mrf.mxu0
      %2957 = vmatprep.mubr.f32.mxu0 0.0
      %2958 = vmatmul.mubr.f32.gmra.mxu0 %v2757
      %v2959 = vpop.f32.mrf.mxu0
      %v2960 = vadd.f32 0.0, %v2959
      %v2961 = vpop.f32.mrf.mxu0
      %2962 = vmatprep.mubr.f32.mxu0 0.0
      %2963 = vmatmul.mubr.f32.gmra.mxu0 %v2760
      %v2964 = vpop.f32.mrf.mxu0
      %v2965 = vadd.f32 0.0, %v2964
      %v2966 = vpop.f32.mrf.mxu0
      %2967 = vmatprep.mubr.f32.mxu0 0.0
      %2968 = vmatmul.mubr.f32.gmra.mxu0 %v2763
      %v2969 = vpop.f32.mrf.mxu0
      %v2970 = vadd.f32 0.0, %v2969
      %v2971 = vpop.f32.mrf.mxu0
      %2972 = vmatprep.mubr.f32.mxu0 0.0
      %2973 = vmatmul.mubr.f32.gmra.mxu0 %v2766
      %v2974 = vpop.f32.mrf.mxu0
      %v2975 = vadd.f32 0.0, %v2974
      %v2976 = vpop.f32.mrf.mxu0
      %2977 = vmatprep.mubr.f32.mxu0 0.0
      %2978 = vmatmul.mubr.f32.gmra.mxu0 %v2769
      %v2979 = vpop.f32.mrf.mxu0
      %v2980 = vadd.f32 0.0, %v2979
      %v2981 = vpop.f32.mrf.mxu0
      %2982 = vmatprep.mubr.f32.mxu0 0.0
      %2983 = vmatmul.mubr.f32.gmra.mxu0 %v2772
      %v2984 = vpop.f32.mrf.mxu0
      %v2985 = vadd.f32 0.0, %v2984
      %v2986 = vpop.f32.mrf.mxu0
      %2987 = vmatprep.mubr.f32.mxu0 0.0
      %2988 = vmatmul.mubr.f32.gmra.mxu0 %v2775
      %v2989 = vpop.f32.mrf.mxu0
      %v2990 = vadd.f32 0.0, %v2989
      %v2991 = vpop.f32.mrf.mxu0
      %2992 = vmatprep.mubr.f32.mxu0 0.0
      %2993 = vmatmul.mubr.f32.gmra.mxu0 %v2778
      %v2994 = vpop.f32.mrf.mxu0
      %v2995 = vadd.f32 0.0, %v2994
      %v2996 = vpop.f32.mrf.mxu0
      %2997 = vmatprep.mubr.f32.mxu0 0.0
      %2998 = vmatmul.mubr.f32.gmra.mxu0 %v2781
      %v2999 = vpop.f32.mrf.mxu0
      %v3000 = vadd.f32 0.0, %v2999
      %v3001 = vpop.f32.mrf.mxu0
      %3002 = vmatprep.mubr.f32.mxu0 0.0
      %3003 = vmatmul.mubr.f32.gmra.mxu0 %v2784
      %v3004 = vpop.f32.mrf.mxu0
      %v3005 = vadd.f32 0.0, %v3004
      %v3006 = vpop.f32.mrf.mxu0
      %3007 = vmatprep.mubr.f32.mxu0 0.0
      %3008 = vmatmul.mubr.f32.gmra.mxu0 %v2787
      %v3009 = vpop.f32.mrf.mxu0
      %v3010 = vadd.f32 0.0, %v3009
      %v3011 = vpop.f32.mrf.mxu0
      %3012 = vmatprep.mubr.f32.mxu0 0.0
      %3013 = vmatmul.mubr.f32.gmra.mxu0 %v2790
      %v3014 = vpop.f32.mrf.mxu0
      %v3015 = vadd.f32 0.0, %v3014
      %v3016 = vpop.f32.mrf.mxu0
      %3017 = vmatprep.mubr.f32.mxu0 0.0
      %3018 = vmatmul.mubr.f32.gmra.mxu0 %v2793
      %v3019 = vpop.f32.mrf.mxu0
      %v3020 = vadd.f32 0.0, %v3019
      %v3021 = vpop.f32.mrf.mxu0
      %3022 = vdwg.mxu0
      %v3023 = vadd.f32 %v2633, %v2865
      %v3024 = vadd.f32 %v2634, %v2870
      %v3025 = vadd.f32 %v2635, %v2875
      %v3026 = vadd.f32 %v2636, %v2880
      %v3027 = vadd.f32 %v2637, %v2885
      %v3028 = vadd.f32 %v2638, %v2890
      %v3029 = vadd.f32 %v2639, %v2895
      %v3030 = vadd.f32 %v2640, %v2900
      %v3031 = vadd.f32 %v2641, %v2905
      %v3032 = vadd.f32 %v2642, %v2910
      %v3033 = vadd.f32 %v2643, %v2915
      %v3034 = vadd.f32 %v2644, %v2920
      %v3035 = vadd.f32 %v2645, %v2925
      %v3036 = vadd.f32 %v2646, %v2930
      %v3037 = vadd.f32 %v2647, %v2935
      %v3038 = vadd.f32 %v2648, %v2940
      %v3039 = vadd.f32 %v2649, %v2945
      %v3040 = vadd.f32 %v2650, %v2950
      %v3041 = vadd.f32 %v2651, %v2955
      %v3042 = vadd.f32 %v2652, %v2960
      %v3043 = vadd.f32 %v2653, %v2965
      %v3044 = vadd.f32 %v2654, %v2970
      %v3045 = vadd.f32 %v2655, %v2975
      %v3046 = vadd.f32 %v2656, %v2980
      %v3047 = vadd.f32 %v2657, %v2985
      %v3048 = vadd.f32 %v2658, %v2990
      %v3049 = vadd.f32 %v2659, %v2995
      %v3050 = vadd.f32 %v2660, %v3000
      %v3051 = vadd.f32 %v2661, %v3005
      %v3052 = vadd.f32 %v2662, %v3010
      %v3053 = vadd.f32 %v2663, %v3015
      %v3054 = vadd.f32 %v2664, %v3020
      %s3055 = scalar_lea.vmem [#allocation2], 48
      %v3056 = vld [vmem:[%s3055] sm:$0xff]
      %v3057 = vld [vmem:[%s3055 + $0x8] sm:$0xff]
      %v3058 = vld [vmem:[%s3055 + $0x18] sm:$0xff]
      %v3059 = vld [vmem:[%s3055 + $0x20] sm:$0xff]
      %v3060 = vld [vmem:[%s3055 + $0x30] sm:$0xff]
      %v3061 = vld [vmem:[%s3055 + $0x38] sm:$0xff]
      %v3062 = vld [vmem:[%s3055 + $0x48] sm:$0xff]
      %v3063 = vld [vmem:[%s3055 + $0x50] sm:$0xff]
      %v3064 = vld [vmem:[%s3055 + $0x60] sm:$0xff]
      %v3065 = vld [vmem:[%s3055 + $0x68] sm:$0xff]
      %v3066 = vld [vmem:[%s3055 + $0x78] sm:$0xff]
      %v3067 = vld [vmem:[%s3055 + $0x80] sm:$0xff]
      %v3068 = vld [vmem:[%s3055 + $0x90] sm:$0xff]
      %v3069 = vld [vmem:[%s3055 + $0x98] sm:$0xff]
      %v3070 = vld [vmem:[%s3055 + $0xa8] sm:$0xff]
      %v3071 = vld [vmem:[%s3055 + $0xb0] sm:$0xff]
      %v3072 = vld [vmem:[%s3055 + $0xc0] sm:$0xff]
      %v3073 = vld [vmem:[%s3055 + $0xc8] sm:$0xff]
      %v3074 = vld [vmem:[%s3055 + $0xd8] sm:$0xff]
      %v3075 = vld [vmem:[%s3055 + $0xe0] sm:$0xff]
      %v3076 = vld [vmem:[%s3055 + $0xf0] sm:$0xff]
      %v3077 = vld [vmem:[%s3055 + $0xf8] sm:$0xff]
      %v3078 = vld [vmem:[%s3055 + $0x108] sm:$0xff]
      %v3079 = vld [vmem:[%s3055 + $0x110] sm:$0xff]
      %v3080 = vld [vmem:[%s3055 + $0x120] sm:$0xff]
      %v3081 = vld [vmem:[%s3055 + $0x128] sm:$0xff]
      %v3082 = vld [vmem:[%s3055 + $0x138] sm:$0xff]
      %v3083 = vld [vmem:[%s3055 + $0x140] sm:$0xff]
      %v3084 = vld [vmem:[%s3055 + $0x150] sm:$0xff]
      %v3085 = vld [vmem:[%s3055 + $0x158] sm:$0xff]
      %v3086 = vld [vmem:[%s3055 + $0x168] sm:$0xff]
      %v3087 = vld [vmem:[%s3055 + $0x170] sm:$0xff]
      %s3088 = scalar_lea.vmem %s5, 24
      %v3089 = vld [vmem:[%s3088] sm:$0xf]
      %v3091 = vsel %vm449, %v3056, 0
      %v3094 = vsel %vm449, %v3057, 0
      %v3097 = vsel %vm449, %v3058, 0
      %v3100 = vsel %vm449, %v3059, 0
      %v3103 = vsel %vm449, %v3060, 0
      %v3106 = vsel %vm449, %v3061, 0
      %v3109 = vsel %vm449, %v3062, 0
      %v3112 = vsel %vm449, %v3063, 0
      %v3115 = vsel %vm449, %v3064, 0
      %v3118 = vsel %vm449, %v3065, 0
      %v3121 = vsel %vm449, %v3066, 0
      %v3124 = vsel %vm449, %v3067, 0
      %v3127 = vsel %vm449, %v3068, 0
      %v3130 = vsel %vm449, %v3069, 0
      %v3133 = vsel %vm449, %v3070, 0
      %v3136 = vsel %vm449, %v3071, 0
      %v3139 = vsel %vm449, %v3072, 0
      %v3142 = vsel %vm449, %v3073, 0
      %v3145 = vsel %vm449, %v3074, 0
      %v3148 = vsel %vm449, %v3075, 0
      %v3151 = vsel %vm449, %v3076, 0
      %v3154 = vsel %vm449, %v3077, 0
      %v3157 = vsel %vm449, %v3078, 0
      %v3160 = vsel %vm449, %v3079, 0
      %v3163 = vsel %vm449, %v3080, 0
      %v3166 = vsel %vm449, %v3081, 0
      %v3169 = vsel %vm449, %v3082, 0
      %v3172 = vsel %vm449, %v3083, 0
      %v3175 = vsel %vm449, %v3084, 0
      %v3178 = vsel %vm449, %v3085, 0
      %v3181 = vsel %vm449, %v3086, 0
      %v3184 = vsel %vm449, %v3087, 0
      %v3187 = vsel %vm942, %v3089, 0
      %3189 = vmatprep.subr.mxu0 0.0
      %3190 = vmatpush1.msra.mxu0 0.0
      %3191 = vmatprep.subr.mxu0 0.0
      %3192 = vmatpush1.msra.mxu0 0.0
      %3193 = vmatprep.subr.mxu0 0.0
      %3194 = vmatpush1.msra.mxu0 0.0
      %3195 = vmatprep.subr.mxu0 0.0
      %3196 = vmatpush1.msra.mxu0 0.0
      %3197 = vmatprep.subr.mxu0 0.0
      %3198 = vmatpush1.msra.mxu0 0.0
      %3199 = vmatprep.subr.mxu0 0.0
      %3200 = vmatpush1.msra.mxu0 0.0
      %3201 = vmatprep.subr.mxu0 0.0
      %3202 = vmatpush1.msra.mxu0 0.0
      %3203 = vmatprep.subr.mxu0 0.0
      %3204 = vmatpush1.msra.mxu0 0.0
      %3205 = vmatprep.subr.mxu0 0.0
      %3206 = vmatpush1.msra.mxu0 0.0
      %3207 = vmatprep.subr.mxu0 0.0
      %3208 = vmatpush1.msra.mxu0 0.0
      %3209 = vmatprep.subr.mxu0 0.0
      %3210 = vmatpush1.msra.mxu0 0.0
      %3211 = vmatprep.subr.mxu0 0.0
      %3212 = vmatpush1.msra.mxu0 0.0
      %3213 = vmatprep.subr.mxu0 0.0
      %3214 = vmatpush1.msra.mxu0 0.0
      %3215 = vmatprep.subr.mxu0 0.0
      %3216 = vmatpush1.msra.mxu0 0.0
      %3217 = vmatprep.subr.mxu0 0.0
      %3218 = vmatpush1.msra.mxu0 0.0
      %3219 = vmatprep.subr.mxu0 0.0
      %3220 = vmatpush1.msra.mxu0 %v3187
      %3221 = vmatprep.subr.mxu0 0.0
      %3222 = vmatpush2.msra.mxu0 0.0
      %3223 = vmatprep.subr.mxu0 0.0
      %3224 = vmatpush2.msra.mxu0 0.0
      %3225 = vmatprep.subr.mxu0 0.0
      %3226 = vmatpush2.msra.mxu0 0.0
      %3227 = vmatprep.subr.mxu0 0.0
      %3228 = vmatpush2.msra.mxu0 0.0
      %3229 = vmatprep.subr.mxu0 0.0
      %3230 = vmatpush2.msra.mxu0 0.0
      %3231 = vmatprep.subr.mxu0 0.0
      %3232 = vmatpush2.msra.mxu0 0.0
      %3233 = vmatprep.subr.mxu0 0.0
      %3234 = vmatpush2.msra.mxu0 0.0
      %3235 = vmatprep.subr.mxu0 0.0
      %3236 = vmatpush2.msra.mxu0 0.0
      %3237 = vmatprep.subr.mxu0 0.0
      %3238 = vmatpush2.msra.mxu0 0.0
      %3239 = vmatprep.subr.mxu0 0.0
      %3240 = vmatpush2.msra.mxu0 0.0
      %3241 = vmatprep.subr.mxu0 0.0
      %3242 = vmatpush2.msra.mxu0 0.0
      %3243 = vmatprep.subr.mxu0 0.0
      %3244 = vmatpush2.msra.mxu0 0.0
      %3245 = vmatprep.subr.mxu0 0.0
      %3246 = vmatpush2.msra.mxu0 0.0
      %3247 = vmatprep.subr.mxu0 0.0
      %3248 = vmatpush2.msra.mxu0 0.0
      %3249 = vmatprep.subr.mxu0 0.0
      %3250 = vmatpush2.msra.mxu0 0.0
      %3251 = vmatprep.subr.mxu0 0.0
      %3252 = vmatpush2.msra.mxu0 0.0
      %3253 = vmatprep.mubr.f32.mxu0 0.0
      %3254 = vmatmul.mubr.f32.gmra.mxu0 %v3091
      %v3255 = vpop.f32.mrf.mxu0
      %v3256 = vadd.f32 0.0, %v3255
      %v3257 = vpop.f32.mrf.mxu0
      %3258 = vmatprep.mubr.f32.mxu0 0.0
      %3259 = vmatmul.mubr.f32.gmra.mxu0 %v3094
      %v3260 = vpop.f32.mrf.mxu0
      %v3261 = vadd.f32 0.0, %v3260
      %v3262 = vpop.f32.mrf.mxu0
      %3263 = vmatprep.mubr.f32.mxu0 0.0
      %3264 = vmatmul.mubr.f32.gmra.mxu0 %v3097
      %v3265 = vpop.f32.mrf.mxu0
      %v3266 = vadd.f32 0.0, %v3265
      %v3267 = vpop.f32.mrf.mxu0
      %3268 = vmatprep.mubr.f32.mxu0 0.0
      %3269 = vmatmul.mubr.f32.gmra.mxu0 %v3100
      %v3270 = vpop.f32.mrf.mxu0
      %v3271 = vadd.f32 0.0, %v3270
      %v3272 = vpop.f32.mrf.mxu0
      %3273 = vmatprep.mubr.f32.mxu0 0.0
      %3274 = vmatmul.mubr.f32.gmra.mxu0 %v3103
      %v3275 = vpop.f32.mrf.mxu0
      %v3276 = vadd.f32 0.0, %v3275
      %v3277 = vpop.f32.mrf.mxu0
      %3278 = vmatprep.mubr.f32.mxu0 0.0
      %3279 = vmatmul.mubr.f32.gmra.mxu0 %v3106
      %v3280 = vpop.f32.mrf.mxu0
      %v3281 = vadd.f32 0.0, %v3280
      %v3282 = vpop.f32.mrf.mxu0
      %3283 = vmatprep.mubr.f32.mxu0 0.0
      %3284 = vmatmul.mubr.f32.gmra.mxu0 %v3109
      %v3285 = vpop.f32.mrf.mxu0
      %v3286 = vadd.f32 0.0, %v3285
      %v3287 = vpop.f32.mrf.mxu0
      %3288 = vmatprep.mubr.f32.mxu0 0.0
      %3289 = vmatmul.mubr.f32.gmra.mxu0 %v3112
      %v3290 = vpop.f32.mrf.mxu0
      %v3291 = vadd.f32 0.0, %v3290
      %v3292 = vpop.f32.mrf.mxu0
      %3293 = vmatprep.mubr.f32.mxu0 0.0
      %3294 = vmatmul.mubr.f32.gmra.mxu0 %v3115
      %v3295 = vpop.f32.mrf.mxu0
      %v3296 = vadd.f32 0.0, %v3295
      %v3297 = vpop.f32.mrf.mxu0
      %3298 = vmatprep.mubr.f32.mxu0 0.0
      %3299 = vmatmul.mubr.f32.gmra.mxu0 %v3118
      %v3300 = vpop.f32.mrf.mxu0
      %v3301 = vadd.f32 0.0, %v3300
      %v3302 = vpop.f32.mrf.mxu0
      %3303 = vmatprep.mubr.f32.mxu0 0.0
      %3304 = vmatmul.mubr.f32.gmra.mxu0 %v3121
      %v3305 = vpop.f32.mrf.mxu0
      %v3306 = vadd.f32 0.0, %v3305
      %v3307 = vpop.f32.mrf.mxu0
      %3308 = vmatprep.mubr.f32.mxu0 0.0
      %3309 = vmatmul.mubr.f32.gmra.mxu0 %v3124
      %v3310 = vpop.f32.mrf.mxu0
      %v3311 = vadd.f32 0.0, %v3310
      %v3312 = vpop.f32.mrf.mxu0
      %3313 = vmatprep.mubr.f32.mxu0 0.0
      %3314 = vmatmul.mubr.f32.gmra.mxu0 %v3127
      %v3315 = vpop.f32.mrf.mxu0
      %v3316 = vadd.f32 0.0, %v3315
      %v3317 = vpop.f32.mrf.mxu0
      %3318 = vmatprep.mubr.f32.mxu0 0.0
      %3319 = vmatmul.mubr.f32.gmra.mxu0 %v3130
      %v3320 = vpop.f32.mrf.mxu0
      %v3321 = vadd.f32 0.0, %v3320
      %v3322 = vpop.f32.mrf.mxu0
      %3323 = vmatprep.mubr.f32.mxu0 0.0
      %3324 = vmatmul.mubr.f32.gmra.mxu0 %v3133
      %v3325 = vpop.f32.mrf.mxu0
      %v3326 = vadd.f32 0.0, %v3325
      %v3327 = vpop.f32.mrf.mxu0
      %3328 = vmatprep.mubr.f32.mxu0 0.0
      %3329 = vmatmul.mubr.f32.gmra.mxu0 %v3136
      %v3330 = vpop.f32.mrf.mxu0
      %v3331 = vadd.f32 0.0, %v3330
      %v3332 = vpop.f32.mrf.mxu0
      %3333 = vmatprep.mubr.f32.mxu0 0.0
      %3334 = vmatmul.mubr.f32.gmra.mxu0 %v3139
      %v3335 = vpop.f32.mrf.mxu0
      %v3336 = vadd.f32 0.0, %v3335
      %v3337 = vpop.f32.mrf.mxu0
      %3338 = vmatprep.mubr.f32.mxu0 0.0
      %3339 = vmatmul.mubr.f32.gmra.mxu0 %v3142
      %v3340 = vpop.f32.mrf.mxu0
      %v3341 = vadd.f32 0.0, %v3340
      %v3342 = vpop.f32.mrf.mxu0
      %3343 = vmatprep.mubr.f32.mxu0 0.0
      %3344 = vmatmul.mubr.f32.gmra.mxu0 %v3145
      %v3345 = vpop.f32.mrf.mxu0
      %v3346 = vadd.f32 0.0, %v3345
      %v3347 = vpop.f32.mrf.mxu0
      %3348 = vmatprep.mubr.f32.mxu0 0.0
      %3349 = vmatmul.mubr.f32.gmra.mxu0 %v3148
      %v3350 = vpop.f32.mrf.mxu0
      %v3351 = vadd.f32 0.0, %v3350
      %v3352 = vpop.f32.mrf.mxu0
      %3353 = vmatprep.mubr.f32.mxu0 0.0
      %3354 = vmatmul.mubr.f32.gmra.mxu0 %v3151
      %v3355 = vpop.f32.mrf.mxu0
      %v3356 = vadd.f32 0.0, %v3355
      %v3357 = vpop.f32.mrf.mxu0
      %3358 = vmatprep.mubr.f32.mxu0 0.0
      %3359 = vmatmul.mubr.f32.gmra.mxu0 %v3154
      %v3360 = vpop.f32.mrf.mxu0
      %v3361 = vadd.f32 0.0, %v3360
      %v3362 = vpop.f32.mrf.mxu0
      %3363 = vmatprep.mubr.f32.mxu0 0.0
      %3364 = vmatmul.mubr.f32.gmra.mxu0 %v3157
      %v3365 = vpop.f32.mrf.mxu0
      %v3366 = vadd.f32 0.0, %v3365
      %v3367 = vpop.f32.mrf.mxu0
      %3368 = vmatprep.mubr.f32.mxu0 0.0
      %3369 = vmatmul.mubr.f32.gmra.mxu0 %v3160
      %v3370 = vpop.f32.mrf.mxu0
      %v3371 = vadd.f32 0.0, %v3370
      %v3372 = vpop.f32.mrf.mxu0
      %3373 = vmatprep.mubr.f32.mxu0 0.0
      %3374 = vmatmul.mubr.f32.gmra.mxu0 %v3163
      %v3375 = vpop.f32.mrf.mxu0
      %v3376 = vadd.f32 0.0, %v3375
      %v3377 = vpop.f32.mrf.mxu0
      %3378 = vmatprep.mubr.f32.mxu0 0.0
      %3379 = vmatmul.mubr.f32.gmra.mxu0 %v3166
      %v3380 = vpop.f32.mrf.mxu0
      %v3381 = vadd.f32 0.0, %v3380
      %v3382 = vpop.f32.mrf.mxu0
      %3383 = vmatprep.mubr.f32.mxu0 0.0
      %3384 = vmatmul.mubr.f32.gmra.mxu0 %v3169
      %v3385 = vpop.f32.mrf.mxu0
      %v3386 = vadd.f32 0.0, %v3385
      %v3387 = vpop.f32.mrf.mxu0
      %3388 = vmatprep.mubr.f32.mxu0 0.0
      %3389 = vmatmul.mubr.f32.gmra.mxu0 %v3172
      %v3390 = vpop.f32.mrf.mxu0
      %v3391 = vadd.f32 0.0, %v3390
      %v3392 = vpop.f32.mrf.mxu0
      %3393 = vmatprep.mubr.f32.mxu0 0.0
      %3394 = vmatmul.mubr.f32.gmra.mxu0 %v3175
      %v3395 = vpop.f32.mrf.mxu0
      %v3396 = vadd.f32 0.0, %v3395
      %v3397 = vpop.f32.mrf.mxu0
      %3398 = vmatprep.mubr.f32.mxu0 0.0
      %3399 = vmatmul.mubr.f32.gmra.mxu0 %v3178
      %v3400 = vpop.f32.mrf.mxu0
      %v3401 = vadd.f32 0.0, %v3400
      %v3402 = vpop.f32.mrf.mxu0
      %3403 = vmatprep.mubr.f32.mxu0 0.0
      %3404 = vmatmul.mubr.f32.gmra.mxu0 %v3181
      %v3405 = vpop.f32.mrf.mxu0
      %v3406 = vadd.f32 0.0, %v3405
      %v3407 = vpop.f32.mrf.mxu0
      %3408 = vmatprep.mubr.f32.mxu0 0.0
      %3409 = vmatmul.mubr.f32.gmra.mxu0 %v3184
      %v3410 = vpop.f32.mrf.mxu0
      %v3411 = vadd.f32 0.0, %v3410
      %v3412 = vpop.f32.mrf.mxu0
      %3413 = vdwg.mxu0
      %v3414 = vadd.f32 %v3023, %v3256
      %v3415 = vadd.f32 %v3024, %v3261
      %v3416 = vadd.f32 %v3025, %v3266
      %v3417 = vadd.f32 %v3026, %v3271
      %v3418 = vadd.f32 %v3027, %v3276
      %v3419 = vadd.f32 %v3028, %v3281
      %v3420 = vadd.f32 %v3029, %v3286
      %v3421 = vadd.f32 %v3030, %v3291
      %v3422 = vadd.f32 %v3031, %v3296
      %v3423 = vadd.f32 %v3032, %v3301
      %v3424 = vadd.f32 %v3033, %v3306
      %v3425 = vadd.f32 %v3034, %v3311
      %v3426 = vadd.f32 %v3035, %v3316
      %v3427 = vadd.f32 %v3036, %v3321
      %v3428 = vadd.f32 %v3037, %v3326
      %v3429 = vadd.f32 %v3038, %v3331
      %v3430 = vadd.f32 %v3039, %v3336
      %v3431 = vadd.f32 %v3040, %v3341
      %v3432 = vadd.f32 %v3041, %v3346
      %v3433 = vadd.f32 %v3042, %v3351
      %v3434 = vadd.f32 %v3043, %v3356
      %v3435 = vadd.f32 %v3044, %v3361
      %v3436 = vadd.f32 %v3045, %v3366
      %v3437 = vadd.f32 %v3046, %v3371
      %v3438 = vadd.f32 %v3047, %v3376
      %v3439 = vadd.f32 %v3048, %v3381
      %v3440 = vadd.f32 %v3049, %v3386
      %v3441 = vadd.f32 %v3050, %v3391
      %v3442 = vadd.f32 %v3051, %v3396
      %v3443 = vadd.f32 %v3052, %v3401
      %v3444 = vadd.f32 %v3053, %v3406
      %v3445 = vadd.f32 %v3054, %v3411
      %v3446 = vld [vmem:[%s3055 + $0x1] sm:$0xff]
      %v3447 = vld [vmem:[%s3055 + $0x9] sm:$0xff]
      %v3448 = vld [vmem:[%s3055 + $0x19] sm:$0xff]
      %v3449 = vld [vmem:[%s3055 + $0x21] sm:$0xff]
      %v3450 = vld [vmem:[%s3055 + $0x31] sm:$0xff]
      %v3451 = vld [vmem:[%s3055 + $0x39] sm:$0xff]
      %v3452 = vld [vmem:[%s3055 + $0x49] sm:$0xff]
      %v3453 = vld [vmem:[%s3055 + $0x51] sm:$0xff]
      %v3454 = vld [vmem:[%s3055 + $0x61] sm:$0xff]
      %v3455 = vld [vmem:[%s3055 + $0x69] sm:$0xff]
      %v3456 = vld [vmem:[%s3055 + $0x79] sm:$0xff]
      %v3457 = vld [vmem:[%s3055 + $0x81] sm:$0xff]
      %v3458 = vld [vmem:[%s3055 + $0x91] sm:$0xff]
      %v3459 = vld [vmem:[%s3055 + $0x99] sm:$0xff]
      %v3460 = vld [vmem:[%s3055 + $0xa9] sm:$0xff]
      %v3461 = vld [vmem:[%s3055 + $0xb1] sm:$0xff]
      %v3462 = vld [vmem:[%s3055 + $0xc1] sm:$0xff]
      %v3463 = vld [vmem:[%s3055 + $0xc9] sm:$0xff]
      %v3464 = vld [vmem:[%s3055 + $0xd9] sm:$0xff]
      %v3465 = vld [vmem:[%s3055 + $0xe1] sm:$0xff]
      %v3466 = vld [vmem:[%s3055 + $0xf1] sm:$0xff]
      %v3467 = vld [vmem:[%s3055 + $0xf9] sm:$0xff]
      %v3468 = vld [vmem:[%s3055 + $0x109] sm:$0xff]
      %v3469 = vld [vmem:[%s3055 + $0x111] sm:$0xff]
      %v3470 = vld [vmem:[%s3055 + $0x121] sm:$0xff]
      %v3471 = vld [vmem:[%s3055 + $0x129] sm:$0xff]
      %v3472 = vld [vmem:[%s3055 + $0x139] sm:$0xff]
      %v3473 = vld [vmem:[%s3055 + $0x141] sm:$0xff]
      %v3474 = vld [vmem:[%s3055 + $0x151] sm:$0xff]
      %v3475 = vld [vmem:[%s3055 + $0x159] sm:$0xff]
      %v3476 = vld [vmem:[%s3055 + $0x169] sm:$0xff]
      %v3477 = vld [vmem:[%s3055 + $0x171] sm:$0xff]
      %s3478 = scalar_lea.vmem %s5, 28
      %v3479 = vld [vmem:[%s3478] sm:$0xf]
      %v3481 = vsel %vm449, %v3446, 0
      %v3484 = vsel %vm449, %v3447, 0
      %v3487 = vsel %vm449, %v3448, 0
      %v3490 = vsel %vm449, %v3449, 0
      %v3493 = vsel %vm449, %v3450, 0
      %v3496 = vsel %vm449, %v3451, 0
      %v3499 = vsel %vm449, %v3452, 0
      %v3502 = vsel %vm449, %v3453, 0
      %v3505 = vsel %vm449, %v3454, 0
      %v3508 = vsel %vm449, %v3455, 0
      %v3511 = vsel %vm449, %v3456, 0
      %v3514 = vsel %vm449, %v3457, 0
      %v3517 = vsel %vm449, %v3458, 0
      %v3520 = vsel %vm449, %v3459, 0
      %v3523 = vsel %vm449, %v3460, 0
      %v3526 = vsel %vm449, %v3461, 0
      %v3529 = vsel %vm449, %v3462, 0
      %v3532 = vsel %vm449, %v3463, 0
      %v3535 = vsel %vm449, %v3464, 0
      %v3538 = vsel %vm449, %v3465, 0
      %v3541 = vsel %vm449, %v3466, 0
      %v3544 = vsel %vm449, %v3467, 0
      %v3547 = vsel %vm449, %v3468, 0
      %v3550 = vsel %vm449, %v3469, 0
      %v3553 = vsel %vm449, %v3470, 0
      %v3556 = vsel %vm449, %v3471, 0
      %v3559 = vsel %vm449, %v3472, 0
      %v3562 = vsel %vm449, %v3473, 0
      %v3565 = vsel %vm449, %v3474, 0
      %v3568 = vsel %vm449, %v3475, 0
      %v3571 = vsel %vm449, %v3476, 0
      %v3574 = vsel %vm449, %v3477, 0
      %v3577 = vsel %vm942, %v3479, 0
      %3579 = vmatprep.subr.mxu0 0.0
      %3580 = vmatpush1.msra.mxu0 0.0
      %3581 = vmatprep.subr.mxu0 0.0
      %3582 = vmatpush1.msra.mxu0 0.0
      %3583 = vmatprep.subr.mxu0 0.0
      %3584 = vmatpush1.msra.mxu0 0.0
      %3585 = vmatprep.subr.mxu0 0.0
      %3586 = vmatpush1.msra.mxu0 0.0
      %3587 = vmatprep.subr.mxu0 0.0
      %3588 = vmatpush1.msra.mxu0 0.0
      %3589 = vmatprep.subr.mxu0 0.0
      %3590 = vmatpush1.msra.mxu0 0.0
      %3591 = vmatprep.subr.mxu0 0.0
      %3592 = vmatpush1.msra.mxu0 0.0
      %3593 = vmatprep.subr.mxu0 0.0
      %3594 = vmatpush1.msra.mxu0 0.0
      %3595 = vmatprep.subr.mxu0 0.0
      %3596 = vmatpush1.msra.mxu0 0.0
      %3597 = vmatprep.subr.mxu0 0.0
      %3598 = vmatpush1.msra.mxu0 0.0
      %3599 = vmatprep.subr.mxu0 0.0
      %3600 = vmatpush1.msra.mxu0 0.0
      %3601 = vmatprep.subr.mxu0 0.0
      %3602 = vmatpush1.msra.mxu0 0.0
      %3603 = vmatprep.subr.mxu0 0.0
      %3604 = vmatpush1.msra.mxu0 0.0
      %3605 = vmatprep.subr.mxu0 0.0
      %3606 = vmatpush1.msra.mxu0 0.0
      %3607 = vmatprep.subr.mxu0 0.0
      %3608 = vmatpush1.msra.mxu0 0.0
      %3609 = vmatprep.subr.mxu0 0.0
      %3610 = vmatpush1.msra.mxu0 %v3577
      %3611 = vmatprep.subr.mxu0 0.0
      %3612 = vmatpush2.msra.mxu0 0.0
      %3613 = vmatprep.subr.mxu0 0.0
      %3614 = vmatpush2.msra.mxu0 0.0
      %3615 = vmatprep.subr.mxu0 0.0
      %3616 = vmatpush2.msra.mxu0 0.0
      %3617 = vmatprep.subr.mxu0 0.0
      %3618 = vmatpush2.msra.mxu0 0.0
      %3619 = vmatprep.subr.mxu0 0.0
      %3620 = vmatpush2.msra.mxu0 0.0
      %3621 = vmatprep.subr.mxu0 0.0
      %3622 = vmatpush2.msra.mxu0 0.0
      %3623 = vmatprep.subr.mxu0 0.0
      %3624 = vmatpush2.msra.mxu0 0.0
      %3625 = vmatprep.subr.mxu0 0.0
      %3626 = vmatpush2.msra.mxu0 0.0
      %3627 = vmatprep.subr.mxu0 0.0
      %3628 = vmatpush2.msra.mxu0 0.0
      %3629 = vmatprep.subr.mxu0 0.0
      %3630 = vmatpush2.msra.mxu0 0.0
      %3631 = vmatprep.subr.mxu0 0.0
      %3632 = vmatpush2.msra.mxu0 0.0
      %3633 = vmatprep.subr.mxu0 0.0
      %3634 = vmatpush2.msra.mxu0 0.0
      %3635 = vmatprep.subr.mxu0 0.0
      %3636 = vmatpush2.msra.mxu0 0.0
      %3637 = vmatprep.subr.mxu0 0.0
      %3638 = vmatpush2.msra.mxu0 0.0
      %3639 = vmatprep.subr.mxu0 0.0
      %3640 = vmatpush2.msra.mxu0 0.0
      %3641 = vmatprep.subr.mxu0 0.0
      %3642 = vmatpush2.msra.mxu0 0.0
      %3643 = vmatprep.mubr.f32.mxu0 0.0
      %3644 = vmatmul.mubr.f32.gmra.mxu0 %v3481
      %v3645 = vpop.f32.mrf.mxu0
      %v3646 = vadd.f32 0.0, %v3645
      %v3647 = vpop.f32.mrf.mxu0
      %3648 = vmatprep.mubr.f32.mxu0 0.0
      %3649 = vmatmul.mubr.f32.gmra.mxu0 %v3484
      %v3650 = vpop.f32.mrf.mxu0
      %v3651 = vadd.f32 0.0, %v3650
      %v3652 = vpop.f32.mrf.mxu0
      %3653 = vmatprep.mubr.f32.mxu0 0.0
      %3654 = vmatmul.mubr.f32.gmra.mxu0 %v3487
      %v3655 = vpop.f32.mrf.mxu0
      %v3656 = vadd.f32 0.0, %v3655
      %v3657 = vpop.f32.mrf.mxu0
      %3658 = vmatprep.mubr.f32.mxu0 0.0
      %3659 = vmatmul.mubr.f32.gmra.mxu0 %v3490
      %v3660 = vpop.f32.mrf.mxu0
      %v3661 = vadd.f32 0.0, %v3660
      %v3662 = vpop.f32.mrf.mxu0
      %3663 = vmatprep.mubr.f32.mxu0 0.0
      %3664 = vmatmul.mubr.f32.gmra.mxu0 %v3493
      %v3665 = vpop.f32.mrf.mxu0
      %v3666 = vadd.f32 0.0, %v3665
      %v3667 = vpop.f32.mrf.mxu0
      %3668 = vmatprep.mubr.f32.mxu0 0.0
      %3669 = vmatmul.mubr.f32.gmra.mxu0 %v3496
      %v3670 = vpop.f32.mrf.mxu0
      %v3671 = vadd.f32 0.0, %v3670
      %v3672 = vpop.f32.mrf.mxu0
      %3673 = vmatprep.mubr.f32.mxu0 0.0
      %3674 = vmatmul.mubr.f32.gmra.mxu0 %v3499
      %v3675 = vpop.f32.mrf.mxu0
      %v3676 = vadd.f32 0.0, %v3675
      %v3677 = vpop.f32.mrf.mxu0
      %3678 = vmatprep.mubr.f32.mxu0 0.0
      %3679 = vmatmul.mubr.f32.gmra.mxu0 %v3502
      %v3680 = vpop.f32.mrf.mxu0
      %v3681 = vadd.f32 0.0, %v3680
      %v3682 = vpop.f32.mrf.mxu0
      %3683 = vmatprep.mubr.f32.mxu0 0.0
      %3684 = vmatmul.mubr.f32.gmra.mxu0 %v3505
      %v3685 = vpop.f32.mrf.mxu0
      %v3686 = vadd.f32 0.0, %v3685
      %v3687 = vpop.f32.mrf.mxu0
      %3688 = vmatprep.mubr.f32.mxu0 0.0
      %3689 = vmatmul.mubr.f32.gmra.mxu0 %v3508
      %v3690 = vpop.f32.mrf.mxu0
      %v3691 = vadd.f32 0.0, %v3690
      %v3692 = vpop.f32.mrf.mxu0
      %3693 = vmatprep.mubr.f32.mxu0 0.0
      %3694 = vmatmul.mubr.f32.gmra.mxu0 %v3511
      %v3695 = vpop.f32.mrf.mxu0
      %v3696 = vadd.f32 0.0, %v3695
      %v3697 = vpop.f32.mrf.mxu0
      %3698 = vmatprep.mubr.f32.mxu0 0.0
      %3699 = vmatmul.mubr.f32.gmra.mxu0 %v3514
      %v3700 = vpop.f32.mrf.mxu0
      %v3701 = vadd.f32 0.0, %v3700
      %v3702 = vpop.f32.mrf.mxu0
      %3703 = vmatprep.mubr.f32.mxu0 0.0
      %3704 = vmatmul.mubr.f32.gmra.mxu0 %v3517
      %v3705 = vpop.f32.mrf.mxu0
      %v3706 = vadd.f32 0.0, %v3705
      %v3707 = vpop.f32.mrf.mxu0
      %3708 = vmatprep.mubr.f32.mxu0 0.0
      %3709 = vmatmul.mubr.f32.gmra.mxu0 %v3520
      %v3710 = vpop.f32.mrf.mxu0
      %v3711 = vadd.f32 0.0, %v3710
      %v3712 = vpop.f32.mrf.mxu0
      %3713 = vmatprep.mubr.f32.mxu0 0.0
      %3714 = vmatmul.mubr.f32.gmra.mxu0 %v3523
      %v3715 = vpop.f32.mrf.mxu0
      %v3716 = vadd.f32 0.0, %v3715
      %v3717 = vpop.f32.mrf.mxu0
      %3718 = vmatprep.mubr.f32.mxu0 0.0
      %3719 = vmatmul.mubr.f32.gmra.mxu0 %v3526
      %v3720 = vpop.f32.mrf.mxu0
      %v3721 = vadd.f32 0.0, %v3720
      %v3722 = vpop.f32.mrf.mxu0
      %3723 = vmatprep.mubr.f32.mxu0 0.0
      %3724 = vmatmul.mubr.f32.gmra.mxu0 %v3529
      %v3725 = vpop.f32.mrf.mxu0
      %v3726 = vadd.f32 0.0, %v3725
      %v3727 = vpop.f32.mrf.mxu0
      %3728 = vmatprep.mubr.f32.mxu0 0.0
      %3729 = vmatmul.mubr.f32.gmra.mxu0 %v3532
      %v3730 = vpop.f32.mrf.mxu0
      %v3731 = vadd.f32 0.0, %v3730
      %v3732 = vpop.f32.mrf.mxu0
      %3733 = vmatprep.mubr.f32.mxu0 0.0
      %3734 = vmatmul.mubr.f32.gmra.mxu0 %v3535
      %v3735 = vpop.f32.mrf.mxu0
      %v3736 = vadd.f32 0.0, %v3735
      %v3737 = vpop.f32.mrf.mxu0
      %3738 = vmatprep.mubr.f32.mxu0 0.0
      %3739 = vmatmul.mubr.f32.gmra.mxu0 %v3538
      %v3740 = vpop.f32.mrf.mxu0
      %v3741 = vadd.f32 0.0, %v3740
      %v3742 = vpop.f32.mrf.mxu0
      %3743 = vmatprep.mubr.f32.mxu0 0.0
      %3744 = vmatmul.mubr.f32.gmra.mxu0 %v3541
      %v3745 = vpop.f32.mrf.mxu0
      %v3746 = vadd.f32 0.0, %v3745
      %v3747 = vpop.f32.mrf.mxu0
      %3748 = vmatprep.mubr.f32.mxu0 0.0
      %3749 = vmatmul.mubr.f32.gmra.mxu0 %v3544
      %v3750 = vpop.f32.mrf.mxu0
      %v3751 = vadd.f32 0.0, %v3750
      %v3752 = vpop.f32.mrf.mxu0
      %3753 = vmatprep.mubr.f32.mxu0 0.0
      %3754 = vmatmul.mubr.f32.gmra.mxu0 %v3547
      %v3755 = vpop.f32.mrf.mxu0
      %v3756 = vadd.f32 0.0, %v3755
      %v3757 = vpop.f32.mrf.mxu0
      %3758 = vmatprep.mubr.f32.mxu0 0.0
      %3759 = vmatmul.mubr.f32.gmra.mxu0 %v3550
      %v3760 = vpop.f32.mrf.mxu0
      %v3761 = vadd.f32 0.0, %v3760
      %v3762 = vpop.f32.mrf.mxu0
      %3763 = vmatprep.mubr.f32.mxu0 0.0
      %3764 = vmatmul.mubr.f32.gmra.mxu0 %v3553
      %v3765 = vpop.f32.mrf.mxu0
      %v3766 = vadd.f32 0.0, %v3765
      %v3767 = vpop.f32.mrf.mxu0
      %3768 = vmatprep.mubr.f32.mxu0 0.0
      %3769 = vmatmul.mubr.f32.gmra.mxu0 %v3556
      %v3770 = vpop.f32.mrf.mxu0
      %v3771 = vadd.f32 0.0, %v3770
      %v3772 = vpop.f32.mrf.mxu0
      %3773 = vmatprep.mubr.f32.mxu0 0.0
      %3774 = vmatmul.mubr.f32.gmra.mxu0 %v3559
      %v3775 = vpop.f32.mrf.mxu0
      %v3776 = vadd.f32 0.0, %v3775
      %v3777 = vpop.f32.mrf.mxu0
      %3778 = vmatprep.mubr.f32.mxu0 0.0
      %3779 = vmatmul.mubr.f32.gmra.mxu0 %v3562
      %v3780 = vpop.f32.mrf.mxu0
      %v3781 = vadd.f32 0.0, %v3780
      %v3782 = vpop.f32.mrf.mxu0
      %3783 = vmatprep.mubr.f32.mxu0 0.0
      %3784 = vmatmul.mubr.f32.gmra.mxu0 %v3565
      %v3785 = vpop.f32.mrf.mxu0
      %v3786 = vadd.f32 0.0, %v3785
      %v3787 = vpop.f32.mrf.mxu0
      %3788 = vmatprep.mubr.f32.mxu0 0.0
      %3789 = vmatmul.mubr.f32.gmra.mxu0 %v3568
      %v3790 = vpop.f32.mrf.mxu0
      %v3791 = vadd.f32 0.0, %v3790
      %v3792 = vpop.f32.mrf.mxu0
      %3793 = vmatprep.mubr.f32.mxu0 0.0
      %3794 = vmatmul.mubr.f32.gmra.mxu0 %v3571
      %v3795 = vpop.f32.mrf.mxu0
      %v3796 = vadd.f32 0.0, %v3795
      %v3797 = vpop.f32.mrf.mxu0
      %3798 = vmatprep.mubr.f32.mxu0 0.0
      %3799 = vmatmul.mubr.f32.gmra.mxu0 %v3574
      %v3800 = vpop.f32.mrf.mxu0
      %v3801 = vadd.f32 0.0, %v3800
      %v3802 = vpop.f32.mrf.mxu0
      %3803 = vdwg.mxu0
      %v3804 = vadd.f32 %v3414, %v3646
      %v3805 = vadd.f32 %v3415, %v3651
      %v3806 = vadd.f32 %v3416, %v3656
      %v3807 = vadd.f32 %v3417, %v3661
      %v3808 = vadd.f32 %v3418, %v3666
      %v3809 = vadd.f32 %v3419, %v3671
      %v3810 = vadd.f32 %v3420, %v3676
      %v3811 = vadd.f32 %v3421, %v3681
      %v3812 = vadd.f32 %v3422, %v3686
      %v3813 = vadd.f32 %v3423, %v3691
      %v3814 = vadd.f32 %v3424, %v3696
      %v3815 = vadd.f32 %v3425, %v3701
      %v3816 = vadd.f32 %v3426, %v3706
      %v3817 = vadd.f32 %v3427, %v3711
      %v3818 = vadd.f32 %v3428, %v3716
      %v3819 = vadd.f32 %v3429, %v3721
      %v3820 = vadd.f32 %v3430, %v3726
      %v3821 = vadd.f32 %v3431, %v3731
      %v3822 = vadd.f32 %v3432, %v3736
      %v3823 = vadd.f32 %v3433, %v3741
      %v3824 = vadd.f32 %v3434, %v3746
      %v3825 = vadd.f32 %v3435, %v3751
      %v3826 = vadd.f32 %v3436, %v3756
      %v3827 = vadd.f32 %v3437, %v3761
      %v3828 = vadd.f32 %v3438, %v3766
      %v3829 = vadd.f32 %v3439, %v3771
      %v3830 = vadd.f32 %v3440, %v3776
      %v3831 = vadd.f32 %v3441, %v3781
      %v3832 = vadd.f32 %v3442, %v3786
      %v3833 = vadd.f32 %v3443, %v3791
      %v3834 = vadd.f32 %v3444, %v3796
      %v3835 = vadd.f32 %v3445, %v3801
      %v3836 = vld [vmem:[%s3055 + $0x2] sm:$0xff]
      %v3837 = vld [vmem:[%s3055 + $0xa] sm:$0xff]
      %v3838 = vld [vmem:[%s3055 + $0x1a] sm:$0xff]
      %v3839 = vld [vmem:[%s3055 + $0x22] sm:$0xff]
      %v3840 = vld [vmem:[%s3055 + $0x32] sm:$0xff]
      %v3841 = vld [vmem:[%s3055 + $0x3a] sm:$0xff]
      %v3842 = vld [vmem:[%s3055 + $0x4a] sm:$0xff]
      %v3843 = vld [vmem:[%s3055 + $0x52] sm:$0xff]
      %v3844 = vld [vmem:[%s3055 + $0x62] sm:$0xff]
      %v3845 = vld [vmem:[%s3055 + $0x6a] sm:$0xff]
      %v3846 = vld [vmem:[%s3055 + $0x7a] sm:$0xff]
      %v3847 = vld [vmem:[%s3055 + $0x82] sm:$0xff]
      %v3848 = vld [vmem:[%s3055 + $0x92] sm:$0xff]
      %v3849 = vld [vmem:[%s3055 + $0x9a] sm:$0xff]
      %v3850 = vld [vmem:[%s3055 + $0xaa] sm:$0xff]
      %v3851 = vld [vmem:[%s3055 + $0xb2] sm:$0xff]
      %v3852 = vld [vmem:[%s3055 + $0xc2] sm:$0xff]
      %v3853 = vld [vmem:[%s3055 + $0xca] sm:$0xff]
      %v3854 = vld [vmem:[%s3055 + $0xda] sm:$0xff]
      %v3855 = vld [vmem:[%s3055 + $0xe2] sm:$0xff]
      %v3856 = vld [vmem:[%s3055 + $0xf2] sm:$0xff]
      %v3857 = vld [vmem:[%s3055 + $0xfa] sm:$0xff]
      %v3858 = vld [vmem:[%s3055 + $0x10a] sm:$0xff]
      %v3859 = vld [vmem:[%s3055 + $0x112] sm:$0xff]
      %v3860 = vld [vmem:[%s3055 + $0x122] sm:$0xff]
      %v3861 = vld [vmem:[%s3055 + $0x12a] sm:$0xff]
      %v3862 = vld [vmem:[%s3055 + $0x13a] sm:$0xff]
      %v3863 = vld [vmem:[%s3055 + $0x142] sm:$0xff]
      %v3864 = vld [vmem:[%s3055 + $0x152] sm:$0xff]
      %v3865 = vld [vmem:[%s3055 + $0x15a] sm:$0xff]
      %v3866 = vld [vmem:[%s3055 + $0x16a] sm:$0xff]
      %v3867 = vld [vmem:[%s3055 + $0x172] sm:$0xff]
      %s3868 = scalar_lea.vmem %s5, 32
      %v3869 = vld [vmem:[%s3868] sm:$0xf]
      %v3871 = vsel %vm449, %v3836, 0
      %v3874 = vsel %vm449, %v3837, 0
      %v3877 = vsel %vm449, %v3838, 0
      %v3880 = vsel %vm449, %v3839, 0
      %v3883 = vsel %vm449, %v3840, 0
      %v3886 = vsel %vm449, %v3841, 0
      %v3889 = vsel %vm449, %v3842, 0
      %v3892 = vsel %vm449, %v3843, 0
      %v3895 = vsel %vm449, %v3844, 0
      %v3898 = vsel %vm449, %v3845, 0
      %v3901 = vsel %vm449, %v3846, 0
      %v3904 = vsel %vm449, %v3847, 0
      %v3907 = vsel %vm449, %v3848, 0
      %v3910 = vsel %vm449, %v3849, 0
      %v3913 = vsel %vm449, %v3850, 0
      %v3916 = vsel %vm449, %v3851, 0
      %v3919 = vsel %vm449, %v3852, 0
      %v3922 = vsel %vm449, %v3853, 0
      %v3925 = vsel %vm449, %v3854, 0
      %v3928 = vsel %vm449, %v3855, 0
      %v3931 = vsel %vm449, %v3856, 0
      %v3934 = vsel %vm449, %v3857, 0
      %v3937 = vsel %vm449, %v3858, 0
      %v3940 = vsel %vm449, %v3859, 0
      %v3943 = vsel %vm449, %v3860, 0
      %v3946 = vsel %vm449, %v3861, 0
      %v3949 = vsel %vm449, %v3862, 0
      %v3952 = vsel %vm449, %v3863, 0
      %v3955 = vsel %vm449, %v3864, 0
      %v3958 = vsel %vm449, %v3865, 0
      %v3961 = vsel %vm449, %v3866, 0
      %v3964 = vsel %vm449, %v3867, 0
      %v3967 = vsel %vm942, %v3869, 0
      %3969 = vmatprep.subr.mxu0 0.0
      %3970 = vmatpush1.msra.mxu0 0.0
      %3971 = vmatprep.subr.mxu0 0.0
      %3972 = vmatpush1.msra.mxu0 0.0
      %3973 = vmatprep.subr.mxu0 0.0
      %3974 = vmatpush1.msra.mxu0 0.0
      %3975 = vmatprep.subr.mxu0 0.0
      %3976 = vmatpush1.msra.mxu0 0.0
      %3977 = vmatprep.subr.mxu0 0.0
      %3978 = vmatpush1.msra.mxu0 0.0
      %3979 = vmatprep.subr.mxu0 0.0
      %3980 = vmatpush1.msra.mxu0 0.0
      %3981 = vmatprep.subr.mxu0 0.0
      %3982 = vmatpush1.msra.mxu0 0.0
      %3983 = vmatprep.subr.mxu0 0.0
      %3984 = vmatpush1.msra.mxu0 0.0
      %3985 = vmatprep.subr.mxu0 0.0
      %3986 = vmatpush1.msra.mxu0 0.0
      %3987 = vmatprep.subr.mxu0 0.0
      %3988 = vmatpush1.msra.mxu0 0.0
      %3989 = vmatprep.subr.mxu0 0.0
      %3990 = vmatpush1.msra.mxu0 0.0
      %3991 = vmatprep.subr.mxu0 0.0
      %3992 = vmatpush1.msra.mxu0 0.0
      %3993 = vmatprep.subr.mxu0 0.0
      %3994 = vmatpush1.msra.mxu0 0.0
      %3995 = vmatprep.subr.mxu0 0.0
      %3996 = vmatpush1.msra.mxu0 0.0
      %3997 = vmatprep.subr.mxu0 0.0
      %3998 = vmatpush1.msra.mxu0 0.0
      %3999 = vmatprep.subr.mxu0 0.0
      %4000 = vmatpush1.msra.mxu0 %v3967
      %4001 = vmatprep.subr.mxu0 0.0
      %4002 = vmatpush2.msra.mxu0 0.0
      %4003 = vmatprep.subr.mxu0 0.0
      %4004 = vmatpush2.msra.mxu0 0.0
      %4005 = vmatprep.subr.mxu0 0.0
      %4006 = vmatpush2.msra.mxu0 0.0
      %4007 = vmatprep.subr.mxu0 0.0
      %4008 = vmatpush2.msra.mxu0 0.0
      %4009 = vmatprep.subr.mxu0 0.0
      %4010 = vmatpush2.msra.mxu0 0.0
      %4011 = vmatprep.subr.mxu0 0.0
      %4012 = vmatpush2.msra.mxu0 0.0
      %4013 = vmatprep.subr.mxu0 0.0
      %4014 = vmatpush2.msra.mxu0 0.0
      %4015 = vmatprep.subr.mxu0 0.0
      %4016 = vmatpush2.msra.mxu0 0.0
      %4017 = vmatprep.subr.mxu0 0.0
      %4018 = vmatpush2.msra.mxu0 0.0
      %4019 = vmatprep.subr.mxu0 0.0
      %4020 = vmatpush2.msra.mxu0 0.0
      %4021 = vmatprep.subr.mxu0 0.0
      %4022 = vmatpush2.msra.mxu0 0.0
      %4023 = vmatprep.subr.mxu0 0.0
      %4024 = vmatpush2.msra.mxu0 0.0
      %4025 = vmatprep.subr.mxu0 0.0
      %4026 = vmatpush2.msra.mxu0 0.0
      %4027 = vmatprep.subr.mxu0 0.0
      %4028 = vmatpush2.msra.mxu0 0.0
      %4029 = vmatprep.subr.mxu0 0.0
      %4030 = vmatpush2.msra.mxu0 0.0
      %4031 = vmatprep.subr.mxu0 0.0
      %4032 = vmatpush2.msra.mxu0 0.0
      %4033 = vmatprep.mubr.f32.mxu0 0.0
      %4034 = vmatmul.mubr.f32.gmra.mxu0 %v3871
      %v4035 = vpop.f32.mrf.mxu0
      %v4036 = vadd.f32 0.0, %v4035
      %v4037 = vpop.f32.mrf.mxu0
      %4038 = vmatprep.mubr.f32.mxu0 0.0
      %4039 = vmatmul.mubr.f32.gmra.mxu0 %v3874
      %v4040 = vpop.f32.mrf.mxu0
      %v4041 = vadd.f32 0.0, %v4040
      %v4042 = vpop.f32.mrf.mxu0
      %4043 = vmatprep.mubr.f32.mxu0 0.0
      %4044 = vmatmul.mubr.f32.gmra.mxu0 %v3877
      %v4045 = vpop.f32.mrf.mxu0
      %v4046 = vadd.f32 0.0, %v4045
      %v4047 = vpop.f32.mrf.mxu0
      %4048 = vmatprep.mubr.f32.mxu0 0.0
      %4049 = vmatmul.mubr.f32.gmra.mxu0 %v3880
      %v4050 = vpop.f32.mrf.mxu0
      %v4051 = vadd.f32 0.0, %v4050
      %v4052 = vpop.f32.mrf.mxu0
      %4053 = vmatprep.mubr.f32.mxu0 0.0
      %4054 = vmatmul.mubr.f32.gmra.mxu0 %v3883
      %v4055 = vpop.f32.mrf.mxu0
      %v4056 = vadd.f32 0.0, %v4055
      %v4057 = vpop.f32.mrf.mxu0
      %4058 = vmatprep.mubr.f32.mxu0 0.0
      %4059 = vmatmul.mubr.f32.gmra.mxu0 %v3886
      %v4060 = vpop.f32.mrf.mxu0
      %v4061 = vadd.f32 0.0, %v4060
      %v4062 = vpop.f32.mrf.mxu0
      %4063 = vmatprep.mubr.f32.mxu0 0.0
      %4064 = vmatmul.mubr.f32.gmra.mxu0 %v3889
      %v4065 = vpop.f32.mrf.mxu0
      %v4066 = vadd.f32 0.0, %v4065
      %v4067 = vpop.f32.mrf.mxu0
      %4068 = vmatprep.mubr.f32.mxu0 0.0
      %4069 = vmatmul.mubr.f32.gmra.mxu0 %v3892
      %v4070 = vpop.f32.mrf.mxu0
      %v4071 = vadd.f32 0.0, %v4070
      %v4072 = vpop.f32.mrf.mxu0
      %4073 = vmatprep.mubr.f32.mxu0 0.0
      %4074 = vmatmul.mubr.f32.gmra.mxu0 %v3895
      %v4075 = vpop.f32.mrf.mxu0
      %v4076 = vadd.f32 0.0, %v4075
      %v4077 = vpop.f32.mrf.mxu0
      %4078 = vmatprep.mubr.f32.mxu0 0.0
      %4079 = vmatmul.mubr.f32.gmra.mxu0 %v3898
      %v4080 = vpop.f32.mrf.mxu0
      %v4081 = vadd.f32 0.0, %v4080
      %v4082 = vpop.f32.mrf.mxu0
      %4083 = vmatprep.mubr.f32.mxu0 0.0
      %4084 = vmatmul.mubr.f32.gmra.mxu0 %v3901
      %v4085 = vpop.f32.mrf.mxu0
      %v4086 = vadd.f32 0.0, %v4085
      %v4087 = vpop.f32.mrf.mxu0
      %4088 = vmatprep.mubr.f32.mxu0 0.0
      %4089 = vmatmul.mubr.f32.gmra.mxu0 %v3904
      %v4090 = vpop.f32.mrf.mxu0
      %v4091 = vadd.f32 0.0, %v4090
      %v4092 = vpop.f32.mrf.mxu0
      %4093 = vmatprep.mubr.f32.mxu0 0.0
      %4094 = vmatmul.mubr.f32.gmra.mxu0 %v3907
      %v4095 = vpop.f32.mrf.mxu0
      %v4096 = vadd.f32 0.0, %v4095
      %v4097 = vpop.f32.mrf.mxu0
      %4098 = vmatprep.mubr.f32.mxu0 0.0
      %4099 = vmatmul.mubr.f32.gmra.mxu0 %v3910
      %v4100 = vpop.f32.mrf.mxu0
      %v4101 = vadd.f32 0.0, %v4100
      %v4102 = vpop.f32.mrf.mxu0
      %4103 = vmatprep.mubr.f32.mxu0 0.0
      %4104 = vmatmul.mubr.f32.gmra.mxu0 %v3913
      %v4105 = vpop.f32.mrf.mxu0
      %v4106 = vadd.f32 0.0, %v4105
      %v4107 = vpop.f32.mrf.mxu0
      %4108 = vmatprep.mubr.f32.mxu0 0.0
      %4109 = vmatmul.mubr.f32.gmra.mxu0 %v3916
      %v4110 = vpop.f32.mrf.mxu0
      %v4111 = vadd.f32 0.0, %v4110
      %v4112 = vpop.f32.mrf.mxu0
      %4113 = vmatprep.mubr.f32.mxu0 0.0
      %4114 = vmatmul.mubr.f32.gmra.mxu0 %v3919
      %v4115 = vpop.f32.mrf.mxu0
      %v4116 = vadd.f32 0.0, %v4115
      %v4117 = vpop.f32.mrf.mxu0
      %4118 = vmatprep.mubr.f32.mxu0 0.0
      %4119 = vmatmul.mubr.f32.gmra.mxu0 %v3922
      %v4120 = vpop.f32.mrf.mxu0
      %v4121 = vadd.f32 0.0, %v4120
      %v4122 = vpop.f32.mrf.mxu0
      %4123 = vmatprep.mubr.f32.mxu0 0.0
      %4124 = vmatmul.mubr.f32.gmra.mxu0 %v3925
      %v4125 = vpop.f32.mrf.mxu0
      %v4126 = vadd.f32 0.0, %v4125
      %v4127 = vpop.f32.mrf.mxu0
      %4128 = vmatprep.mubr.f32.mxu0 0.0
      %4129 = vmatmul.mubr.f32.gmra.mxu0 %v3928
      %v4130 = vpop.f32.mrf.mxu0
      %v4131 = vadd.f32 0.0, %v4130
      %v4132 = vpop.f32.mrf.mxu0
      %4133 = vmatprep.mubr.f32.mxu0 0.0
      %4134 = vmatmul.mubr.f32.gmra.mxu0 %v3931
      %v4135 = vpop.f32.mrf.mxu0
      %v4136 = vadd.f32 0.0, %v4135
      %v4137 = vpop.f32.mrf.mxu0
      %4138 = vmatprep.mubr.f32.mxu0 0.0
      %4139 = vmatmul.mubr.f32.gmra.mxu0 %v3934
      %v4140 = vpop.f32.mrf.mxu0
      %v4141 = vadd.f32 0.0, %v4140
      %v4142 = vpop.f32.mrf.mxu0
      %4143 = vmatprep.mubr.f32.mxu0 0.0
      %4144 = vmatmul.mubr.f32.gmra.mxu0 %v3937
      %v4145 = vpop.f32.mrf.mxu0
      %v4146 = vadd.f32 0.0, %v4145
      %v4147 = vpop.f32.mrf.mxu0
      %4148 = vmatprep.mubr.f32.mxu0 0.0
      %4149 = vmatmul.mubr.f32.gmra.mxu0 %v3940
      %v4150 = vpop.f32.mrf.mxu0
      %v4151 = vadd.f32 0.0, %v4150
      %v4152 = vpop.f32.mrf.mxu0
      %4153 = vmatprep.mubr.f32.mxu0 0.0
      %4154 = vmatmul.mubr.f32.gmra.mxu0 %v3943
      %v4155 = vpop.f32.mrf.mxu0
      %v4156 = vadd.f32 0.0, %v4155
      %v4157 = vpop.f32.mrf.mxu0
      %4158 = vmatprep.mubr.f32.mxu0 0.0
      %4159 = vmatmul.mubr.f32.gmra.mxu0 %v3946
      %v4160 = vpop.f32.mrf.mxu0
      %v4161 = vadd.f32 0.0, %v4160
      %v4162 = vpop.f32.mrf.mxu0
      %4163 = vmatprep.mubr.f32.mxu0 0.0
      %4164 = vmatmul.mubr.f32.gmra.mxu0 %v3949
      %v4165 = vpop.f32.mrf.mxu0
      %v4166 = vadd.f32 0.0, %v4165
      %v4167 = vpop.f32.mrf.mxu0
      %4168 = vmatprep.mubr.f32.mxu0 0.0
      %4169 = vmatmul.mubr.f32.gmra.mxu0 %v3952
      %v4170 = vpop.f32.mrf.mxu0
      %v4171 = vadd.f32 0.0, %v4170
      %v4172 = vpop.f32.mrf.mxu0
      %4173 = vmatprep.mubr.f32.mxu0 0.0
      %4174 = vmatmul.mubr.f32.gmra.mxu0 %v3955
      %v4175 = vpop.f32.mrf.mxu0
      %v4176 = vadd.f32 0.0, %v4175
      %v4177 = vpop.f32.mrf.mxu0
      %4178 = vmatprep.mubr.f32.mxu0 0.0
      %4179 = vmatmul.mubr.f32.gmra.mxu0 %v3958
      %v4180 = vpop.f32.mrf.mxu0
      %v4181 = vadd.f32 0.0, %v4180
      %v4182 = vpop.f32.mrf.mxu0
      %4183 = vmatprep.mubr.f32.mxu0 0.0
      %4184 = vmatmul.mubr.f32.gmra.mxu0 %v3961
      %v4185 = vpop.f32.mrf.mxu0
      %v4186 = vadd.f32 0.0, %v4185
      %v4187 = vpop.f32.mrf.mxu0
      %4188 = vmatprep.mubr.f32.mxu0 0.0
      %4189 = vmatmul.mubr.f32.gmra.mxu0 %v3964
      %v4190 = vpop.f32.mrf.mxu0
      %v4191 = vadd.f32 0.0, %v4190
      %v4192 = vpop.f32.mrf.mxu0
      %4193 = vdwg.mxu0
      %v4194 = vadd.f32 %v3804, %v4036
      %v4195 = vadd.f32 %v3805, %v4041
      %v4196 = vadd.f32 %v3806, %v4046
      %v4197 = vadd.f32 %v3807, %v4051
      %v4198 = vadd.f32 %v3808, %v4056
      %v4199 = vadd.f32 %v3809, %v4061
      %v4200 = vadd.f32 %v3810, %v4066
      %v4201 = vadd.f32 %v3811, %v4071
      %v4202 = vadd.f32 %v3812, %v4076
      %v4203 = vadd.f32 %v3813, %v4081
      %v4204 = vadd.f32 %v3814, %v4086
      %v4205 = vadd.f32 %v3815, %v4091
      %v4206 = vadd.f32 %v3816, %v4096
      %v4207 = vadd.f32 %v3817, %v4101
      %v4208 = vadd.f32 %v3818, %v4106
      %v4209 = vadd.f32 %v3819, %v4111
      %v4210 = vadd.f32 %v3820, %v4116
      %v4211 = vadd.f32 %v3821, %v4121
      %v4212 = vadd.f32 %v3822, %v4126
      %v4213 = vadd.f32 %v3823, %v4131
      %v4214 = vadd.f32 %v3824, %v4136
      %v4215 = vadd.f32 %v3825, %v4141
      %v4216 = vadd.f32 %v3826, %v4146
      %v4217 = vadd.f32 %v3827, %v4151
      %v4218 = vadd.f32 %v3828, %v4156
      %v4219 = vadd.f32 %v3829, %v4161
      %v4220 = vadd.f32 %v3830, %v4166
      %v4221 = vadd.f32 %v3831, %v4171
      %v4222 = vadd.f32 %v3832, %v4176
      %v4223 = vadd.f32 %v3833, %v4181
      %v4224 = vadd.f32 %v3834, %v4186
      %v4225 = vadd.f32 %v3835, %v4191
      %v4226 = vld [vmem:[%s6] sm:$0x1]
      %v4228 = vlaneseq
      %v4229 = vshrl.u32 %v4228, 7
      %v4230 = vsub.s32 0, %v4229
      %v4231 = vrot.slane %v4226, %v4230
      %v4233 = vadd.f32 %v4194, %v4231
      %v4234 = vadd.f32 %v4195, %v4231
      %v4235 = vadd.f32 %v4196, %v4231
      %v4236 = vadd.f32 %v4197, %v4231
      %v4237 = vadd.f32 %v4198, %v4231
      %v4238 = vadd.f32 %v4199, %v4231
      %v4239 = vadd.f32 %v4200, %v4231
      %v4240 = vadd.f32 %v4201, %v4231
      %v4241 = vadd.f32 %v4202, %v4231
      %v4242 = vadd.f32 %v4203, %v4231
      %v4243 = vadd.f32 %v4204, %v4231
      %v4244 = vadd.f32 %v4205, %v4231
      %v4245 = vadd.f32 %v4206, %v4231
      %v4246 = vadd.f32 %v4207, %v4231
      %v4247 = vadd.f32 %v4208, %v4231
      %v4248 = vadd.f32 %v4209, %v4231
      %v4249 = vadd.f32 %v4210, %v4231
      %v4250 = vadd.f32 %v4211, %v4231
      %v4251 = vadd.f32 %v4212, %v4231
      %v4252 = vadd.f32 %v4213, %v4231
      %v4253 = vadd.f32 %v4214, %v4231
      %v4254 = vadd.f32 %v4215, %v4231
      %v4255 = vadd.f32 %v4216, %v4231
      %v4256 = vadd.f32 %v4217, %v4231
      %v4257 = vadd.f32 %v4218, %v4231
      %v4258 = vadd.f32 %v4219, %v4231
      %v4259 = vadd.f32 %v4220, %v4231
      %v4260 = vadd.f32 %v4221, %v4231
      %v4261 = vadd.f32 %v4222, %v4231
      %v4262 = vadd.f32 %v4223, %v4231
      %v4263 = vadd.f32 %v4224, %v4231
      %v4264 = vadd.f32 %v4225, %v4231
      %vm4265 = vcmask 64512
      %4266 = vst.msk [vmem:[%s445] sm:$0xff] %vm4265, %v4233
      %4267 = vst.msk [vmem:[%s445 + $0x8] sm:$0xff] %vm4265, %v4234
      %4268 = vst.msk [vmem:[%s445 + $0x10] sm:$0xff] %vm4265, %v4233
      %4269 = vst.msk [vmem:[%s445 + $0x18] sm:$0xff] %vm4265, %v4234
      %4270 = vst.msk [vmem:[%s445 + $0x20] sm:$0xff] %vm4265, %v4235
      %4271 = vst.msk [vmem:[%s445 + $0x28] sm:$0xff] %vm4265, %v4236
      %4272 = vst.msk [vmem:[%s445 + $0x30] sm:$0xff] %vm4265, %v4235
      %4273 = vst.msk [vmem:[%s445 + $0x38] sm:$0xff] %vm4265, %v4236
      %4274 = vst.msk [vmem:[%s445 + $0x40] sm:$0xff] %vm4265, %v4237
      %4275 = vst.msk [vmem:[%s445 + $0x48] sm:$0xff] %vm4265, %v4238
      %4276 = vst.msk [vmem:[%s445 + $0x50] sm:$0xff] %vm4265, %v4237
      %4277 = vst.msk [vmem:[%s445 + $0x58] sm:$0xff] %vm4265, %v4238
      %4278 = vst.msk [vmem:[%s445 + $0x60] sm:$0xff] %vm4265, %v4239
      %4279 = vst.msk [vmem:[%s445 + $0x68] sm:$0xff] %vm4265, %v4240
      %4280 = vst.msk [vmem:[%s445 + $0x70] sm:$0xff] %vm4265, %v4239
      %4281 = vst.msk [vmem:[%s445 + $0x78] sm:$0xff] %vm4265, %v4240
      %4282 = vst.msk [vmem:[%s445 + $0x80] sm:$0xff] %vm4265, %v4241
      %4283 = vst.msk [vmem:[%s445 + $0x88] sm:$0xff] %vm4265, %v4242
      %4284 = vst.msk [vmem:[%s445 + $0x90] sm:$0xff] %vm4265, %v4241
      %4285 = vst.msk [vmem:[%s445 + $0x98] sm:$0xff] %vm4265, %v4242
      %4286 = vst.msk [vmem:[%s445 + $0xa0] sm:$0xff] %vm4265, %v4243
      %4287 = vst.msk [vmem:[%s445 + $0xa8] sm:$0xff] %vm4265, %v4244
      %4288 = vst.msk [vmem:[%s445 + $0xb0] sm:$0xff] %vm4265, %v4243
      %4289 = vst.msk [vmem:[%s445 + $0xb8] sm:$0xff] %vm4265, %v4244
      %4290 = vst.msk [vmem:[%s445 + $0xc0] sm:$0xff] %vm4265, %v4245
      %4291 = vst.msk [vmem:[%s445 + $0xc8] sm:$0xff] %vm4265, %v4246
      %4292 = vst.msk [vmem:[%s445 + $0xd0] sm:$0xff] %vm4265, %v4245
      %4293 = vst.msk [vmem:[%s445 + $0xd8] sm:$0xff] %vm4265, %v4246
      %4294 = vst.msk [vmem:[%s445 + $0xe0] sm:$0xff] %vm4265, %v4247
      %4295 = vst.msk [vmem:[%s445 + $0xe8] sm:$0xff] %vm4265, %v4248
      %4296 = vst.msk [vmem:[%s445 + $0xf0] sm:$0xff] %vm4265, %v4247
      %4297 = vst.msk [vmem:[%s445 + $0xf8] sm:$0xff] %vm4265, %v4248
      %4298 = vst.msk [vmem:[%s445 + $0x100] sm:$0xff] %vm4265, %v4249
      %4299 = vst.msk [vmem:[%s445 + $0x108] sm:$0xff] %vm4265, %v4250
      %4300 = vst.msk [vmem:[%s445 + $0x110] sm:$0xff] %vm4265, %v4249
      %4301 = vst.msk [vmem:[%s445 + $0x118] sm:$0xff] %vm4265, %v4250
      %4302 = vst.msk [vmem:[%s445 + $0x120] sm:$0xff] %vm4265, %v4251
      %4303 = vst.msk [vmem:[%s445 + $0x128] sm:$0xff] %vm4265, %v4252
      %4304 = vst.msk [vmem:[%s445 + $0x130] sm:$0xff] %vm4265, %v4251
      %4305 = vst.msk [vmem:[%s445 + $0x138] sm:$0xff] %vm4265, %v4252
      %4306 = vst.msk [vmem:[%s445 + $0x140] sm:$0xff] %vm4265, %v4253
      %4307 = vst.msk [vmem:[%s445 + $0x148] sm:$0xff] %vm4265, %v4254
      %4308 = vst.msk [vmem:[%s445 + $0x150] sm:$0xff] %vm4265, %v4253
      %4309 = vst.msk [vmem:[%s445 + $0x158] sm:$0xff] %vm4265, %v4254
      %4310 = vst.msk [vmem:[%s445 + $0x160] sm:$0xff] %vm4265, %v4255
      %4311 = vst.msk [vmem:[%s445 + $0x168] sm:$0xff] %vm4265, %v4256
      %4312 = vst.msk [vmem:[%s445 + $0x170] sm:$0xff] %vm4265, %v4255
      %4313 = vst.msk [vmem:[%s445 + $0x178] sm:$0xff] %vm4265, %v4256
      %4314 = vst.msk [vmem:[%s445 + $0x180] sm:$0xff] %vm4265, %v4257
      %4315 = vst.msk [vmem:[%s445 + $0x188] sm:$0xff] %vm4265, %v4258
      %4316 = vst.msk [vmem:[%s445 + $0x190] sm:$0xff] %vm4265, %v4257
      %4317 = vst.msk [vmem:[%s445 + $0x198] sm:$0xff] %vm4265, %v4258
      %4318 = vst.msk [vmem:[%s445 + $0x1a0] sm:$0xff] %vm4265, %v4259
      %4319 = vst.msk [vmem:[%s445 + $0x1a8] sm:$0xff] %vm4265, %v4260
      %4320 = vst.msk [vmem:[%s445 + $0x1b0] sm:$0xff] %vm4265, %v4259
      %4321 = vst.msk [vmem:[%s445 + $0x1b8] sm:$0xff] %vm4265, %v4260
      %4322 = vst.msk [vmem:[%s445 + $0x1c0] sm:$0xff] %vm4265, %v4261
      %4323 = vst.msk [vmem:[%s445 + $0x1c8] sm:$0xff] %vm4265, %v4262
      %4324 = vst.msk [vmem:[%s445 + $0x1d0] sm:$0xff] %vm4265, %v4261
      %4325 = vst.msk [vmem:[%s445 + $0x1d8] sm:$0xff] %vm4265, %v4262
      %4326 = vst.msk [vmem:[%s445 + $0x1e0] sm:$0xff] %vm4265, %v4263
      %4327 = vst.msk [vmem:[%s445 + $0x1e8] sm:$0xff] %vm4265, %v4264
      %4328 = vst.msk [vmem:[%s445 + $0x1f0] sm:$0xff] %vm4265, %v4263
      %4329 = vst.msk [vmem:[%s445 + $0x1f8] sm:$0xff] %vm4265, %v4264
      %4362 = vrot.lane.b32.xlu0 %v4233, 8
      %v4363 = vpop.permute.xlu0 %4362
      %4364 = vrot.lane.b32.xlu0 %v4234, 8
      %v4365 = vpop.permute.xlu0 %4364
      %4366 = vrot.lane.b32.xlu0 %v4235, 8
      %v4367 = vpop.permute.xlu0 %4366
      %4368 = vrot.lane.b32.xlu0 %v4236, 8
      %v4369 = vpop.permute.xlu0 %4368
      %4370 = vrot.lane.b32.xlu0 %v4237, 8
      %v4371 = vpop.permute.xlu0 %4370
      %4372 = vrot.lane.b32.xlu0 %v4238, 8
      %v4373 = vpop.permute.xlu0 %4372
      %4374 = vrot.lane.b32.xlu0 %v4239, 8
      %v4375 = vpop.permute.xlu0 %4374
      %4376 = vrot.lane.b32.xlu0 %v4240, 8
      %v4377 = vpop.permute.xlu0 %4376
      %4378 = vrot.lane.b32.xlu0 %v4241, 8
      %v4379 = vpop.permute.xlu0 %4378
      %4380 = vrot.lane.b32.xlu0 %v4242, 8
      %v4381 = vpop.permute.xlu0 %4380
      %4382 = vrot.lane.b32.xlu0 %v4243, 8
      %v4383 = vpop.permute.xlu0 %4382
      %4384 = vrot.lane.b32.xlu0 %v4244, 8
      %v4385 = vpop.permute.xlu0 %4384
      %4386 = vrot.lane.b32.xlu0 %v4245, 8
      %v4387 = vpop.permute.xlu0 %4386
      %4388 = vrot.lane.b32.xlu0 %v4246, 8
      %v4389 = vpop.permute.xlu0 %4388
      %4390 = vrot.lane.b32.xlu0 %v4247, 8
      %v4391 = vpop.permute.xlu0 %4390
      %4392 = vrot.lane.b32.xlu0 %v4248, 8
      %v4393 = vpop.permute.xlu0 %4392
      %4394 = vrot.lane.b32.xlu0 %v4249, 8
      %v4395 = vpop.permute.xlu0 %4394
      %4396 = vrot.lane.b32.xlu0 %v4250, 8
      %v4397 = vpop.permute.xlu0 %4396
      %4398 = vrot.lane.b32.xlu0 %v4251, 8
      %v4399 = vpop.permute.xlu0 %4398
      %4400 = vrot.lane.b32.xlu0 %v4252, 8
      %v4401 = vpop.permute.xlu0 %4400
      %4402 = vrot.lane.b32.xlu0 %v4253, 8
      %v4403 = vpop.permute.xlu0 %4402
      %4404 = vrot.lane.b32.xlu0 %v4254, 8
      %v4405 = vpop.permute.xlu0 %4404
      %4406 = vrot.lane.b32.xlu0 %v4255, 8
      %v4407 = vpop.permute.xlu0 %4406
      %4408 = vrot.lane.b32.xlu0 %v4256, 8
      %v4409 = vpop.permute.xlu0 %4408
      %4410 = vrot.lane.b32.xlu0 %v4257, 8
      %v4411 = vpop.permute.xlu0 %4410
      %4412 = vrot.lane.b32.xlu0 %v4258, 8
      %v4413 = vpop.permute.xlu0 %4412
      %4414 = vrot.lane.b32.xlu0 %v4259, 8
      %v4415 = vpop.permute.xlu0 %4414
      %4416 = vrot.lane.b32.xlu0 %v4260, 8
      %v4417 = vpop.permute.xlu0 %4416
      %4418 = vrot.lane.b32.xlu0 %v4261, 8
      %v4419 = vpop.permute.xlu0 %4418
      %4420 = vrot.lane.b32.xlu0 %v4262, 8
      %v4421 = vpop.permute.xlu0 %4420
      %4422 = vrot.lane.b32.xlu0 %v4263, 8
      %v4423 = vpop.permute.xlu0 %4422
      %4424 = vrot.lane.b32.xlu0 %v4264, 8
      %v4425 = vpop.permute.xlu0 %4424
      %vm4458 = vcmask 130112
      %4459 = vst.msk [vmem:[%s445] sm:$0xff] %vm4458, %v4363
      %4460 = vst.msk [vmem:[%s445 + $0x8] sm:$0xff] %vm4458, %v4365
      %4461 = vst.msk [vmem:[%s445 + $0x10] sm:$0xff] %vm4458, %v4363
      %4462 = vst.msk [vmem:[%s445 + $0x18] sm:$0xff] %vm4458, %v4365
      %4463 = vst.msk [vmem:[%s445 + $0x20] sm:$0xff] %vm4458, %v4367
      %4464 = vst.msk [vmem:[%s445 + $0x28] sm:$0xff] %vm4458, %v4369
      %4465 = vst.msk [vmem:[%s445 + $0x30] sm:$0xff] %vm4458, %v4367
      %4466 = vst.msk [vmem:[%s445 + $0x38] sm:$0xff] %vm4458, %v4369
      %4467 = vst.msk [vmem:[%s445 + $0x40] sm:$0xff] %vm4458, %v4371
      %4468 = vst.msk [vmem:[%s445 + $0x48] sm:$0xff] %vm4458, %v4373
      %4469 = vst.msk [vmem:[%s445 + $0x50] sm:$0xff] %vm4458, %v4371
      %4470 = vst.msk [vmem:[%s445 + $0x58] sm:$0xff] %vm4458, %v4373
      %4471 = vst.msk [vmem:[%s445 + $0x60] sm:$0xff] %vm4458, %v4375
      %4472 = vst.msk [vmem:[%s445 + $0x68] sm:$0xff] %vm4458, %v4377
      %4473 = vst.msk [vmem:[%s445 + $0x70] sm:$0xff] %vm4458, %v4375
      %4474 = vst.msk [vmem:[%s445 + $0x78] sm:$0xff] %vm4458, %v4377
      %4475 = vst.msk [vmem:[%s445 + $0x80] sm:$0xff] %vm4458, %v4379
      %4476 = vst.msk [vmem:[%s445 + $0x88] sm:$0xff] %vm4458, %v4381
      %4477 = vst.msk [vmem:[%s445 + $0x90] sm:$0xff] %vm4458, %v4379
      %4478 = vst.msk [vmem:[%s445 + $0x98] sm:$0xff] %vm4458, %v4381
      %4479 = vst.msk [vmem:[%s445 + $0xa0] sm:$0xff] %vm4458, %v4383
      %4480 = vst.msk [vmem:[%s445 + $0xa8] sm:$0xff] %vm4458, %v4385
      %4481 = vst.msk [vmem:[%s445 + $0xb0] sm:$0xff] %vm4458, %v4383
      %4482 = vst.msk [vmem:[%s445 + $0xb8] sm:$0xff] %vm4458, %v4385
      %4483 = vst.msk [vmem:[%s445 + $0xc0] sm:$0xff] %vm4458, %v4387
      %4484 = vst.msk [vmem:[%s445 + $0xc8] sm:$0xff] %vm4458, %v4389
      %4485 = vst.msk [vmem:[%s445 + $0xd0] sm:$0xff] %vm4458, %v4387
      %4486 = vst.msk [vmem:[%s445 + $0xd8] sm:$0xff] %vm4458, %v4389
      %4487 = vst.msk [vmem:[%s445 + $0xe0] sm:$0xff] %vm4458, %v4391
      %4488 = vst.msk [vmem:[%s445 + $0xe8] sm:$0xff] %vm4458, %v4393
      %4489 = vst.msk [vmem:[%s445 + $0xf0] sm:$0xff] %vm4458, %v4391
      %4490 = vst.msk [vmem:[%s445 + $0xf8] sm:$0xff] %vm4458, %v4393
      %4491 = vst.msk [vmem:[%s445 + $0x100] sm:$0xff] %vm4458, %v4395
      %4492 = vst.msk [vmem:[%s445 + $0x108] sm:$0xff] %vm4458, %v4397
      %4493 = vst.msk [vmem:[%s445 + $0x110] sm:$0xff] %vm4458, %v4395
      %4494 = vst.msk [vmem:[%s445 + $0x118] sm:$0xff] %vm4458, %v4397
      %4495 = vst.msk [vmem:[%s445 + $0x120] sm:$0xff] %vm4458, %v4399
      %4496 = vst.msk [vmem:[%s445 + $0x128] sm:$0xff] %vm4458, %v4401
      %4497 = vst.msk [vmem:[%s445 + $0x130] sm:$0xff] %vm4458, %v4399
      %4498 = vst.msk [vmem:[%s445 + $0x138] sm:$0xff] %vm4458, %v4401
      %4499 = vst.msk [vmem:[%s445 + $0x140] sm:$0xff] %vm4458, %v4403
      %4500 = vst.msk [vmem:[%s445 + $0x148] sm:$0xff] %vm4458, %v4405
      %4501 = vst.msk [vmem:[%s445 + $0x150] sm:$0xff] %vm4458, %v4403
      %4502 = vst.msk [vmem:[%s445 + $0x158] sm:$0xff] %vm4458, %v4405
      %4503 = vst.msk [vmem:[%s445 + $0x160] sm:$0xff] %vm4458, %v4407
      %4504 = vst.msk [vmem:[%s445 + $0x168] sm:$0xff] %vm4458, %v4409
      %4505 = vst.msk [vmem:[%s445 + $0x170] sm:$0xff] %vm4458, %v4407
      %4506 = vst.msk [vmem:[%s445 + $0x178] sm:$0xff] %vm4458, %v4409
      %4507 = vst.msk [vmem:[%s445 + $0x180] sm:$0xff] %vm4458, %v4411
      %4508 = vst.msk [vmem:[%s445 + $0x188] sm:$0xff] %vm4458, %v4413
      %4509 = vst.msk [vmem:[%s445 + $0x190] sm:$0xff] %vm4458, %v4411
      %4510 = vst.msk [vmem:[%s445 + $0x198] sm:$0xff] %vm4458, %v4413
      %4511 = vst.msk [vmem:[%s445 + $0x1a0] sm:$0xff] %vm4458, %v4415
      %4512 = vst.msk [vmem:[%s445 + $0x1a8] sm:$0xff] %vm4458, %v4417
      %4513 = vst.msk [vmem:[%s445 + $0x1b0] sm:$0xff] %vm4458, %v4415
      %4514 = vst.msk [vmem:[%s445 + $0x1b8] sm:$0xff] %vm4458, %v4417
      %4515 = vst.msk [vmem:[%s445 + $0x1c0] sm:$0xff] %vm4458, %v4419
      %4516 = vst.msk [vmem:[%s445 + $0x1c8] sm:$0xff] %vm4458, %v4421
      %4517 = vst.msk [vmem:[%s445 + $0x1d0] sm:$0xff] %vm4458, %v4419
      %4518 = vst.msk [vmem:[%s445 + $0x1d8] sm:$0xff] %vm4458, %v4421
      %4519 = vst.msk [vmem:[%s445 + $0x1e0] sm:$0xff] %vm4458, %v4423
      %4520 = vst.msk [vmem:[%s445 + $0x1e8] sm:$0xff] %vm4458, %v4425
      %4521 = vst.msk [vmem:[%s445 + $0x1f0] sm:$0xff] %vm4458, %v4423
      %4522 = vst.msk [vmem:[%s445 + $0x1f8] sm:$0xff] %vm4458, %v4425
      %s4523 = smul.u32 32, %s23
      %p4524 = scmp.lt.s32.totalorder %s22, 1
      %s4525 = scalar_select %p4524, %s22, 1
      %p4526 = scmp.lt.s32.totalorder %s4523, 31
      %s4527 = scalar_select %p4526, %s4523, 31
      %s4528 = smul.addr %s4527, 2
      %s4529 = smul.addr %s4525, 64
      %s4530 = sadd.s32 %s4528, %s4529
      %s4531 = smul.addr %s4530, 8
      %s4532 = scalar_lea.vmem %s7, %s4531
      // Predicated region
      $region57: #{_lambda_.1} parent=47 // pred_check
        %p4533 = pneg %p234
      $region58: #{_lambda_.1} parent=47 // pred_check_branch
        %4535 = sbr.rel (%p4533) target = $region60
      $region59: #{_lambda_.1} parent=47 // pred_region
        %s4536 = smul.u32 32, %s23
      $region60: #{_lambda_.1} parent=47 // pred_fallthru
        _
    $region48: #{_lambda_.1} parent=5 // pred_fallthru
      _
    %p4537 = scmp.le.s32.totalorder 2, %s13
    // Predicated region
    $region61: #{_lambda_.1} parent=5 // pred_check
      %p4538 = pneg %p4537
    $region62: #{_lambda_.1} parent=5 // pred_check_branch
      %4540 = sbr.rel (%p4538) target = $region64
    $region63: #{_lambda_.1} parent=5 // pred_region
      %s4541 = ssub.s32 %s13, 2
      // Predicated region
      $region65: #{_lambda_.1} parent=63 // pred_check
        %p4542 = pneg %p240
      $region66: #{_lambda_.1} parent=63 // pred_check_branch
        %4544 = sbr.rel (%p4542) target = $region68
      $region67: #{_lambda_.1} parent=63 // pred_region
        %s4545 = smul.u32 32, %s25
        %p4546 = scmp.lt.s32.totalorder %s24, 1
        %s4547 = scalar_select %p4546, %s24, 1
        %p4548 = scmp.lt.s32.totalorder %s4545, 31
        %s4549 = scalar_select %p4548, %s4545, 31
        %s4550 = smul.addr %s4549, 2
        %s4551 = smul.addr %s4547, 64
        %s4552 = sadd.s32 %s4550, %s4551
        %s4553 = smul.addr %s4552, 8
        %s4554 = scalar_lea.vmem %s7, %s4553
      $region68: #{_lambda_.1} parent=63 // pred_fallthru
        _
    $region64: #{_lambda_.1} parent=5 // pred_fallthru
      _
  $region6: #{_lambda_.1} parent=0 // loop_footer
    %s17 = sadd.s32 1, %s13
  $region7: #{_lambda_.1} parent=0 // loop_footer_branch
    %12 = sbr.rel target = $region3
  $region8: #{_lambda_.1} parent=0 // loop_exit
    _

</llo_original>
